<compile_context>
chip_gen: v7x
topology: tpu7x:2x2x1
jax: 0.10.0
libtpu: 0.0.40
codegen_flags: <defaults>
</compile_context>

<pallas_src>
import jax
import jax.numpy as jnp
from jax.experimental import pallas as pl
from jax.experimental.pallas import tpu as pltpu

_BN_EPS = 1e-5


# --------------------------------------------------------------------------- #
# Kernel: one grid step processes a block of Gb groups (M = Gb*N points).
# --------------------------------------------------------------------------- #
def encoder_kernel(
    pts_ref,                    # (Gb, N, 8)  points, K padded 3 -> 8
    w1_ref, b1_ref,             # (8, 128), (1, 128)   conv1 with BN folded in
    w2_ref, b2_ref,             # (128, 256), (1, 256) conv2
    w3g_ref, w3l_ref, b3_ref,   # (256, 512) x2, (1, 512) conv3 split + BN folded
    w4_ref, b4_ref,             # (512, E), (1, E)     conv4
    tok_ref,                    # (Gb, E)
):
    gb, n, kp = pts_ref.shape
    x = pts_ref[...].reshape(gb * n, kp)                                   # (M, 8)

    # ---- first_conv (Conv1d(3,128,1) + BN folded -> ReLU -> Conv1d(128,256,1)) ----
    h = jnp.dot(x, w1_ref[...], preferred_element_type=jnp.float32) + b1_ref[...]
    h = jnp.maximum(h, 0.0)
    feat = jnp.dot(h, w2_ref[...], preferred_element_type=jnp.float32) + b2_ref[...]   # (M, 256)

    # ---- global max per group; concat eliminated via w3 split ----
    feat3 = feat.reshape(gb, n, feat.shape[-1])
    fg = jnp.max(feat3, axis=1)                                            # (Gb, 256)
    # global-path contribution + (BN-folded) conv3 bias, once per group
    bias_g = jnp.dot(fg, w3g_ref[...], preferred_element_type=jnp.float32) + b3_ref[...]  # (Gb, 512)

    # ---- second_conv ----
    h2 = jnp.dot(feat, w3l_ref[...], preferred_element_type=jnp.float32)   # (M, 512) local path
    h2 = h2.reshape(gb, n, h2.shape[-1]) + bias_g[:, None, :]
    h2 = jnp.maximum(h2, 0.0).reshape(gb * n, -1)
    f2 = jnp.dot(h2, w4_ref[...], preferred_element_type=jnp.float32) + b4_ref[...]     # (M, E)

    tok_ref[...] = jnp.max(f2.reshape(gb, n, f2.shape[-1]), axis=1)        # (Gb, E)


# --------------------------------------------------------------------------- #
# Host-side param preparation: fold BN into conv weights, pad w1, split w3.
# --------------------------------------------------------------------------- #
def prepare_kernel_params(p):
    s1 = p["bn1_gamma"] / jnp.sqrt(p["bn1_var"] + _BN_EPS)
    t1 = p["bn1_beta"] - p["bn1_mean"] * s1
    w1 = p["w1"] * s1[None, :]                       # (3, 128) scaled per out-channel
    b1 = (p["b1"] * s1 + t1)[None, :]                # (1, 128)
    w1 = jnp.pad(w1, ((0, 5), (0, 0)))               # K: 3 -> 8 (zero rows)

    s3 = p["bn3_gamma"] / jnp.sqrt(p["bn3_var"] + _BN_EPS)
    t3 = p["bn3_beta"] - p["bn3_mean"] * s3
    w3 = p["w3"] * s3[None, :]                       # (512, 512)
    b3 = (p["b3"] * s3 + t3)[None, :]                # (1, 512)

    return {
        "w1": w1, "b1": b1,
        "w2": p["w2"], "b2": p["b2"][None, :],
        "w3g": w3[:256, :],                          # global-feature input channels
        "w3l": w3[256:, :],                          # local-feature input channels
        "b3": b3,
        "w4": p["w4"], "b4": p["b4"][None, :],
    }


# --------------------------------------------------------------------------- #
# Wrapper
# --------------------------------------------------------------------------- #
def encoder_forward(point_groups, params, groups_per_step=None):
    """point_groups: (B, G, N, 3) float32 -> (B, G, encoder_channel) float32."""
    B, G, N, _ = point_groups.shape
    kp = prepare_kernel_params(params)
    E = kp["w4"].shape[1]
    BG = B * G

    # Pick the number of groups per grid step so each matmul sees M = Gb*N >= ~256
    # rows (fills the MXU), while keeping the block-shape (8,128) rules satisfied.
    if groups_per_step is not None:
        Gb = groups_per_step
    else:
        gb_target = max(1, -(-256 // N))             # ceil(256 / N)
        if BG <= gb_target:
            Gb = BG                                  # single step; block == full array
        else:
            Gb = ((gb_target + 7) // 8) * 8          # multiple of 8 for the out block
    BGp = -(-BG // Gb) * Gb                          # pad group count to a multiple of Gb

    pts = point_groups.reshape(BG, N, 3).astype(jnp.float32)
    pts = jnp.pad(pts, ((0, BGp - BG), (0, 0), (0, 5)))   # pad groups and K: 3 -> 8

    weights = [kp["w1"], kp["b1"], kp["w2"], kp["b2"],
               kp["w3g"], kp["w3l"], kp["b3"], kp["w4"], kp["b4"]]

    def const_spec(a):
        z = (0,) * a.ndim
        return pl.BlockSpec(a.shape, lambda i, _z=z: _z)

    tok = pl.pallas_call(
        encoder_kernel,
        grid=(BGp // Gb,),
        in_specs=[pl.BlockSpec((Gb, N, 8), lambda i: (i, 0, 0))]
                 + [const_spec(a) for a in weights],
        out_specs=pl.BlockSpec((Gb, E), lambda i: (i, 0)),
        out_shape=jax.ShapeDtypeStruct((BGp, E), jnp.float32),
        compiler_params=pltpu.CompilerParams(dimension_semantics=("parallel",)),
    )(pts, *weights)

    return tok[:BG].reshape(B, G, E)


# --------------------------------------------------------------------------- #
# Synthetic params (shapes of the PyTorch module; non-trivial BN stats).
# --------------------------------------------------------------------------- #
def init_params(key, encoder_channel=256):
    std = 0.02
    ks = jax.random.split(key, 12)

    def bn(c, kg, kb, km, kv):
        return {
            "gamma": 1.0 + 0.1 * jax.random.normal(kg, (c,), jnp.float32),
            "beta": 0.1 * jax.random.normal(kb, (c,), jnp.float32),
            "mean": 0.1 * jax.random.normal(km, (c,), jnp.float32),
            "var": jax.random.uniform(kv, (c,), jnp.float32, 0.5, 1.5),
        }

    bn1 = bn(128, ks[4], ks[5], ks[6], ks[7])
    bn3 = bn(512, ks[8], ks[9], ks[10], ks[11])

    return {
        # conv weights stored channels-last: (C_in, C_out) == PyTorch weight[:, :, 0].T
        "w1": jax.random.normal(ks[0], (3, 128), jnp.float32) * std,
        "b1": jnp.zeros((128,), jnp.float32),
        "bn1_gamma": bn1["gamma"], "bn1_beta": bn1["beta"],
        "bn1_mean": bn1["mean"], "bn1_var": bn1["var"],
        "w2": jax.random.normal(ks[1], (128, 256), jnp.float32) * std,
        "b2": jnp.zeros((256,), jnp.float32),
        "w3": jax.random.normal(ks[2], (512, 512), jnp.float32) * std,
        "b3": jnp.zeros((512,), jnp.float32),
        "bn3_gamma": bn3["gamma"], "bn3_beta": bn3["beta"],
        "bn3_mean": bn3["mean"], "bn3_var": bn3["var"],
        "w4": jax.random.normal(ks[3], (512, encoder_channel), jnp.float32) * std,
        "b4": jnp.zeros((encoder_channel,), jnp.float32),
    }


# --------------------------------------------------------------------------- #
# Pure-JAX reference mirroring the PyTorch forward (unfolded BN, explicit concat)
# --------------------------------------------------------------------------- #
def reference_forward(point_groups, p):
    B, G, N, _ = point_groups.shape
    x = point_groups.reshape(B * G, N, 3)

    h = x @ p["w1"] + p["b1"]
    h = (h - p["bn1_mean"]) / jnp.sqrt(p["bn1_var"] + _BN_EPS) * p["bn1_gamma"] + p["bn1_beta"]
    h = jnp.maximum(h, 0.0)
    feat = h @ p["w2"] + p["b2"]                                   # (BG, N, 256)

    fg = jnp.max(feat, axis=1, keepdims=True)                      # (BG, 1, 256)
    cat = jnp.concatenate([jnp.broadcast_to(fg, feat.shape), feat], axis=-1)  # [global, local]

    h2 = cat @ p["w3"] + p["b3"]
    h2 = (h2 - p["bn3_mean"]) / jnp.sqrt(p["bn3_var"] + _BN_EPS) * p["bn3_gamma"] + p["bn3_beta"]
    h2 = jnp.maximum(h2, 0.0)
    f2 = h2 @ p["w4"] + p["b4"]                                    # (BG, N, E)

    tok = jnp.max(f2, axis=1)                                      # (BG, E)
    return tok.reshape(B, G, -1)


if __name__ == "__main__":
    # Small shapes consistent with the module: B batches of G groups of N points in 3D.
    B, G, N = 2, 8, 32
    ENCODER_CHANNEL = 256

    key = jax.random.PRNGKey(0)
    k_pts, k_par = jax.random.split(key)
    point_groups = jax.random.normal(k_pts, (B, G, N, 3), jnp.float32)
    params = init_params(k_par, encoder_channel=ENCODER_CHANNEL)

    tokens = encoder_forward(point_groups, params)
    tokens = jax.block_until_ready(tokens)

    tokens_ref = reference_forward(point_groups, params)
    assert tokens.shape == (B, G, ENCODER_CHANNEL)
    assert jnp.allclose(tokens, tokens_ref, rtol=1e-4, atol=1e-6), (
        float(jnp.max(jnp.abs(tokens - tokens_ref))))

    print("KERNEL_OK")
</pallas_src>

<mosaic_0001>
module attributes {stable_mosaic.version = 11 : i64} {
  func.func @encoder_kernel(%arg0: i32, %arg1: memref<8x32x8xf32, #tpu.memory_space<vmem>>, %arg2: memref<8x128xf32, #tpu.memory_space<vmem>>, %arg3: memref<1x128xf32, #tpu.memory_space<vmem>>, %arg4: memref<128x256xf32, #tpu.memory_space<vmem>>, %arg5: memref<1x256xf32, #tpu.memory_space<vmem>>, %arg6: memref<256x512xf32, #tpu.memory_space<vmem>>, %arg7: memref<256x512xf32, #tpu.memory_space<vmem>>, %arg8: memref<1x512xf32, #tpu.memory_space<vmem>>, %arg9: memref<512x256xf32, #tpu.memory_space<vmem>>, %arg10: memref<1x256xf32, #tpu.memory_space<vmem>>, %arg11: memref<8x256xf32, #tpu.memory_space<vmem>>) attributes {dimension_semantics = [#tpu.dimension_semantics<parallel>], iteration_bounds = array<i64: 2>, scalar_prefetch = 0 : i64, scratch_operands = 0 : i64, tpu.core_type = #tpu.core_type<tc>, window_params = [{transform_indices = @transform_0, window_bounds = array<i64: 8, 32, 8>}, {pipeline_mode = #tpu.pipeline_mode<synchronous>, transform_indices = @transform_1, window_bounds = array<i64: 8, 128>}, {pipeline_mode = #tpu.pipeline_mode<synchronous>, transform_indices = @transform_2, window_bounds = array<i64: 1, 128>}, {pipeline_mode = #tpu.pipeline_mode<synchronous>, transform_indices = @transform_3, window_bounds = array<i64: 128, 256>}, {pipeline_mode = #tpu.pipeline_mode<synchronous>, transform_indices = @transform_4, window_bounds = array<i64: 1, 256>}, {pipeline_mode = #tpu.pipeline_mode<synchronous>, transform_indices = @transform_5, window_bounds = array<i64: 256, 512>}, {pipeline_mode = #tpu.pipeline_mode<synchronous>, transform_indices = @transform_6, window_bounds = array<i64: 256, 512>}, {pipeline_mode = #tpu.pipeline_mode<synchronous>, transform_indices = @transform_7, window_bounds = array<i64: 1, 512>}, {pipeline_mode = #tpu.pipeline_mode<synchronous>, transform_indices = @transform_8, window_bounds = array<i64: 512, 256>}, {pipeline_mode = #tpu.pipeline_mode<synchronous>, transform_indices = @transform_9, window_bounds = array<i64: 1, 256>}, {transform_indices = @transform_10, window_bounds = array<i64: 8, 256>}]} {
    %c0 = arith.constant 0 : index
    %c0_0 = arith.constant 0 : index
    %c0_1 = arith.constant 0 : index
    %0 = vector.load %arg1[%c0, %c0_0, %c0_1] : memref<8x32x8xf32, #tpu.memory_space<vmem>>, vector<8x32x8xf32>
    %1 = vector.shape_cast %0 : vector<8x32x8xf32> to vector<256x8xf32>
    %c0_2 = arith.constant 0 : index
    %c0_3 = arith.constant 0 : index
    %2 = vector.load %arg2[%c0_2, %c0_3] : memref<8x128xf32, #tpu.memory_space<vmem>>, vector<8x128xf32>
    %cst = arith.constant dense<0.000000e+00> : vector<256x128xf32>
    %3 = tpu.matmul %1, %2, %cst {dimension_numbers = #tpu.dot_dimension_numbers<[1], [0], [0], [1], [0, 0, 1, 1], [], []>} : vector<256x8xf32>, vector<8x128xf32>, vector<256x128xf32> -> vector<256x128xf32>
    %c0_4 = arith.constant 0 : index
    %c0_5 = arith.constant 0 : index
    %4 = vector.load %arg3[%c0_4, %c0_5] : memref<1x128xf32, #tpu.memory_space<vmem>>, vector<1x128xf32>
    %5 = vector.broadcast %4 : vector<1x128xf32> to vector<256x128xf32>
    %6 = arith.addf %3, %5 : vector<256x128xf32>
    %cst_6 = arith.constant 0.000000e+00 : f32
    %7 = vector.broadcast %cst_6 : f32 to vector<256x128xf32>
    %8 = arith.maximumf %6, %7 : vector<256x128xf32>
    %c0_7 = arith.constant 0 : index
    %c0_8 = arith.constant 0 : index
    %9 = vector.load %arg4[%c0_7, %c0_8] : memref<128x256xf32, #tpu.memory_space<vmem>>, vector<128x256xf32>
    %cst_9 = arith.constant dense<0.000000e+00> : vector<256x256xf32>
    %10 = tpu.matmul %8, %9, %cst_9 {dimension_numbers = #tpu.dot_dimension_numbers<[1], [0], [0], [1], [0, 0, 1, 1], [], []>} : vector<256x128xf32>, vector<128x256xf32>, vector<256x256xf32> -> vector<256x256xf32>
    %c0_10 = arith.constant 0 : index
    %c0_11 = arith.constant 0 : index
    %11 = vector.load %arg5[%c0_10, %c0_11] : memref<1x256xf32, #tpu.memory_space<vmem>>, vector<1x256xf32>
    %12 = vector.broadcast %11 : vector<1x256xf32> to vector<256x256xf32>
    %13 = arith.addf %10, %12 : vector<256x256xf32>
    %14 = vector.shape_cast %13 : vector<256x256xf32> to vector<8x32x256xf32>
    %cst_12 = arith.constant dense<0xFF800000> : vector<8x256xf32>
    %15 = vector.multi_reduction <maximumf>, %14, %cst_12 [1] : vector<8x32x256xf32> to vector<8x256xf32>
    %c0_13 = arith.constant 0 : index
    %c0_14 = arith.constant 0 : index
    %16 = vector.load %arg6[%c0_13, %c0_14] : memref<256x512xf32, #tpu.memory_space<vmem>>, vector<256x512xf32>
    %cst_15 = arith.constant dense<0.000000e+00> : vector<8x512xf32>
    %17 = tpu.matmul %15, %16, %cst_15 {dimension_numbers = #tpu.dot_dimension_numbers<[1], [0], [0], [1], [0, 0, 1, 1], [], []>} : vector<8x256xf32>, vector<256x512xf32>, vector<8x512xf32> -> vector<8x512xf32>
    %c0_16 = arith.constant 0 : index
    %c0_17 = arith.constant 0 : index
    %18 = vector.load %arg8[%c0_16, %c0_17] : memref<1x512xf32, #tpu.memory_space<vmem>>, vector<1x512xf32>
    %19 = vector.broadcast %18 : vector<1x512xf32> to vector<8x512xf32>
    %20 = arith.addf %17, %19 : vector<8x512xf32>
    %c0_18 = arith.constant 0 : index
    %c0_19 = arith.constant 0 : index
    %21 = vector.load %arg7[%c0_18, %c0_19] : memref<256x512xf32, #tpu.memory_space<vmem>>, vector<256x512xf32>
    %cst_20 = arith.constant dense<0.000000e+00> : vector<256x512xf32>
    %22 = tpu.matmul %13, %21, %cst_20 {dimension_numbers = #tpu.dot_dimension_numbers<[1], [0], [0], [1], [0, 0, 1, 1], [], []>} : vector<256x256xf32>, vector<256x512xf32>, vector<256x512xf32> -> vector<256x512xf32>
    %23 = vector.shape_cast %22 : vector<256x512xf32> to vector<8x32x512xf32>
    %24 = vector.shape_cast %20 : vector<8x512xf32> to vector<8x1x512xf32>
    %25 = vector.broadcast %24 : vector<8x1x512xf32> to vector<8x32x512xf32>
    %26 = arith.addf %23, %25 : vector<8x32x512xf32>
    %cst_21 = arith.constant 0.000000e+00 : f32
    %27 = vector.broadcast %cst_21 : f32 to vector<8x32x512xf32>
    %28 = arith.maximumf %26, %27 : vector<8x32x512xf32>
    %29 = vector.shape_cast %28 : vector<8x32x512xf32> to vector<256x512xf32>
    %c0_22 = arith.constant 0 : index
    %c0_23 = arith.constant 0 : index
    %30 = vector.load %arg9[%c0_22, %c0_23] : memref<512x256xf32, #tpu.memory_space<vmem>>, vector<512x256xf32>
    %cst_24 = arith.constant dense<0.000000e+00> : vector<256x256xf32>
    %31 = tpu.matmul %29, %30, %cst_24 {dimension_numbers = #tpu.dot_dimension_numbers<[1], [0], [0], [1], [0, 0, 1, 1], [], []>} : vector<256x512xf32>, vector<512x256xf32>, vector<256x256xf32> -> vector<256x256xf32>
    %c0_25 = arith.constant 0 : index
    %c0_26 = arith.constant 0 : index
    %32 = vector.load %arg10[%c0_25, %c0_26] : memref<1x256xf32, #tpu.memory_space<vmem>>, vector<1x256xf32>
    %33 = vector.broadcast %32 : vector<1x256xf32> to vector<256x256xf32>
    %34 = arith.addf %31, %33 : vector<256x256xf32>
    %35 = vector.shape_cast %34 : vector<256x256xf32> to vector<8x32x256xf32>
    %cst_27 = arith.constant dense<0xFF800000> : vector<8x256xf32>
    %36 = vector.multi_reduction <maximumf>, %35, %cst_27 [1] : vector<8x32x256xf32> to vector<8x256xf32>
    %c0_28 = arith.constant 0 : index
    %c0_29 = arith.constant 0 : index
    %37 = vector.load %arg11[%c0_28, %c0_29] : memref<8x256xf32, #tpu.memory_space<vmem>>, vector<8x256xf32>
    tpu.vector_store %arg11[%c0_28, %c0_29], %36 {strides = array<i32>} : memref<8x256xf32, #tpu.memory_space<vmem>>, vector<8x256xf32>,
    return
  }
  func.func @transform_0(%arg0: i32) -> (i32, i32, i32) {
    %c0_i32 = arith.constant 0 : i32
    %c0_i32_0 = arith.constant 0 : i32
    %c0_i32_1 = arith.constant 0 : i32
    return %arg0, %c0_i32, %c0_i32_0 : i32, i32, i32
  }
  func.func @transform_1(%arg0: i32) -> (i32, i32) {
    %c0_i32 = arith.constant 0 : i32
    %c0_i32_0 = arith.constant 0 : i32
    %c0_i32_1 = arith.constant 0 : i32
    return %c0_i32, %c0_i32_0 : i32, i32
  }
  func.func @transform_2(%arg0: i32) -> (i32, i32) {
    %c0_i32 = arith.constant 0 : i32
    %c0_i32_0 = arith.constant 0 : i32
    %c0_i32_1 = arith.constant 0 : i32
    return %c0_i32, %c0_i32_0 : i32, i32
  }
  func.func @transform_3(%arg0: i32) -> (i32, i32) {
    %c0_i32 = arith.constant 0 : i32
    %c0_i32_0 = arith.constant 0 : i32
    %c0_i32_1 = arith.constant 0 : i32
    return %c0_i32, %c0_i32_0 : i32, i32
  }
  func.func @transform_4(%arg0: i32) -> (i32, i32) {
    %c0_i32 = arith.constant 0 : i32
    %c0_i32_0 = arith.constant 0 : i32
    %c0_i32_1 = arith.constant 0 : i32
    return %c0_i32, %c0_i32_0 : i32, i32
  }
  func.func @transform_5(%arg0: i32) -> (i32, i32) {
    %c0_i32 = arith.constant 0 : i32
    %c0_i32_0 = arith.constant 0 : i32
    %c0_i32_1 = arith.constant 0 : i32
    return %c0_i32, %c0_i32_0 : i32, i32
  }
  func.func @transform_6(%arg0: i32) -> (i32, i32) {
    %c0_i32 = arith.constant 0 : i32
    %c0_i32_0 = arith.constant 0 : i32
    %c0_i32_1 = arith.constant 0 : i32
    return %c0_i32, %c0_i32_0 : i32, i32
  }
  func.func @transform_7(%arg0: i32) -> (i32, i32) {
    %c0_i32 = arith.constant 0 : i32
    %c0_i32_0 = arith.constant 0 : i32
    %c0_i32_1 = arith.constant 0 : i32
    return %c0_i32, %c0_i32_0 : i32, i32
  }
  func.func @transform_8(%arg0: i32) -> (i32, i32) {
    %c0_i32 = arith.constant 0 : i32
    %c0_i32_0 = arith.constant 0 : i32
    %c0_i32_1 = arith.constant 0 : i32
    return %c0_i32, %c0_i32_0 : i32, i32
  }
  func.func @transform_9(%arg0: i32) -> (i32, i32) {
    %c0_i32 = arith.constant 0 : i32
    %c0_i32_0 = arith.constant 0 : i32
    %c0_i32_1 = arith.constant 0 : i32
    return %c0_i32, %c0_i32_0 : i32, i32
  }
  func.func @transform_10(%arg0: i32) -> (i32, i32) {
    %c0_i32 = arith.constant 0 : i32
    %c0_i32_0 = arith.constant 0 : i32
    return %arg0, %c0_i32 : i32, i32
  }
}

</mosaic_0001>

<llo_original>
// kernel: tpu_custom_call.1
$region0: #{tpu_custom_call.1}
  #allocation0 [shape = 'u32[]', space=smem, size = 0x4, offset = 0x4, fixed_abs, tag = 'smem constant byte address 0x4 - core index']
  #allocation1 [shape = 'u32[144,128]{1,0:T(1,128)}', space=vmem, size = 0x12000, scoped, tag = 'internal scratch']
  %s0 = inlined_call_operand.vmem [shape: f32[16,32,8], index: 0, kind: input, shape index: {}]
  %s1 = inlined_call_operand.vmem [shape: f32[8,128], index: 1, kind: input, shape index: {}]
  %s2 = inlined_call_operand.vmem [shape: f32[1,128], index: 2, kind: input, shape index: {}]
  %s3 = inlined_call_operand.vmem [shape: f32[128,256], index: 3, kind: input, shape index: {}]
  %s4 = inlined_call_operand.vmem [shape: f32[1,256], index: 4, kind: input, shape index: {}]
  %s5 = inlined_call_operand.hbm [shape: f32[256,512], index: 5, kind: input, shape index: {}]
  %s6 = inlined_call_operand.hbm [shape: f32[256,512], index: 6, kind: input, shape index: {}]
  %s7 = inlined_call_operand.vmem [shape: f32[1,512], index: 7, kind: input, shape index: {}]
  %s8 = inlined_call_operand.hbm [shape: f32[512,256], index: 8, kind: input, shape index: {}]
  %s9 = inlined_call_operand.vmem [shape: f32[1,256], index: 9, kind: input, shape index: {}]
  %s10 = inlined_call_operand.hbm [shape: f32[16,256], index: 10, kind: output, shape index: {}]
  %s11 = sld [smem:[#allocation0]]
  $region85: #{tpu_custom_call.1} parent=0
    _
  %s13 = ssub.s32 1, %s11
  %s14 = scalar_select 0, %s13, %s11
  $region1: #{tpu_custom_call.1} parent=0
    #allocation2 [shape = 'u8[524288]{0}', space=vmem, size = 0x80000, scoped, tag = 'input window, operand 5, single buffered']
    #allocation3 [shape = 's32[2]{0}', space=sflag, size = 0x8, scoped, tag = 'scoped memory for tpu_custom_call.1']
    #allocation4 [shape = 's32[2]{0}', space=sflag, size = 0x8, scoped, tag = 'scoped memory for tpu_custom_call.1']
    #allocation5 [shape = 'u8[524288]{0}', space=vmem, size = 0x80000, scoped, tag = 'input window, operand 6, single buffered']
    #allocation6 [shape = 's32[1]{0}', space=sflag, size = 0x4, scoped, tag = 'scoped memory for tpu_custom_call.1']
    #allocation7 [shape = 'u8[524288]{0}', space=vmem, size = 0x80000, scoped, tag = 'input window, operand 8, single buffered']
    #allocation8 [shape = 'u8[16384]{0}', space=vmem, size = 0x4000, scoped, tag = 'output window, operand 0']
    %15 = vsyncpa [#allocation3], 0
    %16 = vsyncpa [#allocation6], 0
    %17 = vsyncpa [#allocation4], 0
    %s18 = scalar_lea.sflag [#allocation4], 1
    %19 = vsyncpa %s18, 0
    loop: start=0, step=1, limit=4
    $region2: #{tpu_custom_call.1} parent=1 // loop_pre_header
      _
    $region3: #{tpu_custom_call.1} parent=1 // loop_header
      %s21 = sphi 0, %s25
      %p22 = scmp.ge.s32.totalorder %s21, 4
      %s31 = sphi 0, %s33
      %s34 = sphi 0, %s31
      %s35 = sphi 0, %s34
      %s51 = sphi 0, %s35
      %s55 = sphi 0, %s55
      %s57 = sphi 0, %s55
      %s58 = sphi 0, %s57
      %s72 = sphi 0, %s58
      %s76 = sphi 0, %s76
      %s78 = sphi 0, %s76
      %s79 = sphi 0, %s78
      %s93 = sphi 0, %s79
      %s97 = sphi 0, %s97
      %s99 = sphi 0, %s97
      %s100 = sphi 0, %s99
      %s114 = sphi 0, %s100
      %s118 = sphi 0, %s118
      %s120 = sphi 0, %s118
      %s121 = sphi 0, %s120
      %s135 = sphi 0, %s121
      %s139 = sphi 0, %s139
      %s141 = sphi 0, %s139
      %s142 = sphi 0, %s141
      %s156 = sphi 0, %s142
      %s160 = sphi 0, %s160
      %s162 = sphi 0, %s160
      %s163 = sphi 0, %s162
      %s177 = sphi 0, %s163
      %s181 = sphi 0, %s181
      %s183 = sphi 0, %s181
      %s184 = sphi 0, %s183
      %s198 = sphi 0, %s184
      %s202 = sphi 0, %s202
      %s204 = sphi 0, %s202
      %s205 = sphi 0, %s204
      %s219 = sphi 0, %s205
      %s223 = sphi 0, %s223
      %s225 = sphi 0, %s223
      %s226 = sphi 0, %s225
      %s240 = sphi 0, %s226
      %s246 = sphi 0, %s248
      %s249 = sphi 0, %s246
      %s250 = sphi 0, %s249
      %s266 = sphi 0, %s250
    $region4: #{tpu_custom_call.1} parent=1 // loop_header_branch
      %24 = sbr.rel (%p22) target = $region8
    $region5: #{tpu_custom_call.1} parent=1 // loop_body
      %s26 = ssub.s32 %s21, 1
      %s27 = ssub.s32 %s21, 2
      %s28 = sadd.s32 %s21, 1
      %s29 = ssub.s32 %s21, %s28
      %p30 = scmp.eq.s32.totalorder %s29, 0
      %s32 = sadd.s32 %s31, 1
      %s33 = scalar_select %p30, %s31, %s32
      %p36 = pneg %p30
      %p37 = scmp.eq.s32.totalorder %s21, 1
      %p38 = por %p36, %p37
      %p39 = scmp.ne.s32.totalorder %s31, %s34
      %p40 = scmp.eq.s32.totalorder %s21, 0
      %p41 = por %p39, %p40
      %p42 = scmp.ne.s32.totalorder %s31, %s34
      %p43 = scmp.eq.s32.totalorder %s26, 1
      %p44 = por %p42, %p43
      %p45 = scmp.ne.s32.totalorder %s34, %s35
      %p46 = scmp.eq.s32.totalorder %s26, 0
      %p47 = por %p45, %p46
      %p48 = scmp.ne.s32.totalorder %s34, %s35
      %p49 = scmp.eq.s32.totalorder %s27, 1
      %p50 = por %p48, %p49
      %p52 = scmp.ne.s32.totalorder %s35, %s51
      %p53 = scmp.eq.s32.totalorder %s27, 0
      %p54 = por %p52, %p53
      %s56 = sadd.s32 %s55, 1
      %p59 = scmp.eq.s32.totalorder %s21, 1
      %p60 = scmp.ne.s32.totalorder %s55, %s57
      %p61 = scmp.eq.s32.totalorder %s21, 0
      %p62 = por %p60, %p61
      %p63 = scmp.ne.s32.totalorder %s55, %s57
      %p64 = scmp.eq.s32.totalorder %s26, 1
      %p65 = por %p63, %p64
      %p66 = scmp.ne.s32.totalorder %s57, %s58
      %p67 = scmp.eq.s32.totalorder %s26, 0
      %p68 = por %p66, %p67
      %p69 = scmp.ne.s32.totalorder %s57, %s58
      %p70 = scmp.eq.s32.totalorder %s27, 1
      %p71 = por %p69, %p70
      %p73 = scmp.ne.s32.totalorder %s58, %s72
      %p74 = scmp.eq.s32.totalorder %s27, 0
      %p75 = por %p73, %p74
      %s77 = sadd.s32 %s76, 1
      %p80 = scmp.eq.s32.totalorder %s21, 1
      %p81 = scmp.ne.s32.totalorder %s76, %s78
      %p82 = scmp.eq.s32.totalorder %s21, 0
      %p83 = por %p81, %p82
      %p84 = scmp.ne.s32.totalorder %s76, %s78
      %p85 = scmp.eq.s32.totalorder %s26, 1
      %p86 = por %p84, %p85
      %p87 = scmp.ne.s32.totalorder %s78, %s79
      %p88 = scmp.eq.s32.totalorder %s26, 0
      %p89 = por %p87, %p88
      %p90 = scmp.ne.s32.totalorder %s78, %s79
      %p91 = scmp.eq.s32.totalorder %s27, 1
      %p92 = por %p90, %p91
      %p94 = scmp.ne.s32.totalorder %s79, %s93
      %p95 = scmp.eq.s32.totalorder %s27, 0
      %p96 = por %p94, %p95
      %s98 = sadd.s32 %s97, 1
      %p101 = scmp.eq.s32.totalorder %s21, 1
      %p102 = scmp.ne.s32.totalorder %s97, %s99
      %p103 = scmp.eq.s32.totalorder %s21, 0
      %p104 = por %p102, %p103
      %p105 = scmp.ne.s32.totalorder %s97, %s99
      %p106 = scmp.eq.s32.totalorder %s26, 1
      %p107 = por %p105, %p106
      %p108 = scmp.ne.s32.totalorder %s99, %s100
      %p109 = scmp.eq.s32.totalorder %s26, 0
      %p110 = por %p108, %p109
      %p111 = scmp.ne.s32.totalorder %s99, %s100
      %p112 = scmp.eq.s32.totalorder %s27, 1
      %p113 = por %p111, %p112
      %p115 = scmp.ne.s32.totalorder %s100, %s114
      %p116 = scmp.eq.s32.totalorder %s27, 0
      %p117 = por %p115, %p116
      %s119 = sadd.s32 %s118, 1
      %p122 = scmp.eq.s32.totalorder %s21, 1
      %p123 = scmp.ne.s32.totalorder %s118, %s120
      %p124 = scmp.eq.s32.totalorder %s21, 0
      %p125 = por %p123, %p124
      %p126 = scmp.ne.s32.totalorder %s118, %s120
      %p127 = scmp.eq.s32.totalorder %s26, 1
      %p128 = por %p126, %p127
      %p129 = scmp.ne.s32.totalorder %s120, %s121
      %p130 = scmp.eq.s32.totalorder %s26, 0
      %p131 = por %p129, %p130
      %p132 = scmp.ne.s32.totalorder %s120, %s121
      %p133 = scmp.eq.s32.totalorder %s27, 1
      %p134 = por %p132, %p133
      %p136 = scmp.ne.s32.totalorder %s121, %s135
      %p137 = scmp.eq.s32.totalorder %s27, 0
      %p138 = por %p136, %p137
      %s140 = sadd.s32 %s139, 1
      %p143 = scmp.eq.s32.totalorder %s21, 1
      %p144 = scmp.ne.s32.totalorder %s139, %s141
      %p145 = scmp.eq.s32.totalorder %s21, 0
      %p146 = por %p144, %p145
      %p147 = scmp.ne.s32.totalorder %s139, %s141
      %p148 = scmp.eq.s32.totalorder %s26, 1
      %p149 = por %p147, %p148
      %p150 = scmp.ne.s32.totalorder %s141, %s142
      %p151 = scmp.eq.s32.totalorder %s26, 0
      %p152 = por %p150, %p151
      %p153 = scmp.ne.s32.totalorder %s141, %s142
      %p154 = scmp.eq.s32.totalorder %s27, 1
      %p155 = por %p153, %p154
      %p157 = scmp.ne.s32.totalorder %s142, %s156
      %p158 = scmp.eq.s32.totalorder %s27, 0
      %p159 = por %p157, %p158
      %s161 = sadd.s32 %s160, 1
      %p164 = scmp.eq.s32.totalorder %s21, 1
      %p165 = scmp.ne.s32.totalorder %s160, %s162
      %p166 = scmp.eq.s32.totalorder %s21, 0
      %p167 = por %p165, %p166
      %p168 = scmp.ne.s32.totalorder %s160, %s162
      %p169 = scmp.eq.s32.totalorder %s26, 1
      %p170 = por %p168, %p169
      %p171 = scmp.ne.s32.totalorder %s162, %s163
      %p172 = scmp.eq.s32.totalorder %s26, 0
      %p173 = por %p171, %p172
      %p174 = scmp.ne.s32.totalorder %s162, %s163
      %p175 = scmp.eq.s32.totalorder %s27, 1
      %p176 = por %p174, %p175
      %p178 = scmp.ne.s32.totalorder %s163, %s177
      %p179 = scmp.eq.s32.totalorder %s27, 0
      %p180 = por %p178, %p179
      %s182 = sadd.s32 %s181, 1
      %p185 = scmp.eq.s32.totalorder %s21, 1
      %p186 = scmp.ne.s32.totalorder %s181, %s183
      %p187 = scmp.eq.s32.totalorder %s21, 0
      %p188 = por %p186, %p187
      %p189 = scmp.ne.s32.totalorder %s181, %s183
      %p190 = scmp.eq.s32.totalorder %s26, 1
      %p191 = por %p189, %p190
      %p192 = scmp.ne.s32.totalorder %s183, %s184
      %p193 = scmp.eq.s32.totalorder %s26, 0
      %p194 = por %p192, %p193
      %p195 = scmp.ne.s32.totalorder %s183, %s184
      %p196 = scmp.eq.s32.totalorder %s27, 1
      %p197 = por %p195, %p196
      %p199 = scmp.ne.s32.totalorder %s184, %s198
      %p200 = scmp.eq.s32.totalorder %s27, 0
      %p201 = por %p199, %p200
      %s203 = sadd.s32 %s202, 1
      %p206 = scmp.eq.s32.totalorder %s21, 1
      %p207 = scmp.ne.s32.totalorder %s202, %s204
      %p208 = scmp.eq.s32.totalorder %s21, 0
      %p209 = por %p207, %p208
      %p210 = scmp.ne.s32.totalorder %s202, %s204
      %p211 = scmp.eq.s32.totalorder %s26, 1
      %p212 = por %p210, %p211
      %p213 = scmp.ne.s32.totalorder %s204, %s205
      %p214 = scmp.eq.s32.totalorder %s26, 0
      %p215 = por %p213, %p214
      %p216 = scmp.ne.s32.totalorder %s204, %s205
      %p217 = scmp.eq.s32.totalorder %s27, 1
      %p218 = por %p216, %p217
      %p220 = scmp.ne.s32.totalorder %s205, %s219
      %p221 = scmp.eq.s32.totalorder %s27, 0
      %p222 = por %p220, %p221
      %s224 = sadd.s32 %s223, 1
      %p227 = scmp.eq.s32.totalorder %s21, 1
      %p228 = scmp.ne.s32.totalorder %s223, %s225
      %p229 = scmp.eq.s32.totalorder %s21, 0
      %p230 = por %p228, %p229
      %p231 = scmp.ne.s32.totalorder %s223, %s225
      %p232 = scmp.eq.s32.totalorder %s26, 1
      %p233 = por %p231, %p232
      %p234 = scmp.ne.s32.totalorder %s225, %s226
      %p235 = scmp.eq.s32.totalorder %s26, 0
      %p236 = por %p234, %p235
      %p237 = scmp.ne.s32.totalorder %s225, %s226
      %p238 = scmp.eq.s32.totalorder %s27, 1
      %p239 = por %p237, %p238
      %p241 = scmp.ne.s32.totalorder %s226, %s240
      %p242 = scmp.eq.s32.totalorder %s27, 0
      %p243 = por %p241, %p242
      %s244 = ssub.s32 %s21, %s28
      %p245 = scmp.eq.s32.totalorder %s244, 0
      %s247 = sadd.s32 %s246, 1
      %s248 = scalar_select %p245, %s246, %s247
      %p251 = pneg %p245
      %p252 = scmp.eq.s32.totalorder %s21, 1
      %p253 = por %p251, %p252
      %p254 = scmp.ne.s32.totalorder %s246, %s249
      %p255 = scmp.eq.s32.totalorder %s21, 0
      %p256 = por %p254, %p255
      %p257 = scmp.ne.s32.totalorder %s246, %s249
      %p258 = scmp.eq.s32.totalorder %s26, 1
      %p259 = por %p257, %p258
      %p260 = scmp.ne.s32.totalorder %s249, %s250
      %p261 = scmp.eq.s32.totalorder %s26, 0
      %p262 = por %p260, %p261
      %p263 = scmp.ne.s32.totalorder %s249, %s250
      %p264 = scmp.eq.s32.totalorder %s27, 1
      %p265 = por %p263, %p264
      %p267 = scmp.ne.s32.totalorder %s250, %s266
      %p268 = scmp.eq.s32.totalorder %s27, 0
      %p269 = por %p267, %p268
      %p270 = scmp.le.s32.totalorder 1, %s21
      %p271 = scmp.lt.s32.totalorder %s21, 3
      %p272 = pnand %p270, %p271
      %p273 = pneg %p272
      // Predicated region
      $region9: #{tpu_custom_call.1} parent=5 // pred_check
        _
      $region10: #{tpu_custom_call.1} parent=5 // pred_check_branch
        %275 = sbr.rel (%p272) target = $region12
      $region11: #{tpu_custom_call.1} parent=5 // pred_region
        %s276 = ssub.s32 %s21, 1
        // Predicated region
        $region13: #{tpu_custom_call.1} parent=11 // pred_check
          %p277 = pneg %p68
        $region14: #{tpu_custom_call.1} parent=11 // pred_check_branch
          %279 = sbr.rel (%p277) target = $region16
        $region15: #{tpu_custom_call.1} parent=11 // pred_region
          _
        $region16: #{tpu_custom_call.1} parent=11 // pred_fallthru
          _
        // Predicated region
        $region17: #{tpu_custom_call.1} parent=11 // pred_check
          %p280 = pneg %p89
        $region18: #{tpu_custom_call.1} parent=11 // pred_check_branch
          %282 = sbr.rel (%p280) target = $region20
        $region19: #{tpu_custom_call.1} parent=11 // pred_region
          _
        $region20: #{tpu_custom_call.1} parent=11 // pred_fallthru
          _
        // Predicated region
        $region21: #{tpu_custom_call.1} parent=11 // pred_check
          %p283 = pneg %p110
        $region22: #{tpu_custom_call.1} parent=11 // pred_check_branch
          %285 = sbr.rel (%p283) target = $region24
        $region23: #{tpu_custom_call.1} parent=11 // pred_region
          _
        $region24: #{tpu_custom_call.1} parent=11 // pred_fallthru
          _
        // Predicated region
        $region25: #{tpu_custom_call.1} parent=11 // pred_check
          %p286 = pneg %p131
        $region26: #{tpu_custom_call.1} parent=11 // pred_check_branch
          %288 = sbr.rel (%p286) target = $region28
        $region27: #{tpu_custom_call.1} parent=11 // pred_region
          _
        $region28: #{tpu_custom_call.1} parent=11 // pred_fallthru
          _
        // Predicated region
        $region29: #{tpu_custom_call.1} parent=11 // pred_check
          %p289 = pneg %p152
        $region30: #{tpu_custom_call.1} parent=11 // pred_check_branch
          %291 = sbr.rel (%p289) target = $region32
        $region31: #{tpu_custom_call.1} parent=11 // pred_region
          %s293 = ssub.s32 16384, 16384
          %294 = vsyncadd [#allocation3], %s293
          %s295 = sshll.u32 [#allocation2], 4
          %s296 = int_to_ptr.vmem [resolvable:$true] %s295
          %301 = dma.hbm_to_vmem [thread:$0]  %s5, 16384, %s296, [#allocation3], 512, 512, 32
        $region32: #{tpu_custom_call.1} parent=11 // pred_fallthru
          _
        // Predicated region
        $region33: #{tpu_custom_call.1} parent=11 // pred_check
          %p302 = pneg %p173
        $region34: #{tpu_custom_call.1} parent=11 // pred_check_branch
          %304 = sbr.rel (%p302) target = $region36
        $region35: #{tpu_custom_call.1} parent=11 // pred_region
          %s306 = ssub.s32 16384, 16384
          %307 = vsyncadd [#allocation6], %s306
          %s308 = sshll.u32 [#allocation5], 4
          %s309 = int_to_ptr.vmem [resolvable:$true] %s308
          %314 = dma.hbm_to_vmem [thread:$0]  %s6, 16384, %s309, [#allocation6], 512, 512, 32
        $region36: #{tpu_custom_call.1} parent=11 // pred_fallthru
          _
        // Predicated region
        $region37: #{tpu_custom_call.1} parent=11 // pred_check
          %p315 = pneg %p194
        $region38: #{tpu_custom_call.1} parent=11 // pred_check_branch
          %317 = sbr.rel (%p315) target = $region40
        $region39: #{tpu_custom_call.1} parent=11 // pred_region
          _
        $region40: #{tpu_custom_call.1} parent=11 // pred_fallthru
          _
        // Predicated region
        $region41: #{tpu_custom_call.1} parent=11 // pred_check
          %p318 = pneg %p215
        $region42: #{tpu_custom_call.1} parent=11 // pred_check_branch
          %320 = sbr.rel (%p318) target = $region44
        $region43: #{tpu_custom_call.1} parent=11 // pred_region
          %s322 = ssub.s32 16384, 16384
          %323 = vsyncadd [#allocation6], %s322
          %s324 = sshll.u32 [#allocation7], 4
          %s325 = int_to_ptr.vmem [resolvable:$true] %s324
          %330 = dma.hbm_to_vmem [thread:$0]  %s8, 16384, %s325, [#allocation6], 256, 256, 16
        $region44: #{tpu_custom_call.1} parent=11 // pred_fallthru
          _
        // Predicated region
        $region45: #{tpu_custom_call.1} parent=11 // pred_check
          %p331 = pneg %p236
        $region46: #{tpu_custom_call.1} parent=11 // pred_check_branch
          %333 = sbr.rel (%p331) target = $region48
        $region47: #{tpu_custom_call.1} parent=11 // pred_region
          _
        $region48: #{tpu_custom_call.1} parent=11 // pred_fallthru
          _
      $region12: #{tpu_custom_call.1} parent=5 // pred_fallthru
        _
      %p334 = scmp.lt.s32.totalorder %s21, 2
      // Predicated region
      $region49: #{tpu_custom_call.1} parent=5 // pred_check
        %p335 = pneg %p334
      $region50: #{tpu_custom_call.1} parent=5 // pred_check_branch
        %337 = sbr.rel (%p335) target = $region52
      $region51: #{tpu_custom_call.1} parent=5 // pred_region
        // Predicated region
        $region53: #{tpu_custom_call.1} parent=51 // pred_check
          %p338 = pneg %p41
        $region54: #{tpu_custom_call.1} parent=51 // pred_check_branch
          %340 = sbr.rel (%p338) target = $region56
        $region55: #{tpu_custom_call.1} parent=51 // pred_region
          %s341 = smul.u32 8, %s21
          %p342 = scmp.lt.s32.totalorder %s341, 15
          %s343 = scalar_select %p342, %s341, 15
          %s344 = smul.addr %s343, 4
          %s345 = smul.addr %s344, 8
          %s346 = scalar_lea.vmem %s0, %s345
          %s347 = smul.u32 8, %s21
        $region56: #{tpu_custom_call.1} parent=51 // pred_fallthru
          _
      $region52: #{tpu_custom_call.1} parent=5 // pred_fallthru
        _
      %p348 = scmp.le.s32.totalorder 1, %s21
      %p349 = scmp.lt.s32.totalorder %s21, 3
      %p350 = pnand %p348, %p349
      %p351 = pneg %p350
      // Predicated region
      $region57: #{tpu_custom_call.1} parent=5 // pred_check
        _
      $region58: #{tpu_custom_call.1} parent=5 // pred_check_branch
        %353 = sbr.rel (%p350) target = $region60
      $region59: #{tpu_custom_call.1} parent=5 // pred_region
        %s354 = ssub.s32 %s21, 1
        // Predicated region
        $region61: #{tpu_custom_call.1} parent=59 // pred_check
          %p355 = pneg %p152
        $region62: #{tpu_custom_call.1} parent=59 // pred_check_branch
          %357 = sbr.rel (%p355) target = $region64
        $region63: #{tpu_custom_call.1} parent=59 // pred_region
          %358 = dma.done [#allocation3], 16384
        $region64: #{tpu_custom_call.1} parent=59 // pred_fallthru
          _
        // Predicated region
        $region65: #{tpu_custom_call.1} parent=59 // pred_check
          %p359 = pneg %p173
        $region66: #{tpu_custom_call.1} parent=59 // pred_check_branch
          %361 = sbr.rel (%p359) target = $region68
        $region67: #{tpu_custom_call.1} parent=59 // pred_region
          %362 = dma.done [#allocation6], 16384
        $region68: #{tpu_custom_call.1} parent=59 // pred_fallthru
          _
        // Predicated region
        $region69: #{tpu_custom_call.1} parent=59 // pred_check
          %p363 = pneg %p215
        $region70: #{tpu_custom_call.1} parent=59 // pred_check_branch
          %365 = sbr.rel (%p363) target = $region72
        $region71: #{tpu_custom_call.1} parent=59 // pred_region
          %366 = dma.done [#allocation6], 16384
        $region72: #{tpu_custom_call.1} parent=59 // pred_fallthru
          _
        %s367 = smul.u32 8, %s26
        %p368 = scmp.lt.s32.totalorder %s367, 15
        %s369 = scalar_select %p368, %s367, 15
        %s370 = smul.addr %s369, 4
        %s371 = smul.addr %s370, 8
        %s372 = scalar_lea.vmem %s0, %s371
        %p373 = pneg %p47
        %p374 = pneg %p44
        %p375 = pneg %p68
        %p376 = pneg %p65
        %p377 = pneg %p89
        %p378 = pneg %p86
        %p379 = pneg %p110
        %p380 = pneg %p107
        %p381 = pneg %p131
        %p382 = pneg %p128
        %p383 = pneg %p152
        %p384 = pneg %p149
        %p385 = pneg %p173
        %p386 = pneg %p170
        %p387 = pneg %p194
        %p388 = pneg %p191
        %p389 = pneg %p215
        %p390 = pneg %p212
        %p391 = pneg %p236
        %p392 = pneg %p233
        %p393 = pneg %p262
        %p394 = pneg %p259
        %s395 = sand.u32 %s249, 1
        %s396 = scalar_lea.sflag [#allocation4], %s395
        %s397 = sand.u32 %s249, 1
        %s398 = smul.addr %s397, 16
        %s399 = scalar_lea.vmem [#allocation8], %s398
        %s400 = smul.u32 8, %s26
        %p401 = scmp.lt.s32.totalorder %s400, 15
        %s402 = scalar_select %p401, %s400, 15
        %s403 = smul.addr %s402, 4
        %s404 = smul.addr %s403, 8
        %s405 = scalar_lea.vmem %s0, %s404
        %s406 = smul.u32 8, %s26
        %v407 = vld [vmem:[%s405] sm:$0xff]
        %v408 = vld [vmem:[%s405 + $0x8] sm:$0xff]
        %v409 = vld [vmem:[%s405 + $0x10] sm:$0xff]
        %v410 = vld [vmem:[%s405 + $0x18] sm:$0xff]
        %v411 = vld [vmem:[%s405 + $0x20] sm:$0xff]
        %v412 = vld [vmem:[%s405 + $0x28] sm:$0xff]
        %v413 = vld [vmem:[%s405 + $0x30] sm:$0xff]
        %v414 = vld [vmem:[%s405 + $0x38] sm:$0xff]
        %v415 = vld [vmem:[%s405 + $0x40] sm:$0xff]
        %v416 = vld [vmem:[%s405 + $0x48] sm:$0xff]
        %v417 = vld [vmem:[%s405 + $0x50] sm:$0xff]
        %v418 = vld [vmem:[%s405 + $0x58] sm:$0xff]
        %v419 = vld [vmem:[%s405 + $0x60] sm:$0xff]
        %v420 = vld [vmem:[%s405 + $0x68] sm:$0xff]
        %v421 = vld [vmem:[%s405 + $0x70] sm:$0xff]
        %v422 = vld [vmem:[%s405 + $0x78] sm:$0xff]
        %v423 = vld [vmem:[%s405 + $0x80] sm:$0xff]
        %v424 = vld [vmem:[%s405 + $0x88] sm:$0xff]
        %v425 = vld [vmem:[%s405 + $0x90] sm:$0xff]
        %v426 = vld [vmem:[%s405 + $0x98] sm:$0xff]
        %v427 = vld [vmem:[%s405 + $0xa0] sm:$0xff]
        %v428 = vld [vmem:[%s405 + $0xa8] sm:$0xff]
        %v429 = vld [vmem:[%s405 + $0xb0] sm:$0xff]
        %v430 = vld [vmem:[%s405 + $0xb8] sm:$0xff]
        %v431 = vld [vmem:[%s405 + $0xc0] sm:$0xff]
        %v432 = vld [vmem:[%s405 + $0xc8] sm:$0xff]
        %v433 = vld [vmem:[%s405 + $0xd0] sm:$0xff]
        %v434 = vld [vmem:[%s405 + $0xd8] sm:$0xff]
        %v435 = vld [vmem:[%s405 + $0xe0] sm:$0xff]
        %v436 = vld [vmem:[%s405 + $0xe8] sm:$0xff]
        %v437 = vld [vmem:[%s405 + $0xf0] sm:$0xff]
        %v438 = vld [vmem:[%s405 + $0xf8] sm:$0xff]
        %v439 = vld [vmem:[%s1] sm:$0xff]
        %v440 = vld [vmem:[%s2] sm:$0x1]
        %v442 = vlaneseq
        %v443 = vshrl.u32 %v442, 7
        %v444 = vsub.s32 0, %v443
        %v445 = vrot.slane %v440, %v444
        %vm447 = vcmask 64512
        %v449 = vsel %vm447, %v407, 0
        %v452 = vsel %vm447, %v408, 0
        %v455 = vsel %vm447, %v409, 0
        %v458 = vsel %vm447, %v410, 0
        %v461 = vsel %vm447, %v411, 0
        %v464 = vsel %vm447, %v412, 0
        %v467 = vsel %vm447, %v413, 0
        %v470 = vsel %vm447, %v414, 0
        %v473 = vsel %vm447, %v415, 0
        %v476 = vsel %vm447, %v416, 0
        %v479 = vsel %vm447, %v417, 0
        %v482 = vsel %vm447, %v418, 0
        %v485 = vsel %vm447, %v419, 0
        %v488 = vsel %vm447, %v420, 0
        %v491 = vsel %vm447, %v421, 0
        %v494 = vsel %vm447, %v422, 0
        %v497 = vsel %vm447, %v423, 0
        %v500 = vsel %vm447, %v424, 0
        %v503 = vsel %vm447, %v425, 0
        %v506 = vsel %vm447, %v426, 0
        %v509 = vsel %vm447, %v427, 0
        %v512 = vsel %vm447, %v428, 0
        %v515 = vsel %vm447, %v429, 0
        %v518 = vsel %vm447, %v430, 0
        %v521 = vsel %vm447, %v431, 0
        %v524 = vsel %vm447, %v432, 0
        %v527 = vsel %vm447, %v433, 0
        %v530 = vsel %vm447, %v434, 0
        %v533 = vsel %vm447, %v435, 0
        %v536 = vsel %vm447, %v436, 0
        %v539 = vsel %vm447, %v437, 0
        %v542 = vsel %vm447, %v438, 0
        %544 = vmatprep.subr.mxu0 0.0
        %545 = vmatpush1.msra.mxu0 %v439
        %546 = vmatprep.subr.mxu0 0.0
        %547 = vmatpush1.msra.mxu0 0.0
        %548 = vmatprep.subr.mxu0 0.0
        %549 = vmatpush1.msra.mxu0 0.0
        %550 = vmatprep.subr.mxu0 0.0
        %551 = vmatpush1.msra.mxu0 0.0
        %552 = vmatprep.subr.mxu0 0.0
        %553 = vmatpush1.msra.mxu0 0.0
        %554 = vmatprep.subr.mxu0 0.0
        %555 = vmatpush1.msra.mxu0 0.0
        %556 = vmatprep.subr.mxu0 0.0
        %557 = vmatpush1.msra.mxu0 0.0
        %558 = vmatprep.subr.mxu0 0.0
        %559 = vmatpush1.msra.mxu0 0.0
        %560 = vmatprep.subr.mxu0 0.0
        %561 = vmatpush1.msra.mxu0 0.0
        %562 = vmatprep.subr.mxu0 0.0
        %563 = vmatpush1.msra.mxu0 0.0
        %564 = vmatprep.subr.mxu0 0.0
        %565 = vmatpush1.msra.mxu0 0.0
        %566 = vmatprep.subr.mxu0 0.0
        %567 = vmatpush1.msra.mxu0 0.0
        %568 = vmatprep.subr.mxu0 0.0
        %569 = vmatpush1.msra.mxu0 0.0
        %570 = vmatprep.subr.mxu0 0.0
        %571 = vmatpush1.msra.mxu0 0.0
        %572 = vmatprep.subr.mxu0 0.0
        %573 = vmatpush1.msra.mxu0 0.0
        %574 = vmatprep.subr.mxu0 0.0
        %575 = vmatpush1.msra.mxu0 0.0
        %576 = vmatprep.subr.mxu0 0.0
        %577 = vmatpush1.msra.mxu0 0.0
        %578 = vmatprep.subr.mxu0 0.0
        %579 = vmatpush1.msra.mxu0 0.0
        %580 = vmatprep.subr.mxu0 0.0
        %581 = vmatpush1.msra.mxu0 0.0
        %582 = vmatprep.subr.mxu0 0.0
        %583 = vmatpush1.msra.mxu0 0.0
        %584 = vmatprep.subr.mxu0 0.0
        %585 = vmatpush1.msra.mxu0 0.0
        %586 = vmatprep.subr.mxu0 0.0
        %587 = vmatpush1.msra.mxu0 0.0
        %588 = vmatprep.subr.mxu0 0.0
        %589 = vmatpush1.msra.mxu0 0.0
        %590 = vmatprep.subr.mxu0 0.0
        %591 = vmatpush1.msra.mxu0 0.0
        %592 = vmatprep.subr.mxu0 0.0
        %593 = vmatpush1.msra.mxu0 0.0
        %594 = vmatprep.subr.mxu0 0.0
        %595 = vmatpush1.msra.mxu0 0.0
        %596 = vmatprep.subr.mxu0 0.0
        %597 = vmatpush1.msra.mxu0 0.0
        %598 = vmatprep.subr.mxu0 0.0
        %599 = vmatpush1.msra.mxu0 0.0
        %600 = vmatprep.subr.mxu0 0.0
        %601 = vmatpush1.msra.mxu0 0.0
        %602 = vmatprep.subr.mxu0 0.0
        %603 = vmatpush1.msra.mxu0 0.0
        %604 = vmatprep.subr.mxu0 0.0
        %605 = vmatpush1.msra.mxu0 0.0
        %606 = vmatprep.subr.mxu0 0.0
        %607 = vmatpush1.msra.mxu0 0.0
        %608 = vmatprep.mubr.f32.mxu0 0.0
        %609 = vmatmul.mubr.f32.gmra.mrb[0].mxu0 %v449
        %v610 = vpop.f32.mrb[0].mxu0
        %v611 = vadd.f32 %v445, %v610
        %v612 = vpop.f32.mrb[0].mxu0
        %613 = vmatprep.mubr.f32.mxu0 0.0
        %614 = vmatmul.mubr.f32.gmra.mrb[0].mxu0 %v452
        %v615 = vpop.f32.mrb[0].mxu0
        %v616 = vadd.f32 %v445, %v615
        %v617 = vpop.f32.mrb[0].mxu0
        %618 = vmatprep.mubr.f32.mxu0 0.0
        %619 = vmatmul.mubr.f32.gmra.mrb[0].mxu0 %v455
        %v620 = vpop.f32.mrb[0].mxu0
        %v621 = vadd.f32 %v445, %v620
        %v622 = vpop.f32.mrb[0].mxu0
        %623 = vmatprep.mubr.f32.mxu0 0.0
        %624 = vmatmul.mubr.f32.gmra.mrb[0].mxu0 %v458
        %v625 = vpop.f32.mrb[0].mxu0
        %v626 = vadd.f32 %v445, %v625
        %v627 = vpop.f32.mrb[0].mxu0
        %628 = vmatprep.mubr.f32.mxu0 0.0
        %629 = vmatmul.mubr.f32.gmra.mrb[0].mxu0 %v461
        %v630 = vpop.f32.mrb[0].mxu0
        %v631 = vadd.f32 %v445, %v630
        %v632 = vpop.f32.mrb[0].mxu0
        %633 = vmatprep.mubr.f32.mxu0 0.0
        %634 = vmatmul.mubr.f32.gmra.mrb[0].mxu0 %v464
        %v635 = vpop.f32.mrb[0].mxu0
        %v636 = vadd.f32 %v445, %v635
        %v637 = vpop.f32.mrb[0].mxu0
        %638 = vmatprep.mubr.f32.mxu0 0.0
        %639 = vmatmul.mubr.f32.gmra.mrb[0].mxu0 %v467
        %v640 = vpop.f32.mrb[0].mxu0
        %v641 = vadd.f32 %v445, %v640
        %v642 = vpop.f32.mrb[0].mxu0
        %643 = vmatprep.mubr.f32.mxu0 0.0
        %644 = vmatmul.mubr.f32.gmra.mrb[0].mxu0 %v470
        %v645 = vpop.f32.mrb[0].mxu0
        %v646 = vadd.f32 %v445, %v645
        %v647 = vpop.f32.mrb[0].mxu0
        %648 = vmatprep.mubr.f32.mxu0 0.0
        %649 = vmatmul.mubr.f32.gmra.mrb[0].mxu0 %v473
        %v650 = vpop.f32.mrb[0].mxu0
        %v651 = vadd.f32 %v445, %v650
        %v652 = vpop.f32.mrb[0].mxu0
        %653 = vmatprep.mubr.f32.mxu0 0.0
        %654 = vmatmul.mubr.f32.gmra.mrb[0].mxu0 %v476
        %v655 = vpop.f32.mrb[0].mxu0
        %v656 = vadd.f32 %v445, %v655
        %v657 = vpop.f32.mrb[0].mxu0
        %658 = vmatprep.mubr.f32.mxu0 0.0
        %659 = vmatmul.mubr.f32.gmra.mrb[0].mxu0 %v479
        %v660 = vpop.f32.mrb[0].mxu0
        %v661 = vadd.f32 %v445, %v660
        %v662 = vpop.f32.mrb[0].mxu0
        %663 = vmatprep.mubr.f32.mxu0 0.0
        %664 = vmatmul.mubr.f32.gmra.mrb[0].mxu0 %v482
        %v665 = vpop.f32.mrb[0].mxu0
        %v666 = vadd.f32 %v445, %v665
        %v667 = vpop.f32.mrb[0].mxu0
        %668 = vmatprep.mubr.f32.mxu0 0.0
        %669 = vmatmul.mubr.f32.gmra.mrb[0].mxu0 %v485
        %v670 = vpop.f32.mrb[0].mxu0
        %v671 = vadd.f32 %v445, %v670
        %v672 = vpop.f32.mrb[0].mxu0
        %673 = vmatprep.mubr.f32.mxu0 0.0
        %674 = vmatmul.mubr.f32.gmra.mrb[0].mxu0 %v488
        %v675 = vpop.f32.mrb[0].mxu0
        %v676 = vadd.f32 %v445, %v675
        %v677 = vpop.f32.mrb[0].mxu0
        %678 = vmatprep.mubr.f32.mxu0 0.0
        %679 = vmatmul.mubr.f32.gmra.mrb[0].mxu0 %v491
        %v680 = vpop.f32.mrb[0].mxu0
        %v681 = vadd.f32 %v445, %v680
        %v682 = vpop.f32.mrb[0].mxu0
        %683 = vmatprep.mubr.f32.mxu0 0.0
        %684 = vmatmul.mubr.f32.gmra.mrb[0].mxu0 %v494
        %v685 = vpop.f32.mrb[0].mxu0
        %v686 = vadd.f32 %v445, %v685
        %v687 = vpop.f32.mrb[0].mxu0
        %688 = vmatprep.mubr.f32.mxu0 0.0
        %689 = vmatmul.mubr.f32.gmra.mrb[0].mxu0 %v497
        %v690 = vpop.f32.mrb[0].mxu0
        %v691 = vadd.f32 %v445, %v690
        %v692 = vpop.f32.mrb[0].mxu0
        %693 = vmatprep.mubr.f32.mxu0 0.0
        %694 = vmatmul.mubr.f32.gmra.mrb[0].mxu0 %v500
        %v695 = vpop.f32.mrb[0].mxu0
        %v696 = vadd.f32 %v445, %v695
        %v697 = vpop.f32.mrb[0].mxu0
        %698 = vmatprep.mubr.f32.mxu0 0.0
        %699 = vmatmul.mubr.f32.gmra.mrb[0].mxu0 %v503
        %v700 = vpop.f32.mrb[0].mxu0
        %v701 = vadd.f32 %v445, %v700
        %v702 = vpop.f32.mrb[0].mxu0
        %703 = vmatprep.mubr.f32.mxu0 0.0
        %704 = vmatmul.mubr.f32.gmra.mrb[0].mxu0 %v506
        %v705 = vpop.f32.mrb[0].mxu0
        %v706 = vadd.f32 %v445, %v705
        %v707 = vpop.f32.mrb[0].mxu0
        %708 = vmatprep.mubr.f32.mxu0 0.0
        %709 = vmatmul.mubr.f32.gmra.mrb[0].mxu0 %v509
        %v710 = vpop.f32.mrb[0].mxu0
        %v711 = vadd.f32 %v445, %v710
        %v712 = vpop.f32.mrb[0].mxu0
        %713 = vmatprep.mubr.f32.mxu0 0.0
        %714 = vmatmul.mubr.f32.gmra.mrb[0].mxu0 %v512
        %v715 = vpop.f32.mrb[0].mxu0
        %v716 = vadd.f32 %v445, %v715
        %v717 = vpop.f32.mrb[0].mxu0
        %718 = vmatprep.mubr.f32.mxu0 0.0
        %719 = vmatmul.mubr.f32.gmra.mrb[0].mxu0 %v515
        %v720 = vpop.f32.mrb[0].mxu0
        %v721 = vadd.f32 %v445, %v720
        %v722 = vpop.f32.mrb[0].mxu0
        %723 = vmatprep.mubr.f32.mxu0 0.0
        %724 = vmatmul.mubr.f32.gmra.mrb[0].mxu0 %v518
        %v725 = vpop.f32.mrb[0].mxu0
        %v726 = vadd.f32 %v445, %v725
        %v727 = vpop.f32.mrb[0].mxu0
        %728 = vmatprep.mubr.f32.mxu0 0.0
        %729 = vmatmul.mubr.f32.gmra.mrb[0].mxu0 %v521
        %v730 = vpop.f32.mrb[0].mxu0
        %v731 = vadd.f32 %v445, %v730
        %v732 = vpop.f32.mrb[0].mxu0
        %733 = vmatprep.mubr.f32.mxu0 0.0
        %734 = vmatmul.mubr.f32.gmra.mrb[0].mxu0 %v524
        %v735 = vpop.f32.mrb[0].mxu0
        %v736 = vadd.f32 %v445, %v735
        %v737 = vpop.f32.mrb[0].mxu0
        %738 = vmatprep.mubr.f32.mxu0 0.0
        %739 = vmatmul.mubr.f32.gmra.mrb[0].mxu0 %v527
        %v740 = vpop.f32.mrb[0].mxu0
        %v741 = vadd.f32 %v445, %v740
        %v742 = vpop.f32.mrb[0].mxu0
        %743 = vmatprep.mubr.f32.mxu0 0.0
        %744 = vmatmul.mubr.f32.gmra.mrb[0].mxu0 %v530
        %v745 = vpop.f32.mrb[0].mxu0
        %v746 = vadd.f32 %v445, %v745
        %v747 = vpop.f32.mrb[0].mxu0
        %748 = vmatprep.mubr.f32.mxu0 0.0
        %749 = vmatmul.mubr.f32.gmra.mrb[0].mxu0 %v533
        %v750 = vpop.f32.mrb[0].mxu0
        %v751 = vadd.f32 %v445, %v750
        %v752 = vpop.f32.mrb[0].mxu0
        %753 = vmatprep.mubr.f32.mxu0 0.0
        %754 = vmatmul.mubr.f32.gmra.mrb[0].mxu0 %v536
        %v755 = vpop.f32.mrb[0].mxu0
        %v756 = vadd.f32 %v445, %v755
        %v757 = vpop.f32.mrb[0].mxu0
        %758 = vmatprep.mubr.f32.mxu0 0.0
        %759 = vmatmul.mubr.f32.gmra.mrb[0].mxu0 %v539
        %v760 = vpop.f32.mrb[0].mxu0
        %v761 = vadd.f32 %v445, %v760
        %v762 = vpop.f32.mrb[0].mxu0
        %763 = vmatprep.mubr.f32.mxu0 0.0
        %764 = vmatmul.mubr.f32.gmra.mrb[0].mxu0 %v542
        %v765 = vpop.f32.mrb[0].mxu0
        %v766 = vadd.f32 %v445, %v765
        %v767 = vpop.f32.mrb[0].mxu0
        %768 = vdwg.mxu0
        %v769 = vmax.f32 %v611, 0.0
        %v770 = vmax.f32 %v616, 0.0
        %v771 = vmax.f32 %v621, 0.0
        %v772 = vmax.f32 %v626, 0.0
        %v773 = vmax.f32 %v631, 0.0
        %v774 = vmax.f32 %v636, 0.0
        %v775 = vmax.f32 %v641, 0.0
        %v776 = vmax.f32 %v646, 0.0
        %v777 = vmax.f32 %v651, 0.0
        %v778 = vmax.f32 %v656, 0.0
        %v779 = vmax.f32 %v661, 0.0
        %v780 = vmax.f32 %v666, 0.0
        %v781 = vmax.f32 %v671, 0.0
        %v782 = vmax.f32 %v676, 0.0
        %v783 = vmax.f32 %v681, 0.0
        %v784 = vmax.f32 %v686, 0.0
        %v785 = vmax.f32 %v691, 0.0
        %v786 = vmax.f32 %v696, 0.0
        %v787 = vmax.f32 %v701, 0.0
        %v788 = vmax.f32 %v706, 0.0
        %v789 = vmax.f32 %v711, 0.0
        %v790 = vmax.f32 %v716, 0.0
        %v791 = vmax.f32 %v721, 0.0
        %v792 = vmax.f32 %v726, 0.0
        %v793 = vmax.f32 %v731, 0.0
        %v794 = vmax.f32 %v736, 0.0
        %v795 = vmax.f32 %v741, 0.0
        %v796 = vmax.f32 %v746, 0.0
        %v797 = vmax.f32 %v751, 0.0
        %v798 = vmax.f32 %v756, 0.0
        %v799 = vmax.f32 %v761, 0.0
        %v800 = vmax.f32 %v766, 0.0
        %v801 = vld [vmem:[%s3] sm:$0xff]
        %v802 = vld [vmem:[%s3 + $0x8] sm:$0xff]
        %v803 = vld [vmem:[%s3 + $0x10] sm:$0xff]
        %v804 = vld [vmem:[%s3 + $0x18] sm:$0xff]
        %v805 = vld [vmem:[%s3 + $0x20] sm:$0xff]
        %v806 = vld [vmem:[%s3 + $0x28] sm:$0xff]
        %v807 = vld [vmem:[%s3 + $0x30] sm:$0xff]
        %v808 = vld [vmem:[%s3 + $0x38] sm:$0xff]
        %v809 = vld [vmem:[%s3 + $0x40] sm:$0xff]
        %v810 = vld [vmem:[%s3 + $0x48] sm:$0xff]
        %v811 = vld [vmem:[%s3 + $0x50] sm:$0xff]
        %v812 = vld [vmem:[%s3 + $0x58] sm:$0xff]
        %v813 = vld [vmem:[%s3 + $0x60] sm:$0xff]
        %v814 = vld [vmem:[%s3 + $0x68] sm:$0xff]
        %v815 = vld [vmem:[%s3 + $0x70] sm:$0xff]
        %v816 = vld [vmem:[%s3 + $0x78] sm:$0xff]
        %v817 = vld [vmem:[%s3 + $0x80] sm:$0xff]
        %v818 = vld [vmem:[%s3 + $0x88] sm:$0xff]
        %v819 = vld [vmem:[%s3 + $0x90] sm:$0xff]
        %v820 = vld [vmem:[%s3 + $0x98] sm:$0xff]
        %v821 = vld [vmem:[%s3 + $0xa0] sm:$0xff]
        %v822 = vld [vmem:[%s3 + $0xa8] sm:$0xff]
        %v823 = vld [vmem:[%s3 + $0xb0] sm:$0xff]
        %v824 = vld [vmem:[%s3 + $0xb8] sm:$0xff]
        %v825 = vld [vmem:[%s3 + $0xc0] sm:$0xff]
        %v826 = vld [vmem:[%s3 + $0xc8] sm:$0xff]
        %v827 = vld [vmem:[%s3 + $0xd0] sm:$0xff]
        %v828 = vld [vmem:[%s3 + $0xd8] sm:$0xff]
        %v829 = vld [vmem:[%s3 + $0xe0] sm:$0xff]
        %v830 = vld [vmem:[%s3 + $0xe8] sm:$0xff]
        %v831 = vld [vmem:[%s3 + $0xf0] sm:$0xff]
        %v832 = vld [vmem:[%s3 + $0xf8] sm:$0xff]
        %v833 = vld [vmem:[%s4] sm:$0x3]
        %v835 = vlaneseq
        %v836 = vshrl.u32 %v835, 7
        %v837 = vsub.s32 0, %v836
        %v838 = vrot.slane %v833, %v837
        %v839 = vlaneseq
        %v840 = vshrl.u32 %v839, 7
        %v841 = vsub.s32 1, %v840
        %v842 = vrot.slane %v833, %v841
        %845 = vmatprep.subr.mxu0 %v802
        %846 = vmatpush1.msra.mxu0 %v801
        %847 = vmatprep.subr.mxu0 %v804
        %848 = vmatpush1.msra.mxu0 %v803
        %849 = vmatprep.subr.mxu0 %v806
        %850 = vmatpush1.msra.mxu0 %v805
        %851 = vmatprep.subr.mxu0 %v808
        %852 = vmatpush1.msra.mxu0 %v807
        %853 = vmatprep.subr.mxu0 %v810
        %854 = vmatpush1.msra.mxu0 %v809
        %855 = vmatprep.subr.mxu0 %v812
        %856 = vmatpush1.msra.mxu0 %v811
        %857 = vmatprep.subr.mxu0 %v814
        %858 = vmatpush1.msra.mxu0 %v813
        %859 = vmatprep.subr.mxu0 %v816
        %860 = vmatpush1.msra.mxu0 %v815
        %861 = vmatprep.subr.mxu0 %v818
        %862 = vmatpush1.msra.mxu0 %v817
        %863 = vmatprep.subr.mxu0 %v820
        %864 = vmatpush1.msra.mxu0 %v819
        %865 = vmatprep.subr.mxu0 %v822
        %866 = vmatpush1.msra.mxu0 %v821
        %867 = vmatprep.subr.mxu0 %v824
        %868 = vmatpush1.msra.mxu0 %v823
        %869 = vmatprep.subr.mxu0 %v826
        %870 = vmatpush1.msra.mxu0 %v825
        %871 = vmatprep.subr.mxu0 %v828
        %872 = vmatpush1.msra.mxu0 %v827
        %873 = vmatprep.subr.mxu0 %v830
        %874 = vmatpush1.msra.mxu0 %v829
        %875 = vmatprep.subr.mxu0 %v832
        %876 = vmatpush1.msra.mxu0 %v831
        %877 = vmatprep.subr.mxu0 0.0
        %878 = vmatpush1.msra.mxu0 0.0
        %879 = vmatprep.subr.mxu0 0.0
        %880 = vmatpush1.msra.mxu0 0.0
        %881 = vmatprep.subr.mxu0 0.0
        %882 = vmatpush1.msra.mxu0 0.0
        %883 = vmatprep.subr.mxu0 0.0
        %884 = vmatpush1.msra.mxu0 0.0
        %885 = vmatprep.subr.mxu0 0.0
        %886 = vmatpush1.msra.mxu0 0.0
        %887 = vmatprep.subr.mxu0 0.0
        %888 = vmatpush1.msra.mxu0 0.0
        %889 = vmatprep.subr.mxu0 0.0
        %890 = vmatpush1.msra.mxu0 0.0
        %891 = vmatprep.subr.mxu0 0.0
        %892 = vmatpush1.msra.mxu0 0.0
        %893 = vmatprep.subr.mxu0 0.0
        %894 = vmatpush1.msra.mxu0 0.0
        %895 = vmatprep.subr.mxu0 0.0
        %896 = vmatpush1.msra.mxu0 0.0
        %897 = vmatprep.subr.mxu0 0.0
        %898 = vmatpush1.msra.mxu0 0.0
        %899 = vmatprep.subr.mxu0 0.0
        %900 = vmatpush1.msra.mxu0 0.0
        %901 = vmatprep.subr.mxu0 0.0
        %902 = vmatpush1.msra.mxu0 0.0
        %903 = vmatprep.subr.mxu0 0.0
        %904 = vmatpush1.msra.mxu0 0.0
        %905 = vmatprep.subr.mxu0 0.0
        %906 = vmatpush1.msra.mxu0 0.0
        %907 = vmatprep.subr.mxu0 0.0
        %908 = vmatpush1.msra.mxu0 0.0
        %909 = vmatprep.mubr.f32.mxu0 0.0
        %910 = vmatmul.mubr.f32.gmra.mrb[0].mxu0 %v769
        %v911 = vpop.f32.mrb[0].mxu0
        %v912 = vadd.f32 %v838, %v911
        %v913 = vpop.f32.mrb[0].mxu0
        %v914 = vadd.f32 %v842, %v913
        %915 = vmatprep.mubr.f32.mxu0 0.0
        %916 = vmatmul.mubr.f32.gmra.mrb[0].mxu0 %v770
        %v917 = vpop.f32.mrb[0].mxu0
        %v918 = vadd.f32 %v838, %v917
        %v919 = vpop.f32.mrb[0].mxu0
        %v920 = vadd.f32 %v842, %v919
        %921 = vmatprep.mubr.f32.mxu0 0.0
        %922 = vmatmul.mubr.f32.gmra.mrb[0].mxu0 %v771
        %v923 = vpop.f32.mrb[0].mxu0
        %v924 = vadd.f32 %v838, %v923
        %v925 = vpop.f32.mrb[0].mxu0
        %v926 = vadd.f32 %v842, %v925
        %927 = vmatprep.mubr.f32.mxu0 0.0
        %928 = vmatmul.mubr.f32.gmra.mrb[0].mxu0 %v772
        %v929 = vpop.f32.mrb[0].mxu0
        %v930 = vadd.f32 %v838, %v929
        %v931 = vpop.f32.mrb[0].mxu0
        %v932 = vadd.f32 %v842, %v931
        %933 = vmatprep.mubr.f32.mxu0 0.0
        %934 = vmatmul.mubr.f32.gmra.mrb[0].mxu0 %v773
        %v935 = vpop.f32.mrb[0].mxu0
        %v936 = vadd.f32 %v838, %v935
        %v937 = vpop.f32.mrb[0].mxu0
        %v938 = vadd.f32 %v842, %v937
        %939 = vmatprep.mubr.f32.mxu0 0.0
        %940 = vmatmul.mubr.f32.gmra.mrb[0].mxu0 %v774
        %v941 = vpop.f32.mrb[0].mxu0
        %v942 = vadd.f32 %v838, %v941
        %v943 = vpop.f32.mrb[0].mxu0
        %v944 = vadd.f32 %v842, %v943
        %945 = vmatprep.mubr.f32.mxu0 0.0
        %946 = vmatmul.mubr.f32.gmra.mrb[0].mxu0 %v775
        %v947 = vpop.f32.mrb[0].mxu0
        %v948 = vadd.f32 %v838, %v947
        %v949 = vpop.f32.mrb[0].mxu0
        %v950 = vadd.f32 %v842, %v949
        %951 = vmatprep.mubr.f32.mxu0 0.0
        %952 = vmatmul.mubr.f32.gmra.mrb[0].mxu0 %v776
        %v953 = vpop.f32.mrb[0].mxu0
        %v954 = vadd.f32 %v838, %v953
        %v955 = vpop.f32.mrb[0].mxu0
        %v956 = vadd.f32 %v842, %v955
        %957 = vmatprep.mubr.f32.mxu0 0.0
        %958 = vmatmul.mubr.f32.gmra.mrb[0].mxu0 %v777
        %v959 = vpop.f32.mrb[0].mxu0
        %v960 = vadd.f32 %v838, %v959
        %v961 = vpop.f32.mrb[0].mxu0
        %v962 = vadd.f32 %v842, %v961
        %963 = vmatprep.mubr.f32.mxu0 0.0
        %964 = vmatmul.mubr.f32.gmra.mrb[0].mxu0 %v778
        %v965 = vpop.f32.mrb[0].mxu0
        %v966 = vadd.f32 %v838, %v965
        %v967 = vpop.f32.mrb[0].mxu0
        %v968 = vadd.f32 %v842, %v967
        %969 = vmatprep.mubr.f32.mxu0 0.0
        %970 = vmatmul.mubr.f32.gmra.mrb[0].mxu0 %v779
        %v971 = vpop.f32.mrb[0].mxu0
        %v972 = vadd.f32 %v838, %v971
        %v973 = vpop.f32.mrb[0].mxu0
        %v974 = vadd.f32 %v842, %v973
        %975 = vmatprep.mubr.f32.mxu0 0.0
        %976 = vmatmul.mubr.f32.gmra.mrb[0].mxu0 %v780
        %v977 = vpop.f32.mrb[0].mxu0
        %v978 = vadd.f32 %v838, %v977
        %v979 = vpop.f32.mrb[0].mxu0
        %v980 = vadd.f32 %v842, %v979
        %981 = vmatprep.mubr.f32.mxu0 0.0
        %982 = vmatmul.mubr.f32.gmra.mrb[0].mxu0 %v781
        %v983 = vpop.f32.mrb[0].mxu0
        %v984 = vadd.f32 %v838, %v983
        %v985 = vpop.f32.mrb[0].mxu0
        %v986 = vadd.f32 %v842, %v985
        %987 = vmatprep.mubr.f32.mxu0 0.0
        %988 = vmatmul.mubr.f32.gmra.mrb[0].mxu0 %v782
        %v989 = vpop.f32.mrb[0].mxu0
        %v990 = vadd.f32 %v838, %v989
        %v991 = vpop.f32.mrb[0].mxu0
        %v992 = vadd.f32 %v842, %v991
        %993 = vmatprep.mubr.f32.mxu0 0.0
        %994 = vmatmul.mubr.f32.gmra.mrb[0].mxu0 %v783
        %v995 = vpop.f32.mrb[0].mxu0
        %v996 = vadd.f32 %v838, %v995
        %v997 = vpop.f32.mrb[0].mxu0
        %v998 = vadd.f32 %v842, %v997
        %999 = vmatprep.mubr.f32.mxu0 0.0
        %1000 = vmatmul.mubr.f32.gmra.mrb[0].mxu0 %v784
        %v1001 = vpop.f32.mrb[0].mxu0
        %v1002 = vadd.f32 %v838, %v1001
        %v1003 = vpop.f32.mrb[0].mxu0
        %v1004 = vadd.f32 %v842, %v1003
        %1005 = vmatprep.mubr.f32.mxu0 0.0
        %1006 = vmatmul.mubr.f32.gmra.mrb[0].mxu0 %v785
        %v1007 = vpop.f32.mrb[0].mxu0
        %v1008 = vadd.f32 %v838, %v1007
        %v1009 = vpop.f32.mrb[0].mxu0
        %v1010 = vadd.f32 %v842, %v1009
        %1011 = vmatprep.mubr.f32.mxu0 0.0
        %1012 = vmatmul.mubr.f32.gmra.mrb[0].mxu0 %v786
        %v1013 = vpop.f32.mrb[0].mxu0
        %v1014 = vadd.f32 %v838, %v1013
        %v1015 = vpop.f32.mrb[0].mxu0
        %v1016 = vadd.f32 %v842, %v1015
        %1017 = vmatprep.mubr.f32.mxu0 0.0
        %1018 = vmatmul.mubr.f32.gmra.mrb[0].mxu0 %v787
        %v1019 = vpop.f32.mrb[0].mxu0
        %v1020 = vadd.f32 %v838, %v1019
        %v1021 = vpop.f32.mrb[0].mxu0
        %v1022 = vadd.f32 %v842, %v1021
        %1023 = vmatprep.mubr.f32.mxu0 0.0
        %1024 = vmatmul.mubr.f32.gmra.mrb[0].mxu0 %v788
        %v1025 = vpop.f32.mrb[0].mxu0
        %v1026 = vadd.f32 %v838, %v1025
        %v1027 = vpop.f32.mrb[0].mxu0
        %v1028 = vadd.f32 %v842, %v1027
        %1029 = vmatprep.mubr.f32.mxu0 0.0
        %1030 = vmatmul.mubr.f32.gmra.mrb[0].mxu0 %v789
        %v1031 = vpop.f32.mrb[0].mxu0
        %v1032 = vadd.f32 %v838, %v1031
        %v1033 = vpop.f32.mrb[0].mxu0
        %v1034 = vadd.f32 %v842, %v1033
        %1035 = vmatprep.mubr.f32.mxu0 0.0
        %1036 = vmatmul.mubr.f32.gmra.mrb[0].mxu0 %v790
        %v1037 = vpop.f32.mrb[0].mxu0
        %v1038 = vadd.f32 %v838, %v1037
        %v1039 = vpop.f32.mrb[0].mxu0
        %v1040 = vadd.f32 %v842, %v1039
        %1041 = vmatprep.mubr.f32.mxu0 0.0
        %1042 = vmatmul.mubr.f32.gmra.mrb[0].mxu0 %v791
        %v1043 = vpop.f32.mrb[0].mxu0
        %v1044 = vadd.f32 %v838, %v1043
        %v1045 = vpop.f32.mrb[0].mxu0
        %v1046 = vadd.f32 %v842, %v1045
        %1047 = vmatprep.mubr.f32.mxu0 0.0
        %1048 = vmatmul.mubr.f32.gmra.mrb[0].mxu0 %v792
        %v1049 = vpop.f32.mrb[0].mxu0
        %v1050 = vadd.f32 %v838, %v1049
        %v1051 = vpop.f32.mrb[0].mxu0
        %v1052 = vadd.f32 %v842, %v1051
        %1053 = vmatprep.mubr.f32.mxu0 0.0
        %1054 = vmatmul.mubr.f32.gmra.mrb[0].mxu0 %v793
        %v1055 = vpop.f32.mrb[0].mxu0
        %v1056 = vadd.f32 %v838, %v1055
        %v1057 = vpop.f32.mrb[0].mxu0
        %v1058 = vadd.f32 %v842, %v1057
        %1059 = vmatprep.mubr.f32.mxu0 0.0
        %1060 = vmatmul.mubr.f32.gmra.mrb[0].mxu0 %v794
        %v1061 = vpop.f32.mrb[0].mxu0
        %v1062 = vadd.f32 %v838, %v1061
        %v1063 = vpop.f32.mrb[0].mxu0
        %v1064 = vadd.f32 %v842, %v1063
        %1065 = vmatprep.mubr.f32.mxu0 0.0
        %1066 = vmatmul.mubr.f32.gmra.mrb[0].mxu0 %v795
        %v1067 = vpop.f32.mrb[0].mxu0
        %v1068 = vadd.f32 %v838, %v1067
        %v1069 = vpop.f32.mrb[0].mxu0
        %v1070 = vadd.f32 %v842, %v1069
        %1071 = vmatprep.mubr.f32.mxu0 0.0
        %1072 = vmatmul.mubr.f32.gmra.mrb[0].mxu0 %v796
        %v1073 = vpop.f32.mrb[0].mxu0
        %v1074 = vadd.f32 %v838, %v1073
        %v1075 = vpop.f32.mrb[0].mxu0
        %v1076 = vadd.f32 %v842, %v1075
        %1077 = vmatprep.mubr.f32.mxu0 0.0
        %1078 = vmatmul.mubr.f32.gmra.mrb[0].mxu0 %v797
        %v1079 = vpop.f32.mrb[0].mxu0
        %v1080 = vadd.f32 %v838, %v1079
        %v1081 = vpop.f32.mrb[0].mxu0
        %v1082 = vadd.f32 %v842, %v1081
        %1083 = vmatprep.mubr.f32.mxu0 0.0
        %1084 = vmatmul.mubr.f32.gmra.mrb[0].mxu0 %v798
        %v1085 = vpop.f32.mrb[0].mxu0
        %v1086 = vadd.f32 %v838, %v1085
        %v1087 = vpop.f32.mrb[0].mxu0
        %v1088 = vadd.f32 %v842, %v1087
        %1089 = vmatprep.mubr.f32.mxu0 0.0
        %1090 = vmatmul.mubr.f32.gmra.mrb[0].mxu0 %v799
        %v1091 = vpop.f32.mrb[0].mxu0
        %v1092 = vadd.f32 %v838, %v1091
        %v1093 = vpop.f32.mrb[0].mxu0
        %v1094 = vadd.f32 %v842, %v1093
        %1095 = vmatprep.mubr.f32.mxu0 0.0
        %1096 = vmatmul.mubr.f32.gmra.mrb[0].mxu0 %v800
        %v1097 = vpop.f32.mrb[0].mxu0
        %v1098 = vadd.f32 %v838, %v1097
        %v1099 = vpop.f32.mrb[0].mxu0
        %v1100 = vadd.f32 %v842, %v1099
        %1101 = vdwg.mxu0
        %v1102 = vmax.f32 %v912, %v918
        %v1103 = vmax.f32 %v1102, %v924
        %v1104 = vmax.f32 %v1103, %v930
        %v1105 = vrot.slane %v1104, 4
        %v1106 = vmax.f32 %v1104, %v1105
        %v1107 = vrot.slane %v1106, 2
        %v1108 = vmax.f32 %v1106, %v1107
        %v1109 = vrot.slane %v1108, 1
        %v1110 = vmax.f32 %v1108, %v1109
        %v1111 = vmax.f32 %v914, %v920
        %v1112 = vmax.f32 %v1111, %v926
        %v1113 = vmax.f32 %v1112, %v932
        %v1114 = vrot.slane %v1113, 4
        %v1115 = vmax.f32 %v1113, %v1114
        %v1116 = vrot.slane %v1115, 2
        %v1117 = vmax.f32 %v1115, %v1116
        %v1118 = vrot.slane %v1117, 1
        %v1119 = vmax.f32 %v1117, %v1118
        %v1120 = vmax.f32 %v936, %v942
        %v1121 = vmax.f32 %v1120, %v948
        %v1122 = vmax.f32 %v1121, %v954
        %v1123 = vrot.slane %v1122, 4
        %v1124 = vmax.f32 %v1122, %v1123
        %v1125 = vrot.slane %v1124, 2
        %v1126 = vmax.f32 %v1124, %v1125
        %v1127 = vrot.slane %v1126, 1
        %v1128 = vmax.f32 %v1126, %v1127
        %v1129 = vmax.f32 %v938, %v944
        %v1130 = vmax.f32 %v1129, %v950
        %v1131 = vmax.f32 %v1130, %v956
        %v1132 = vrot.slane %v1131, 4
        %v1133 = vmax.f32 %v1131, %v1132
        %v1134 = vrot.slane %v1133, 2
        %v1135 = vmax.f32 %v1133, %v1134
        %v1136 = vrot.slane %v1135, 1
        %v1137 = vmax.f32 %v1135, %v1136
        %v1138 = vmax.f32 %v960, %v966
        %v1139 = vmax.f32 %v1138, %v972
        %v1140 = vmax.f32 %v1139, %v978
        %v1141 = vrot.slane %v1140, 4
        %v1142 = vmax.f32 %v1140, %v1141
        %v1143 = vrot.slane %v1142, 2
        %v1144 = vmax.f32 %v1142, %v1143
        %v1145 = vrot.slane %v1144, 1
        %v1146 = vmax.f32 %v1144, %v1145
        %v1147 = vmax.f32 %v962, %v968
        %v1148 = vmax.f32 %v1147, %v974
        %v1149 = vmax.f32 %v1148, %v980
        %v1150 = vrot.slane %v1149, 4
        %v1151 = vmax.f32 %v1149, %v1150
        %v1152 = vrot.slane %v1151, 2
        %v1153 = vmax.f32 %v1151, %v1152
        %v1154 = vrot.slane %v1153, 1
        %v1155 = vmax.f32 %v1153, %v1154
        %v1156 = vmax.f32 %v984, %v990
        %v1157 = vmax.f32 %v1156, %v996
        %v1158 = vmax.f32 %v1157, %v1002
        %v1159 = vrot.slane %v1158, 4
        %v1160 = vmax.f32 %v1158, %v1159
        %v1161 = vrot.slane %v1160, 2
        %v1162 = vmax.f32 %v1160, %v1161
        %v1163 = vrot.slane %v1162, 1
        %v1164 = vmax.f32 %v1162, %v1163
        %v1165 = vmax.f32 %v986, %v992
        %v1166 = vmax.f32 %v1165, %v998
        %v1167 = vmax.f32 %v1166, %v1004
        %v1168 = vrot.slane %v1167, 4
        %v1169 = vmax.f32 %v1167, %v1168
        %v1170 = vrot.slane %v1169, 2
        %v1171 = vmax.f32 %v1169, %v1170
        %v1172 = vrot.slane %v1171, 1
        %v1173 = vmax.f32 %v1171, %v1172
        %v1174 = vmax.f32 %v1008, %v1014
        %v1175 = vmax.f32 %v1174, %v1020
        %v1176 = vmax.f32 %v1175, %v1026
        %v1177 = vrot.slane %v1176, 4
        %v1178 = vmax.f32 %v1176, %v1177
        %v1179 = vrot.slane %v1178, 2
        %v1180 = vmax.f32 %v1178, %v1179
        %v1181 = vrot.slane %v1180, 1
        %v1182 = vmax.f32 %v1180, %v1181
        %v1183 = vmax.f32 %v1010, %v1016
        %v1184 = vmax.f32 %v1183, %v1022
        %v1185 = vmax.f32 %v1184, %v1028
        %v1186 = vrot.slane %v1185, 4
        %v1187 = vmax.f32 %v1185, %v1186
        %v1188 = vrot.slane %v1187, 2
        %v1189 = vmax.f32 %v1187, %v1188
        %v1190 = vrot.slane %v1189, 1
        %v1191 = vmax.f32 %v1189, %v1190
        %v1192 = vmax.f32 %v1032, %v1038
        %v1193 = vmax.f32 %v1192, %v1044
        %v1194 = vmax.f32 %v1193, %v1050
        %v1195 = vrot.slane %v1194, 4
        %v1196 = vmax.f32 %v1194, %v1195
        %v1197 = vrot.slane %v1196, 2
        %v1198 = vmax.f32 %v1196, %v1197
        %v1199 = vrot.slane %v1198, 1
        %v1200 = vmax.f32 %v1198, %v1199
        %v1201 = vmax.f32 %v1034, %v1040
        %v1202 = vmax.f32 %v1201, %v1046
        %v1203 = vmax.f32 %v1202, %v1052
        %v1204 = vrot.slane %v1203, 4
        %v1205 = vmax.f32 %v1203, %v1204
        %v1206 = vrot.slane %v1205, 2
        %v1207 = vmax.f32 %v1205, %v1206
        %v1208 = vrot.slane %v1207, 1
        %v1209 = vmax.f32 %v1207, %v1208
        %v1210 = vmax.f32 %v1056, %v1062
        %v1211 = vmax.f32 %v1210, %v1068
        %v1212 = vmax.f32 %v1211, %v1074
        %v1213 = vrot.slane %v1212, 4
        %v1214 = vmax.f32 %v1212, %v1213
        %v1215 = vrot.slane %v1214, 2
        %v1216 = vmax.f32 %v1214, %v1215
        %v1217 = vrot.slane %v1216, 1
        %v1218 = vmax.f32 %v1216, %v1217
        %v1219 = vmax.f32 %v1058, %v1064
        %v1220 = vmax.f32 %v1219, %v1070
        %v1221 = vmax.f32 %v1220, %v1076
        %v1222 = vrot.slane %v1221, 4
        %v1223 = vmax.f32 %v1221, %v1222
        %v1224 = vrot.slane %v1223, 2
        %v1225 = vmax.f32 %v1223, %v1224
        %v1226 = vrot.slane %v1225, 1
        %v1227 = vmax.f32 %v1225, %v1226
        %v1228 = vmax.f32 %v1080, %v1086
        %v1229 = vmax.f32 %v1228, %v1092
        %v1230 = vmax.f32 %v1229, %v1098
        %v1231 = vrot.slane %v1230, 4
        %v1232 = vmax.f32 %v1230, %v1231
        %v1233 = vrot.slane %v1232, 2
        %v1234 = vmax.f32 %v1232, %v1233
        %v1235 = vrot.slane %v1234, 1
        %v1236 = vmax.f32 %v1234, %v1235
        %v1237 = vmax.f32 %v1082, %v1088
        %v1238 = vmax.f32 %v1237, %v1094
        %v1239 = vmax.f32 %v1238, %v1100
        %v1240 = vrot.slane %v1239, 4
        %v1241 = vmax.f32 %v1239, %v1240
        %v1242 = vrot.slane %v1241, 2
        %v1243 = vmax.f32 %v1241, %v1242
        %v1244 = vrot.slane %v1243, 1
        %v1245 = vmax.f32 %v1243, %v1244
        %v1246 = vld [vmem:[#allocation2] sm:$0xff]
        %v1247 = vld [vmem:[#allocation2 + $0x8] sm:$0xff]
        %v1248 = vld [vmem:[#allocation2 + $0x10] sm:$0xff]
        %v1249 = vld [vmem:[#allocation2 + $0x18] sm:$0xff]
        %v1250 = vld [vmem:[#allocation2 + $0x20] sm:$0xff]
        %v1251 = vld [vmem:[#allocation2 + $0x28] sm:$0xff]
        %v1252 = vld [vmem:[#allocation2 + $0x30] sm:$0xff]
        %v1253 = vld [vmem:[#allocation2 + $0x38] sm:$0xff]
        %v1254 = vld [vmem:[#allocation2 + $0x40] sm:$0xff]
        %v1255 = vld [vmem:[#allocation2 + $0x48] sm:$0xff]
        %v1256 = vld [vmem:[#allocation2 + $0x50] sm:$0xff]
        %v1257 = vld [vmem:[#allocation2 + $0x58] sm:$0xff]
        %v1258 = vld [vmem:[#allocation2 + $0x60] sm:$0xff]
        %v1259 = vld [vmem:[#allocation2 + $0x68] sm:$0xff]
        %v1260 = vld [vmem:[#allocation2 + $0x70] sm:$0xff]
        %v1261 = vld [vmem:[#allocation2 + $0x78] sm:$0xff]
        %v1262 = vld [vmem:[#allocation2 + $0x80] sm:$0xff]
        %v1263 = vld [vmem:[#allocation2 + $0x88] sm:$0xff]
        %v1264 = vld [vmem:[#allocation2 + $0x90] sm:$0xff]
        %v1265 = vld [vmem:[#allocation2 + $0x98] sm:$0xff]
        %v1266 = vld [vmem:[#allocation2 + $0xa0] sm:$0xff]
        %v1267 = vld [vmem:[#allocation2 + $0xa8] sm:$0xff]
        %v1268 = vld [vmem:[#allocation2 + $0xb0] sm:$0xff]
        %v1269 = vld [vmem:[#allocation2 + $0xb8] sm:$0xff]
        %v1270 = vld [vmem:[#allocation2 + $0xc0] sm:$0xff]
        %v1271 = vld [vmem:[#allocation2 + $0xc8] sm:$0xff]
        %v1272 = vld [vmem:[#allocation2 + $0xd0] sm:$0xff]
        %v1273 = vld [vmem:[#allocation2 + $0xd8] sm:$0xff]
        %v1274 = vld [vmem:[#allocation2 + $0xe0] sm:$0xff]
        %v1275 = vld [vmem:[#allocation2 + $0xe8] sm:$0xff]
        %v1276 = vld [vmem:[#allocation2 + $0xf0] sm:$0xff]
        %v1277 = vld [vmem:[#allocation2 + $0xf8] sm:$0xff]
        %v1278 = vld [vmem:[#allocation2 + $0x100] sm:$0xff]
        %v1279 = vld [vmem:[#allocation2 + $0x108] sm:$0xff]
        %v1280 = vld [vmem:[#allocation2 + $0x110] sm:$0xff]
        %v1281 = vld [vmem:[#allocation2 + $0x118] sm:$0xff]
        %v1282 = vld [vmem:[#allocation2 + $0x120] sm:$0xff]
        %v1283 = vld [vmem:[#allocation2 + $0x128] sm:$0xff]
        %v1284 = vld [vmem:[#allocation2 + $0x130] sm:$0xff]
        %v1285 = vld [vmem:[#allocation2 + $0x138] sm:$0xff]
        %v1286 = vld [vmem:[#allocation2 + $0x140] sm:$0xff]
        %v1287 = vld [vmem:[#allocation2 + $0x148] sm:$0xff]
        %v1288 = vld [vmem:[#allocation2 + $0x150] sm:$0xff]
        %v1289 = vld [vmem:[#allocation2 + $0x158] sm:$0xff]
        %v1290 = vld [vmem:[#allocation2 + $0x160] sm:$0xff]
        %v1291 = vld [vmem:[#allocation2 + $0x168] sm:$0xff]
        %v1292 = vld [vmem:[#allocation2 + $0x170] sm:$0xff]
        %v1293 = vld [vmem:[#allocation2 + $0x178] sm:$0xff]
        %v1294 = vld [vmem:[#allocation2 + $0x180] sm:$0xff]
        %v1295 = vld [vmem:[#allocation2 + $0x188] sm:$0xff]
        %v1296 = vld [vmem:[#allocation2 + $0x190] sm:$0xff]
        %v1297 = vld [vmem:[#allocation2 + $0x198] sm:$0xff]
        %v1298 = vld [vmem:[#allocation2 + $0x1a0] sm:$0xff]
        %v1299 = vld [vmem:[#allocation2 + $0x1a8] sm:$0xff]
        %v1300 = vld [vmem:[#allocation2 + $0x1b0] sm:$0xff]
        %v1301 = vld [vmem:[#allocation2 + $0x1b8] sm:$0xff]
        %v1302 = vld [vmem:[#allocation2 + $0x1c0] sm:$0xff]
        %v1303 = vld [vmem:[#allocation2 + $0x1c8] sm:$0xff]
        %v1304 = vld [vmem:[#allocation2 + $0x1d0] sm:$0xff]
        %v1305 = vld [vmem:[#allocation2 + $0x1d8] sm:$0xff]
        %v1306 = vld [vmem:[#allocation2 + $0x1e0] sm:$0xff]
        %v1307 = vld [vmem:[#allocation2 + $0x1e8] sm:$0xff]
        %v1308 = vld [vmem:[#allocation2 + $0x1f0] sm:$0xff]
        %v1309 = vld [vmem:[#allocation2 + $0x1f8] sm:$0xff]
        %v1310 = vld [vmem:[#allocation2 + $0x200] sm:$0xff]
        %v1311 = vld [vmem:[#allocation2 + $0x208] sm:$0xff]
        %v1312 = vld [vmem:[#allocation2 + $0x210] sm:$0xff]
        %v1313 = vld [vmem:[#allocation2 + $0x218] sm:$0xff]
        %v1314 = vld [vmem:[#allocation2 + $0x220] sm:$0xff]
        %v1315 = vld [vmem:[#allocation2 + $0x228] sm:$0xff]
        %v1316 = vld [vmem:[#allocation2 + $0x230] sm:$0xff]
        %v1317 = vld [vmem:[#allocation2 + $0x238] sm:$0xff]
        %v1318 = vld [vmem:[#allocation2 + $0x240] sm:$0xff]
        %v1319 = vld [vmem:[#allocation2 + $0x248] sm:$0xff]
        %v1320 = vld [vmem:[#allocation2 + $0x250] sm:$0xff]
        %v1321 = vld [vmem:[#allocation2 + $0x258] sm:$0xff]
        %v1322 = vld [vmem:[#allocation2 + $0x260] sm:$0xff]
        %v1323 = vld [vmem:[#allocation2 + $0x268] sm:$0xff]
        %v1324 = vld [vmem:[#allocation2 + $0x270] sm:$0xff]
        %v1325 = vld [vmem:[#allocation2 + $0x278] sm:$0xff]
        %v1326 = vld [vmem:[#allocation2 + $0x280] sm:$0xff]
        %v1327 = vld [vmem:[#allocation2 + $0x288] sm:$0xff]
        %v1328 = vld [vmem:[#allocation2 + $0x290] sm:$0xff]
        %v1329 = vld [vmem:[#allocation2 + $0x298] sm:$0xff]
        %v1330 = vld [vmem:[#allocation2 + $0x2a0] sm:$0xff]
        %v1331 = vld [vmem:[#allocation2 + $0x2a8] sm:$0xff]
        %v1332 = vld [vmem:[#allocation2 + $0x2b0] sm:$0xff]
        %v1333 = vld [vmem:[#allocation2 + $0x2b8] sm:$0xff]
        %v1334 = vld [vmem:[#allocation2 + $0x2c0] sm:$0xff]
        %v1335 = vld [vmem:[#allocation2 + $0x2c8] sm:$0xff]
        %v1336 = vld [vmem:[#allocation2 + $0x2d0] sm:$0xff]
        %v1337 = vld [vmem:[#allocation2 + $0x2d8] sm:$0xff]
        %v1338 = vld [vmem:[#allocation2 + $0x2e0] sm:$0xff]
        %v1339 = vld [vmem:[#allocation2 + $0x2e8] sm:$0xff]
        %v1340 = vld [vmem:[#allocation2 + $0x2f0] sm:$0xff]
        %v1341 = vld [vmem:[#allocation2 + $0x2f8] sm:$0xff]
        %v1342 = vld [vmem:[#allocation2 + $0x300] sm:$0xff]
        %v1343 = vld [vmem:[#allocation2 + $0x308] sm:$0xff]
        %v1344 = vld [vmem:[#allocation2 + $0x310] sm:$0xff]
        %v1345 = vld [vmem:[#allocation2 + $0x318] sm:$0xff]
        %v1346 = vld [vmem:[#allocation2 + $0x320] sm:$0xff]
        %v1347 = vld [vmem:[#allocation2 + $0x328] sm:$0xff]
        %v1348 = vld [vmem:[#allocation2 + $0x330] sm:$0xff]
        %v1349 = vld [vmem:[#allocation2 + $0x338] sm:$0xff]
        %v1350 = vld [vmem:[#allocation2 + $0x340] sm:$0xff]
        %v1351 = vld [vmem:[#allocation2 + $0x348] sm:$0xff]
        %v1352 = vld [vmem:[#allocation2 + $0x350] sm:$0xff]
        %v1353 = vld [vmem:[#allocation2 + $0x358] sm:$0xff]
        %v1354 = vld [vmem:[#allocation2 + $0x360] sm:$0xff]
        %v1355 = vld [vmem:[#allocation2 + $0x368] sm:$0xff]
        %v1356 = vld [vmem:[#allocation2 + $0x370] sm:$0xff]
        %v1357 = vld [vmem:[#allocation2 + $0x378] sm:$0xff]
        %v1358 = vld [vmem:[#allocation2 + $0x380] sm:$0xff]
        %v1359 = vld [vmem:[#allocation2 + $0x388] sm:$0xff]
        %v1360 = vld [vmem:[#allocation2 + $0x390] sm:$0xff]
        %v1361 = vld [vmem:[#allocation2 + $0x398] sm:$0xff]
        %v1362 = vld [vmem:[#allocation2 + $0x3a0] sm:$0xff]
        %v1363 = vld [vmem:[#allocation2 + $0x3a8] sm:$0xff]
        %v1364 = vld [vmem:[#allocation2 + $0x3b0] sm:$0xff]
        %v1365 = vld [vmem:[#allocation2 + $0x3b8] sm:$0xff]
        %v1366 = vld [vmem:[#allocation2 + $0x3c0] sm:$0xff]
        %v1367 = vld [vmem:[#allocation2 + $0x3c8] sm:$0xff]
        %v1368 = vld [vmem:[#allocation2 + $0x3d0] sm:$0xff]
        %v1369 = vld [vmem:[#allocation2 + $0x3d8] sm:$0xff]
        %v1370 = vld [vmem:[#allocation2 + $0x3e0] sm:$0xff]
        %v1371 = vld [vmem:[#allocation2 + $0x3e8] sm:$0xff]
        %v1372 = vld [vmem:[#allocation2 + $0x3f0] sm:$0xff]
        %v1373 = vld [vmem:[#allocation2 + $0x3f8] sm:$0xff]
        %v1374 = vld [vmem:[%s7] sm:$0xf]
        %v1376 = vlaneseq
        %v1377 = vshrl.u32 %v1376, 7
        %v1378 = vsub.s32 0, %v1377
        %v1379 = vrot.slane %v1374, %v1378
        %v1380 = vlaneseq
        %v1381 = vshrl.u32 %v1380, 7
        %v1382 = vsub.s32 1, %v1381
        %v1383 = vrot.slane %v1374, %v1382
        %v1384 = vlaneseq
        %v1385 = vshrl.u32 %v1384, 7
        %v1386 = vsub.s32 2, %v1385
        %v1387 = vrot.slane %v1374, %v1386
        %v1388 = vlaneseq
        %v1389 = vshrl.u32 %v1388, 7
        %v1390 = vsub.s32 3, %v1389
        %v1391 = vrot.slane %v1374, %v1390
        %vm1412 = vcmask 1041409
        %v1413 = vsel %vm1412, %v1128, %v1110
        %vm1414 = vcmask 1042434
        %v1415 = vsel %vm1414, %v1146, %v1413
        %vm1416 = vcmask 1043459
        %v1417 = vsel %vm1416, %v1164, %v1415
        %vm1418 = vcmask 1044484
        %v1419 = vsel %vm1418, %v1182, %v1417
        %vm1420 = vcmask 1045509
        %v1421 = vsel %vm1420, %v1200, %v1419
        %vm1422 = vcmask 1046534
        %v1423 = vsel %vm1422, %v1218, %v1421
        %vm1424 = vcmask 1047559
        %v1425 = vsel %vm1424, %v1236, %v1423
        %v1426 = vsel %vm1412, %v1137, %v1119
        %v1427 = vsel %vm1414, %v1155, %v1426
        %v1428 = vsel %vm1416, %v1173, %v1427
        %v1429 = vsel %vm1418, %v1191, %v1428
        %v1430 = vsel %vm1420, %v1209, %v1429
        %v1431 = vsel %vm1422, %v1227, %v1430
        %v1432 = vsel %vm1424, %v1245, %v1431
        %1435 = vmatprep.subr.mxu0 %v1247
        %1436 = vmatpush1.msra.mxu0 %v1246
        %1437 = vmatprep.subr.mxu0 %v1251
        %1438 = vmatpush1.msra.mxu0 %v1250
        %1439 = vmatprep.subr.mxu0 %v1255
        %1440 = vmatpush1.msra.mxu0 %v1254
        %1441 = vmatprep.subr.mxu0 %v1259
        %1442 = vmatpush1.msra.mxu0 %v1258
        %1443 = vmatprep.subr.mxu0 %v1263
        %1444 = vmatpush1.msra.mxu0 %v1262
        %1445 = vmatprep.subr.mxu0 %v1267
        %1446 = vmatpush1.msra.mxu0 %v1266
        %1447 = vmatprep.subr.mxu0 %v1271
        %1448 = vmatpush1.msra.mxu0 %v1270
        %1449 = vmatprep.subr.mxu0 %v1275
        %1450 = vmatpush1.msra.mxu0 %v1274
        %1451 = vmatprep.subr.mxu0 %v1279
        %1452 = vmatpush1.msra.mxu0 %v1278
        %1453 = vmatprep.subr.mxu0 %v1283
        %1454 = vmatpush1.msra.mxu0 %v1282
        %1455 = vmatprep.subr.mxu0 %v1287
        %1456 = vmatpush1.msra.mxu0 %v1286
        %1457 = vmatprep.subr.mxu0 %v1291
        %1458 = vmatpush1.msra.mxu0 %v1290
        %1459 = vmatprep.subr.mxu0 %v1295
        %1460 = vmatpush1.msra.mxu0 %v1294
        %1461 = vmatprep.subr.mxu0 %v1299
        %1462 = vmatpush1.msra.mxu0 %v1298
        %1463 = vmatprep.subr.mxu0 %v1303
        %1464 = vmatpush1.msra.mxu0 %v1302
        %1465 = vmatprep.subr.mxu0 %v1307
        %1466 = vmatpush1.msra.mxu0 %v1306
        %1467 = vmatprep.subr.mxu0 %v1311
        %1468 = vmatpush1.msra.mxu0 %v1310
        %1469 = vmatprep.subr.mxu0 %v1315
        %1470 = vmatpush1.msra.mxu0 %v1314
        %1471 = vmatprep.subr.mxu0 %v1319
        %1472 = vmatpush1.msra.mxu0 %v1318
        %1473 = vmatprep.subr.mxu0 %v1323
        %1474 = vmatpush1.msra.mxu0 %v1322
        %1475 = vmatprep.subr.mxu0 %v1327
        %1476 = vmatpush1.msra.mxu0 %v1326
        %1477 = vmatprep.subr.mxu0 %v1331
        %1478 = vmatpush1.msra.mxu0 %v1330
        %1479 = vmatprep.subr.mxu0 %v1335
        %1480 = vmatpush1.msra.mxu0 %v1334
        %1481 = vmatprep.subr.mxu0 %v1339
        %1482 = vmatpush1.msra.mxu0 %v1338
        %1483 = vmatprep.subr.mxu0 %v1343
        %1484 = vmatpush1.msra.mxu0 %v1342
        %1485 = vmatprep.subr.mxu0 %v1347
        %1486 = vmatpush1.msra.mxu0 %v1346
        %1487 = vmatprep.subr.mxu0 %v1351
        %1488 = vmatpush1.msra.mxu0 %v1350
        %1489 = vmatprep.subr.mxu0 %v1355
        %1490 = vmatpush1.msra.mxu0 %v1354
        %1491 = vmatprep.subr.mxu0 %v1359
        %1492 = vmatpush1.msra.mxu0 %v1358
        %1493 = vmatprep.subr.mxu0 %v1363
        %1494 = vmatpush1.msra.mxu0 %v1362
        %1495 = vmatprep.subr.mxu0 %v1367
        %1496 = vmatpush1.msra.mxu0 %v1366
        %1497 = vmatprep.subr.mxu0 %v1371
        %1498 = vmatpush1.msra.mxu0 %v1370
        %1499 = vmatprep.mubr.f32.mxu0 %v1432
        %1500 = vmatmul.mubr.f32.gmra.mrb[0].mxu0 %v1425
        %v1501 = vpop.f32.mrb[0].mxu0
        %v1502 = vadd.f32 %v1379, %v1501
        %v1503 = vpop.f32.mrb[0].mxu0
        %v1504 = vadd.f32 %v1383, %v1503
        %1505 = vdwg.mxu0
        %1506 = vmatprep.subr.mxu0 %v1249
        %1507 = vmatpush1.msra.mxu0 %v1248
        %1508 = vmatprep.subr.mxu0 %v1253
        %1509 = vmatpush1.msra.mxu0 %v1252
        %1510 = vmatprep.subr.mxu0 %v1257
        %1511 = vmatpush1.msra.mxu0 %v1256
        %1512 = vmatprep.subr.mxu0 %v1261
        %1513 = vmatpush1.msra.mxu0 %v1260
        %1514 = vmatprep.subr.mxu0 %v1265
        %1515 = vmatpush1.msra.mxu0 %v1264
        %1516 = vmatprep.subr.mxu0 %v1269
        %1517 = vmatpush1.msra.mxu0 %v1268
        %1518 = vmatprep.subr.mxu0 %v1273
        %1519 = vmatpush1.msra.mxu0 %v1272
        %1520 = vmatprep.subr.mxu0 %v1277
        %1521 = vmatpush1.msra.mxu0 %v1276
        %1522 = vmatprep.subr.mxu0 %v1281
        %1523 = vmatpush1.msra.mxu0 %v1280
        %1524 = vmatprep.subr.mxu0 %v1285
        %1525 = vmatpush1.msra.mxu0 %v1284
        %1526 = vmatprep.subr.mxu0 %v1289
        %1527 = vmatpush1.msra.mxu0 %v1288
        %1528 = vmatprep.subr.mxu0 %v1293
        %1529 = vmatpush1.msra.mxu0 %v1292
        %1530 = vmatprep.subr.mxu0 %v1297
        %1531 = vmatpush1.msra.mxu0 %v1296
        %1532 = vmatprep.subr.mxu0 %v1301
        %1533 = vmatpush1.msra.mxu0 %v1300
        %1534 = vmatprep.subr.mxu0 %v1305
        %1535 = vmatpush1.msra.mxu0 %v1304
        %1536 = vmatprep.subr.mxu0 %v1309
        %1537 = vmatpush1.msra.mxu0 %v1308
        %1538 = vmatprep.subr.mxu0 %v1313
        %1539 = vmatpush1.msra.mxu0 %v1312
        %1540 = vmatprep.subr.mxu0 %v1317
        %1541 = vmatpush1.msra.mxu0 %v1316
        %1542 = vmatprep.subr.mxu0 %v1321
        %1543 = vmatpush1.msra.mxu0 %v1320
        %1544 = vmatprep.subr.mxu0 %v1325
        %1545 = vmatpush1.msra.mxu0 %v1324
        %1546 = vmatprep.subr.mxu0 %v1329
        %1547 = vmatpush1.msra.mxu0 %v1328
        %1548 = vmatprep.subr.mxu0 %v1333
        %1549 = vmatpush1.msra.mxu0 %v1332
        %1550 = vmatprep.subr.mxu0 %v1337
        %1551 = vmatpush1.msra.mxu0 %v1336
        %1552 = vmatprep.subr.mxu0 %v1341
        %1553 = vmatpush1.msra.mxu0 %v1340
        %1554 = vmatprep.subr.mxu0 %v1345
        %1555 = vmatpush1.msra.mxu0 %v1344
        %1556 = vmatprep.subr.mxu0 %v1349
        %1557 = vmatpush1.msra.mxu0 %v1348
        %1558 = vmatprep.subr.mxu0 %v1353
        %1559 = vmatpush1.msra.mxu0 %v1352
        %1560 = vmatprep.subr.mxu0 %v1357
        %1561 = vmatpush1.msra.mxu0 %v1356
        %1562 = vmatprep.subr.mxu0 %v1361
        %1563 = vmatpush1.msra.mxu0 %v1360
        %1564 = vmatprep.subr.mxu0 %v1365
        %1565 = vmatpush1.msra.mxu0 %v1364
        %1566 = vmatprep.subr.mxu0 %v1369
        %1567 = vmatpush1.msra.mxu0 %v1368
        %1568 = vmatprep.subr.mxu0 %v1373
        %1569 = vmatpush1.msra.mxu0 %v1372
        %1570 = vmatprep.mubr.f32.mxu0 %v1432
        %1571 = vmatmul.mubr.f32.gmra.mrb[0].mxu0 %v1425
        %v1572 = vpop.f32.mrb[0].mxu0
        %v1573 = vadd.f32 %v1387, %v1572
        %v1574 = vpop.f32.mrb[0].mxu0
        %v1575 = vadd.f32 %v1391, %v1574
        %1576 = vdwg.mxu0
        %v1577 = vld [vmem:[#allocation5] sm:$0xff]
        %v1578 = vld [vmem:[#allocation5 + $0x8] sm:$0xff]
        %v1579 = vld [vmem:[#allocation5 + $0x10] sm:$0xff]
        %v1580 = vld [vmem:[#allocation5 + $0x18] sm:$0xff]
        %v1581 = vld [vmem:[#allocation5 + $0x20] sm:$0xff]
        %v1582 = vld [vmem:[#allocation5 + $0x28] sm:$0xff]
        %v1583 = vld [vmem:[#allocation5 + $0x30] sm:$0xff]
        %v1584 = vld [vmem:[#allocation5 + $0x38] sm:$0xff]
        %v1585 = vld [vmem:[#allocation5 + $0x40] sm:$0xff]
        %v1586 = vld [vmem:[#allocation5 + $0x48] sm:$0xff]
        %v1587 = vld [vmem:[#allocation5 + $0x50] sm:$0xff]
        %v1588 = vld [vmem:[#allocation5 + $0x58] sm:$0xff]
        %v1589 = vld [vmem:[#allocation5 + $0x60] sm:$0xff]
        %v1590 = vld [vmem:[#allocation5 + $0x68] sm:$0xff]
        %v1591 = vld [vmem:[#allocation5 + $0x70] sm:$0xff]
        %v1592 = vld [vmem:[#allocation5 + $0x78] sm:$0xff]
        %v1593 = vld [vmem:[#allocation5 + $0x80] sm:$0xff]
        %v1594 = vld [vmem:[#allocation5 + $0x88] sm:$0xff]
        %v1595 = vld [vmem:[#allocation5 + $0x90] sm:$0xff]
        %v1596 = vld [vmem:[#allocation5 + $0x98] sm:$0xff]
        %v1597 = vld [vmem:[#allocation5 + $0xa0] sm:$0xff]
        %v1598 = vld [vmem:[#allocation5 + $0xa8] sm:$0xff]
        %v1599 = vld [vmem:[#allocation5 + $0xb0] sm:$0xff]
        %v1600 = vld [vmem:[#allocation5 + $0xb8] sm:$0xff]
        %v1601 = vld [vmem:[#allocation5 + $0xc0] sm:$0xff]
        %v1602 = vld [vmem:[#allocation5 + $0xc8] sm:$0xff]
        %v1603 = vld [vmem:[#allocation5 + $0xd0] sm:$0xff]
        %v1604 = vld [vmem:[#allocation5 + $0xd8] sm:$0xff]
        %v1605 = vld [vmem:[#allocation5 + $0xe0] sm:$0xff]
        %v1606 = vld [vmem:[#allocation5 + $0xe8] sm:$0xff]
        %v1607 = vld [vmem:[#allocation5 + $0xf0] sm:$0xff]
        %v1608 = vld [vmem:[#allocation5 + $0xf8] sm:$0xff]
        %v1609 = vld [vmem:[#allocation5 + $0x100] sm:$0xff]
        %v1610 = vld [vmem:[#allocation5 + $0x108] sm:$0xff]
        %v1611 = vld [vmem:[#allocation5 + $0x110] sm:$0xff]
        %v1612 = vld [vmem:[#allocation5 + $0x118] sm:$0xff]
        %v1613 = vld [vmem:[#allocation5 + $0x120] sm:$0xff]
        %v1614 = vld [vmem:[#allocation5 + $0x128] sm:$0xff]
        %v1615 = vld [vmem:[#allocation5 + $0x130] sm:$0xff]
        %v1616 = vld [vmem:[#allocation5 + $0x138] sm:$0xff]
        %v1617 = vld [vmem:[#allocation5 + $0x140] sm:$0xff]
        %v1618 = vld [vmem:[#allocation5 + $0x148] sm:$0xff]
        %v1619 = vld [vmem:[#allocation5 + $0x150] sm:$0xff]
        %v1620 = vld [vmem:[#allocation5 + $0x158] sm:$0xff]
        %v1621 = vld [vmem:[#allocation5 + $0x160] sm:$0xff]
        %v1622 = vld [vmem:[#allocation5 + $0x168] sm:$0xff]
        %v1623 = vld [vmem:[#allocation5 + $0x170] sm:$0xff]
        %v1624 = vld [vmem:[#allocation5 + $0x178] sm:$0xff]
        %v1625 = vld [vmem:[#allocation5 + $0x180] sm:$0xff]
        %v1626 = vld [vmem:[#allocation5 + $0x188] sm:$0xff]
        %v1627 = vld [vmem:[#allocation5 + $0x190] sm:$0xff]
        %v1628 = vld [vmem:[#allocation5 + $0x198] sm:$0xff]
        %v1629 = vld [vmem:[#allocation5 + $0x1a0] sm:$0xff]
        %v1630 = vld [vmem:[#allocation5 + $0x1a8] sm:$0xff]
        %v1631 = vld [vmem:[#allocation5 + $0x1b0] sm:$0xff]
        %v1632 = vld [vmem:[#allocation5 + $0x1b8] sm:$0xff]
        %v1633 = vld [vmem:[#allocation5 + $0x1c0] sm:$0xff]
        %v1634 = vld [vmem:[#allocation5 + $0x1c8] sm:$0xff]
        %v1635 = vld [vmem:[#allocation5 + $0x1d0] sm:$0xff]
        %v1636 = vld [vmem:[#allocation5 + $0x1d8] sm:$0xff]
        %v1637 = vld [vmem:[#allocation5 + $0x1e0] sm:$0xff]
        %v1638 = vld [vmem:[#allocation5 + $0x1e8] sm:$0xff]
        %v1639 = vld [vmem:[#allocation5 + $0x1f0] sm:$0xff]
        %v1640 = vld [vmem:[#allocation5 + $0x1f8] sm:$0xff]
        %v1641 = vld [vmem:[#allocation5 + $0x200] sm:$0xff]
        %v1642 = vld [vmem:[#allocation5 + $0x208] sm:$0xff]
        %v1643 = vld [vmem:[#allocation5 + $0x210] sm:$0xff]
        %v1644 = vld [vmem:[#allocation5 + $0x218] sm:$0xff]
        %v1645 = vld [vmem:[#allocation5 + $0x220] sm:$0xff]
        %v1646 = vld [vmem:[#allocation5 + $0x228] sm:$0xff]
        %v1647 = vld [vmem:[#allocation5 + $0x230] sm:$0xff]
        %v1648 = vld [vmem:[#allocation5 + $0x238] sm:$0xff]
        %v1649 = vld [vmem:[#allocation5 + $0x240] sm:$0xff]
        %v1650 = vld [vmem:[#allocation5 + $0x248] sm:$0xff]
        %v1651 = vld [vmem:[#allocation5 + $0x250] sm:$0xff]
        %v1652 = vld [vmem:[#allocation5 + $0x258] sm:$0xff]
        %v1653 = vld [vmem:[#allocation5 + $0x260] sm:$0xff]
        %v1654 = vld [vmem:[#allocation5 + $0x268] sm:$0xff]
        %v1655 = vld [vmem:[#allocation5 + $0x270] sm:$0xff]
        %v1656 = vld [vmem:[#allocation5 + $0x278] sm:$0xff]
        %v1657 = vld [vmem:[#allocation5 + $0x280] sm:$0xff]
        %v1658 = vld [vmem:[#allocation5 + $0x288] sm:$0xff]
        %v1659 = vld [vmem:[#allocation5 + $0x290] sm:$0xff]
        %v1660 = vld [vmem:[#allocation5 + $0x298] sm:$0xff]
        %v1661 = vld [vmem:[#allocation5 + $0x2a0] sm:$0xff]
        %v1662 = vld [vmem:[#allocation5 + $0x2a8] sm:$0xff]
        %v1663 = vld [vmem:[#allocation5 + $0x2b0] sm:$0xff]
        %v1664 = vld [vmem:[#allocation5 + $0x2b8] sm:$0xff]
        %v1665 = vld [vmem:[#allocation5 + $0x2c0] sm:$0xff]
        %v1666 = vld [vmem:[#allocation5 + $0x2c8] sm:$0xff]
        %v1667 = vld [vmem:[#allocation5 + $0x2d0] sm:$0xff]
        %v1668 = vld [vmem:[#allocation5 + $0x2d8] sm:$0xff]
        %v1669 = vld [vmem:[#allocation5 + $0x2e0] sm:$0xff]
        %v1670 = vld [vmem:[#allocation5 + $0x2e8] sm:$0xff]
        %v1671 = vld [vmem:[#allocation5 + $0x2f0] sm:$0xff]
        %v1672 = vld [vmem:[#allocation5 + $0x2f8] sm:$0xff]
        %v1673 = vld [vmem:[#allocation5 + $0x300] sm:$0xff]
        %v1674 = vld [vmem:[#allocation5 + $0x308] sm:$0xff]
        %v1675 = vld [vmem:[#allocation5 + $0x310] sm:$0xff]
        %v1676 = vld [vmem:[#allocation5 + $0x318] sm:$0xff]
        %v1677 = vld [vmem:[#allocation5 + $0x320] sm:$0xff]
        %v1678 = vld [vmem:[#allocation5 + $0x328] sm:$0xff]
        %v1679 = vld [vmem:[#allocation5 + $0x330] sm:$0xff]
        %v1680 = vld [vmem:[#allocation5 + $0x338] sm:$0xff]
        %v1681 = vld [vmem:[#allocation5 + $0x340] sm:$0xff]
        %v1682 = vld [vmem:[#allocation5 + $0x348] sm:$0xff]
        %v1683 = vld [vmem:[#allocation5 + $0x350] sm:$0xff]
        %v1684 = vld [vmem:[#allocation5 + $0x358] sm:$0xff]
        %v1685 = vld [vmem:[#allocation5 + $0x360] sm:$0xff]
        %v1686 = vld [vmem:[#allocation5 + $0x368] sm:$0xff]
        %v1687 = vld [vmem:[#allocation5 + $0x370] sm:$0xff]
        %v1688 = vld [vmem:[#allocation5 + $0x378] sm:$0xff]
        %v1689 = vld [vmem:[#allocation5 + $0x380] sm:$0xff]
        %v1690 = vld [vmem:[#allocation5 + $0x388] sm:$0xff]
        %v1691 = vld [vmem:[#allocation5 + $0x390] sm:$0xff]
        %v1692 = vld [vmem:[#allocation5 + $0x398] sm:$0xff]
        %v1693 = vld [vmem:[#allocation5 + $0x3a0] sm:$0xff]
        %v1694 = vld [vmem:[#allocation5 + $0x3a8] sm:$0xff]
        %v1695 = vld [vmem:[#allocation5 + $0x3b0] sm:$0xff]
        %v1696 = vld [vmem:[#allocation5 + $0x3b8] sm:$0xff]
        %v1697 = vld [vmem:[#allocation5 + $0x3c0] sm:$0xff]
        %v1698 = vld [vmem:[#allocation5 + $0x3c8] sm:$0xff]
        %v1699 = vld [vmem:[#allocation5 + $0x3d0] sm:$0xff]
        %v1700 = vld [vmem:[#allocation5 + $0x3d8] sm:$0xff]
        %v1701 = vld [vmem:[#allocation5 + $0x3e0] sm:$0xff]
        %v1702 = vld [vmem:[#allocation5 + $0x3e8] sm:$0xff]
        %v1703 = vld [vmem:[#allocation5 + $0x3f0] sm:$0xff]
        %v1704 = vld [vmem:[#allocation5 + $0x3f8] sm:$0xff]
        %1705 = vmatprep.subr.mxu0 %v1578
        %1706 = vmatpush1.msra.mxu0 %v1577
        %1707 = vmatprep.subr.mxu0 %v1582
        %1708 = vmatpush1.msra.mxu0 %v1581
        %1709 = vmatprep.subr.mxu0 %v1586
        %1710 = vmatpush1.msra.mxu0 %v1585
        %1711 = vmatprep.subr.mxu0 %v1590
        %1712 = vmatpush1.msra.mxu0 %v1589
        %1713 = vmatprep.subr.mxu0 %v1594
        %1714 = vmatpush1.msra.mxu0 %v1593
        %1715 = vmatprep.subr.mxu0 %v1598
        %1716 = vmatpush1.msra.mxu0 %v1597
        %1717 = vmatprep.subr.mxu0 %v1602
        %1718 = vmatpush1.msra.mxu0 %v1601
        %1719 = vmatprep.subr.mxu0 %v1606
        %1720 = vmatpush1.msra.mxu0 %v1605
        %1721 = vmatprep.subr.mxu0 %v1610
        %1722 = vmatpush1.msra.mxu0 %v1609
        %1723 = vmatprep.subr.mxu0 %v1614
        %1724 = vmatpush1.msra.mxu0 %v1613
        %1725 = vmatprep.subr.mxu0 %v1618
        %1726 = vmatpush1.msra.mxu0 %v1617
        %1727 = vmatprep.subr.mxu0 %v1622
        %1728 = vmatpush1.msra.mxu0 %v1621
        %1729 = vmatprep.subr.mxu0 %v1626
        %1730 = vmatpush1.msra.mxu0 %v1625
        %1731 = vmatprep.subr.mxu0 %v1630
        %1732 = vmatpush1.msra.mxu0 %v1629
        %1733 = vmatprep.subr.mxu0 %v1634
        %1734 = vmatpush1.msra.mxu0 %v1633
        %1735 = vmatprep.subr.mxu0 %v1638
        %1736 = vmatpush1.msra.mxu0 %v1637
        %1737 = vmatprep.subr.mxu0 %v1642
        %1738 = vmatpush1.msra.mxu0 %v1641
        %1739 = vmatprep.subr.mxu0 %v1646
        %1740 = vmatpush1.msra.mxu0 %v1645
        %1741 = vmatprep.subr.mxu0 %v1650
        %1742 = vmatpush1.msra.mxu0 %v1649
        %1743 = vmatprep.subr.mxu0 %v1654
        %1744 = vmatpush1.msra.mxu0 %v1653
        %1745 = vmatprep.subr.mxu0 %v1658
        %1746 = vmatpush1.msra.mxu0 %v1657
        %1747 = vmatprep.subr.mxu0 %v1662
        %1748 = vmatpush1.msra.mxu0 %v1661
        %1749 = vmatprep.subr.mxu0 %v1666
        %1750 = vmatpush1.msra.mxu0 %v1665
        %1751 = vmatprep.subr.mxu0 %v1670
        %1752 = vmatpush1.msra.mxu0 %v1669
        %1753 = vmatprep.subr.mxu0 %v1674
        %1754 = vmatpush1.msra.mxu0 %v1673
        %1755 = vmatprep.subr.mxu0 %v1678
        %1756 = vmatpush1.msra.mxu0 %v1677
        %1757 = vmatprep.subr.mxu0 %v1682
        %1758 = vmatpush1.msra.mxu0 %v1681
        %1759 = vmatprep.subr.mxu0 %v1686
        %1760 = vmatpush1.msra.mxu0 %v1685
        %1761 = vmatprep.subr.mxu0 %v1690
        %1762 = vmatpush1.msra.mxu0 %v1689
        %1763 = vmatprep.subr.mxu0 %v1694
        %1764 = vmatpush1.msra.mxu0 %v1693
        %1765 = vmatprep.subr.mxu0 %v1698
        %1766 = vmatpush1.msra.mxu0 %v1697
        %1767 = vmatprep.subr.mxu0 %v1702
        %1768 = vmatpush1.msra.mxu0 %v1701
        %1769 = vmatprep.mubr.f32.mxu0 %v914
        %1770 = vmatmul.mubr.f32.gmra.mrb[0].mxu0 %v912
        %v1771 = vpop.f32.mrb[0].mxu0
        %v1772 = vadd.f32 0.0, %v1771
        %v1773 = vpop.f32.mrb[0].mxu0
        %v1774 = vadd.f32 0.0, %v1773
        %1775 = vmatprep.mubr.f32.mxu0 %v920
        %1776 = vmatmul.mubr.f32.gmra.mrb[0].mxu0 %v918
        %v1777 = vpop.f32.mrb[0].mxu0
        %v1778 = vadd.f32 0.0, %v1777
        %v1779 = vpop.f32.mrb[0].mxu0
        %v1780 = vadd.f32 0.0, %v1779
        %1781 = vmatprep.mubr.f32.mxu0 %v926
        %1782 = vmatmul.mubr.f32.gmra.mrb[0].mxu0 %v924
        %v1783 = vpop.f32.mrb[0].mxu0
        %v1784 = vadd.f32 0.0, %v1783
        %v1785 = vpop.f32.mrb[0].mxu0
        %v1786 = vadd.f32 0.0, %v1785
        %1787 = vmatprep.mubr.f32.mxu0 %v932
        %1788 = vmatmul.mubr.f32.gmra.mrb[0].mxu0 %v930
        %v1789 = vpop.f32.mrb[0].mxu0
        %v1790 = vadd.f32 0.0, %v1789
        %v1791 = vpop.f32.mrb[0].mxu0
        %v1792 = vadd.f32 0.0, %v1791
        %1793 = vmatprep.mubr.f32.mxu0 %v938
        %1794 = vmatmul.mubr.f32.gmra.mrb[0].mxu0 %v936
        %v1795 = vpop.f32.mrb[0].mxu0
        %v1796 = vadd.f32 0.0, %v1795
        %v1797 = vpop.f32.mrb[0].mxu0
        %v1798 = vadd.f32 0.0, %v1797
        %1799 = vmatprep.mubr.f32.mxu0 %v944
        %1800 = vmatmul.mubr.f32.gmra.mrb[0].mxu0 %v942
        %v1801 = vpop.f32.mrb[0].mxu0
        %v1802 = vadd.f32 0.0, %v1801
        %v1803 = vpop.f32.mrb[0].mxu0
        %v1804 = vadd.f32 0.0, %v1803
        %1805 = vmatprep.mubr.f32.mxu0 %v950
        %1806 = vmatmul.mubr.f32.gmra.mrb[0].mxu0 %v948
        %v1807 = vpop.f32.mrb[0].mxu0
        %v1808 = vadd.f32 0.0, %v1807
        %v1809 = vpop.f32.mrb[0].mxu0
        %v1810 = vadd.f32 0.0, %v1809
        %1811 = vmatprep.mubr.f32.mxu0 %v956
        %1812 = vmatmul.mubr.f32.gmra.mrb[0].mxu0 %v954
        %v1813 = vpop.f32.mrb[0].mxu0
        %v1814 = vadd.f32 0.0, %v1813
        %v1815 = vpop.f32.mrb[0].mxu0
        %v1816 = vadd.f32 0.0, %v1815
        %1817 = vmatprep.mubr.f32.mxu0 %v962
        %1818 = vmatmul.mubr.f32.gmra.mrb[0].mxu0 %v960
        %v1819 = vpop.f32.mrb[0].mxu0
        %v1820 = vadd.f32 0.0, %v1819
        %v1821 = vpop.f32.mrb[0].mxu0
        %v1822 = vadd.f32 0.0, %v1821
        %1823 = vmatprep.mubr.f32.mxu0 %v968
        %1824 = vmatmul.mubr.f32.gmra.mrb[0].mxu0 %v966
        %v1825 = vpop.f32.mrb[0].mxu0
        %v1826 = vadd.f32 0.0, %v1825
        %v1827 = vpop.f32.mrb[0].mxu0
        %v1828 = vadd.f32 0.0, %v1827
        %1829 = vmatprep.mubr.f32.mxu0 %v974
        %1830 = vmatmul.mubr.f32.gmra.mrb[0].mxu0 %v972
        %v1831 = vpop.f32.mrb[0].mxu0
        %v1832 = vadd.f32 0.0, %v1831
        %v1833 = vpop.f32.mrb[0].mxu0
        %v1834 = vadd.f32 0.0, %v1833
        %1835 = vmatprep.mubr.f32.mxu0 %v980
        %1836 = vmatmul.mubr.f32.gmra.mrb[0].mxu0 %v978
        %v1837 = vpop.f32.mrb[0].mxu0
        %v1838 = vadd.f32 0.0, %v1837
        %v1839 = vpop.f32.mrb[0].mxu0
        %v1840 = vadd.f32 0.0, %v1839
        %1841 = vmatprep.mubr.f32.mxu0 %v986
        %1842 = vmatmul.mubr.f32.gmra.mrb[0].mxu0 %v984
        %v1843 = vpop.f32.mrb[0].mxu0
        %v1844 = vadd.f32 0.0, %v1843
        %v1845 = vpop.f32.mrb[0].mxu0
        %v1846 = vadd.f32 0.0, %v1845
        %1847 = vmatprep.mubr.f32.mxu0 %v992
        %1848 = vmatmul.mubr.f32.gmra.mrb[0].mxu0 %v990
        %v1849 = vpop.f32.mrb[0].mxu0
        %v1850 = vadd.f32 0.0, %v1849
        %v1851 = vpop.f32.mrb[0].mxu0
        %v1852 = vadd.f32 0.0, %v1851
        %1853 = vmatprep.mubr.f32.mxu0 %v998
        %1854 = vmatmul.mubr.f32.gmra.mrb[0].mxu0 %v996
        %v1855 = vpop.f32.mrb[0].mxu0
        %v1856 = vadd.f32 0.0, %v1855
        %v1857 = vpop.f32.mrb[0].mxu0
        %v1858 = vadd.f32 0.0, %v1857
        %1859 = vmatprep.mubr.f32.mxu0 %v1004
        %1860 = vmatmul.mubr.f32.gmra.mrb[0].mxu0 %v1002
        %v1861 = vpop.f32.mrb[0].mxu0
        %v1862 = vadd.f32 0.0, %v1861
        %v1863 = vpop.f32.mrb[0].mxu0
        %v1864 = vadd.f32 0.0, %v1863
        %1865 = vmatprep.mubr.f32.mxu0 %v1010
        %1866 = vmatmul.mubr.f32.gmra.mrb[0].mxu0 %v1008
        %v1867 = vpop.f32.mrb[0].mxu0
        %v1868 = vadd.f32 0.0, %v1867
        %v1869 = vpop.f32.mrb[0].mxu0
        %v1870 = vadd.f32 0.0, %v1869
        %1871 = vmatprep.mubr.f32.mxu0 %v1016
        %1872 = vmatmul.mubr.f32.gmra.mrb[0].mxu0 %v1014
        %v1873 = vpop.f32.mrb[0].mxu0
        %v1874 = vadd.f32 0.0, %v1873
        %v1875 = vpop.f32.mrb[0].mxu0
        %v1876 = vadd.f32 0.0, %v1875
        %1877 = vmatprep.mubr.f32.mxu0 %v1022
        %1878 = vmatmul.mubr.f32.gmra.mrb[0].mxu0 %v1020
        %v1879 = vpop.f32.mrb[0].mxu0
        %v1880 = vadd.f32 0.0, %v1879
        %v1881 = vpop.f32.mrb[0].mxu0
        %v1882 = vadd.f32 0.0, %v1881
        %1883 = vmatprep.mubr.f32.mxu0 %v1028
        %1884 = vmatmul.mubr.f32.gmra.mrb[0].mxu0 %v1026
        %v1885 = vpop.f32.mrb[0].mxu0
        %v1886 = vadd.f32 0.0, %v1885
        %v1887 = vpop.f32.mrb[0].mxu0
        %v1888 = vadd.f32 0.0, %v1887
        %1889 = vmatprep.mubr.f32.mxu0 %v1034
        %1890 = vmatmul.mubr.f32.gmra.mrb[0].mxu0 %v1032
        %v1891 = vpop.f32.mrb[0].mxu0
        %v1892 = vadd.f32 0.0, %v1891
        %v1893 = vpop.f32.mrb[0].mxu0
        %v1894 = vadd.f32 0.0, %v1893
        %1895 = vmatprep.mubr.f32.mxu0 %v1040
        %1896 = vmatmul.mubr.f32.gmra.mrb[0].mxu0 %v1038
        %v1897 = vpop.f32.mrb[0].mxu0
        %v1898 = vadd.f32 0.0, %v1897
        %v1899 = vpop.f32.mrb[0].mxu0
        %v1900 = vadd.f32 0.0, %v1899
        %1901 = vmatprep.mubr.f32.mxu0 %v1046
        %1902 = vmatmul.mubr.f32.gmra.mrb[0].mxu0 %v1044
        %v1903 = vpop.f32.mrb[0].mxu0
        %v1904 = vadd.f32 0.0, %v1903
        %v1905 = vpop.f32.mrb[0].mxu0
        %v1906 = vadd.f32 0.0, %v1905
        %1907 = vmatprep.mubr.f32.mxu0 %v1052
        %1908 = vmatmul.mubr.f32.gmra.mrb[0].mxu0 %v1050
        %v1909 = vpop.f32.mrb[0].mxu0
        %v1910 = vadd.f32 0.0, %v1909
        %v1911 = vpop.f32.mrb[0].mxu0
        %v1912 = vadd.f32 0.0, %v1911
        %1913 = vmatprep.mubr.f32.mxu0 %v1058
        %1914 = vmatmul.mubr.f32.gmra.mrb[0].mxu0 %v1056
        %v1915 = vpop.f32.mrb[0].mxu0
        %v1916 = vadd.f32 0.0, %v1915
        %v1917 = vpop.f32.mrb[0].mxu0
        %v1918 = vadd.f32 0.0, %v1917
        %1919 = vmatprep.mubr.f32.mxu0 %v1064
        %1920 = vmatmul.mubr.f32.gmra.mrb[0].mxu0 %v1062
        %v1921 = vpop.f32.mrb[0].mxu0
        %v1922 = vadd.f32 0.0, %v1921
        %v1923 = vpop.f32.mrb[0].mxu0
        %v1924 = vadd.f32 0.0, %v1923
        %1925 = vmatprep.mubr.f32.mxu0 %v1070
        %1926 = vmatmul.mubr.f32.gmra.mrb[0].mxu0 %v1068
        %v1927 = vpop.f32.mrb[0].mxu0
        %v1928 = vadd.f32 0.0, %v1927
        %v1929 = vpop.f32.mrb[0].mxu0
        %v1930 = vadd.f32 0.0, %v1929
        %1931 = vmatprep.mubr.f32.mxu0 %v1076
        %1932 = vmatmul.mubr.f32.gmra.mrb[0].mxu0 %v1074
        %v1933 = vpop.f32.mrb[0].mxu0
        %v1934 = vadd.f32 0.0, %v1933
        %v1935 = vpop.f32.mrb[0].mxu0
        %v1936 = vadd.f32 0.0, %v1935
        %1937 = vmatprep.mubr.f32.mxu0 %v1082
        %1938 = vmatmul.mubr.f32.gmra.mrb[0].mxu0 %v1080
        %v1939 = vpop.f32.mrb[0].mxu0
        %v1940 = vadd.f32 0.0, %v1939
        %v1941 = vpop.f32.mrb[0].mxu0
        %v1942 = vadd.f32 0.0, %v1941
        %1943 = vmatprep.mubr.f32.mxu0 %v1088
        %1944 = vmatmul.mubr.f32.gmra.mrb[0].mxu0 %v1086
        %v1945 = vpop.f32.mrb[0].mxu0
        %v1946 = vadd.f32 0.0, %v1945
        %v1947 = vpop.f32.mrb[0].mxu0
        %v1948 = vadd.f32 0.0, %v1947
        %1949 = vmatprep.mubr.f32.mxu0 %v1094
        %1950 = vmatmul.mubr.f32.gmra.mrb[0].mxu0 %v1092
        %v1951 = vpop.f32.mrb[0].mxu0
        %v1952 = vadd.f32 0.0, %v1951
        %v1953 = vpop.f32.mrb[0].mxu0
        %v1954 = vadd.f32 0.0, %v1953
        %1955 = vmatprep.mubr.f32.mxu0 %v1100
        %1956 = vmatmul.mubr.f32.gmra.mrb[0].mxu0 %v1098
        %v1957 = vpop.f32.mrb[0].mxu0
        %v1958 = vadd.f32 0.0, %v1957
        %v1959 = vpop.f32.mrb[0].mxu0
        %v1960 = vadd.f32 0.0, %v1959
        %1961 = vdwg.mxu0
        %1962 = vmatprep.subr.mxu0 %v1580
        %1963 = vmatpush1.msra.mxu0 %v1579
        %1964 = vmatprep.subr.mxu0 %v1584
        %1965 = vmatpush1.msra.mxu0 %v1583
        %1966 = vmatprep.subr.mxu0 %v1588
        %1967 = vmatpush1.msra.mxu0 %v1587
        %1968 = vmatprep.subr.mxu0 %v1592
        %1969 = vmatpush1.msra.mxu0 %v1591
        %1970 = vmatprep.subr.mxu0 %v1596
        %1971 = vmatpush1.msra.mxu0 %v1595
        %1972 = vmatprep.subr.mxu0 %v1600
        %1973 = vmatpush1.msra.mxu0 %v1599
        %1974 = vmatprep.subr.mxu0 %v1604
        %1975 = vmatpush1.msra.mxu0 %v1603
        %1976 = vmatprep.subr.mxu0 %v1608
        %1977 = vmatpush1.msra.mxu0 %v1607
        %1978 = vmatprep.subr.mxu0 %v1612
        %1979 = vmatpush1.msra.mxu0 %v1611
        %1980 = vmatprep.subr.mxu0 %v1616
        %1981 = vmatpush1.msra.mxu0 %v1615
        %1982 = vmatprep.subr.mxu0 %v1620
        %1983 = vmatpush1.msra.mxu0 %v1619
        %1984 = vmatprep.subr.mxu0 %v1624
        %1985 = vmatpush1.msra.mxu0 %v1623
        %1986 = vmatprep.subr.mxu0 %v1628
        %1987 = vmatpush1.msra.mxu0 %v1627
        %1988 = vmatprep.subr.mxu0 %v1632
        %1989 = vmatpush1.msra.mxu0 %v1631
        %1990 = vmatprep.subr.mxu0 %v1636
        %1991 = vmatpush1.msra.mxu0 %v1635
        %1992 = vmatprep.subr.mxu0 %v1640
        %1993 = vmatpush1.msra.mxu0 %v1639
        %1994 = vmatprep.subr.mxu0 %v1644
        %1995 = vmatpush1.msra.mxu0 %v1643
        %1996 = vmatprep.subr.mxu0 %v1648
        %1997 = vmatpush1.msra.mxu0 %v1647
        %1998 = vmatprep.subr.mxu0 %v1652
        %1999 = vmatpush1.msra.mxu0 %v1651
        %2000 = vmatprep.subr.mxu0 %v1656
        %2001 = vmatpush1.msra.mxu0 %v1655
        %2002 = vmatprep.subr.mxu0 %v1660
        %2003 = vmatpush1.msra.mxu0 %v1659
        %2004 = vmatprep.subr.mxu0 %v1664
        %2005 = vmatpush1.msra.mxu0 %v1663
        %2006 = vmatprep.subr.mxu0 %v1668
        %2007 = vmatpush1.msra.mxu0 %v1667
        %2008 = vmatprep.subr.mxu0 %v1672
        %2009 = vmatpush1.msra.mxu0 %v1671
        %2010 = vmatprep.subr.mxu0 %v1676
        %2011 = vmatpush1.msra.mxu0 %v1675
        %2012 = vmatprep.subr.mxu0 %v1680
        %2013 = vmatpush1.msra.mxu0 %v1679
        %2014 = vmatprep.subr.mxu0 %v1684
        %2015 = vmatpush1.msra.mxu0 %v1683
        %2016 = vmatprep.subr.mxu0 %v1688
        %2017 = vmatpush1.msra.mxu0 %v1687
        %2018 = vmatprep.subr.mxu0 %v1692
        %2019 = vmatpush1.msra.mxu0 %v1691
        %2020 = vmatprep.subr.mxu0 %v1696
        %2021 = vmatpush1.msra.mxu0 %v1695
        %2022 = vmatprep.subr.mxu0 %v1700
        %2023 = vmatpush1.msra.mxu0 %v1699
        %2024 = vmatprep.subr.mxu0 %v1704
        %2025 = vmatpush1.msra.mxu0 %v1703
        %2026 = vmatprep.mubr.f32.mxu0 %v914
        %2027 = vmatmul.mubr.f32.gmra.mrb[0].mxu0 %v912
        %v2028 = vpop.f32.mrb[0].mxu0
        %v2029 = vadd.f32 0.0, %v2028
        %v2030 = vpop.f32.mrb[0].mxu0
        %v2031 = vadd.f32 0.0, %v2030
        %2032 = vmatprep.mubr.f32.mxu0 %v920
        %2033 = vmatmul.mubr.f32.gmra.mrb[0].mxu0 %v918
        %v2034 = vpop.f32.mrb[0].mxu0
        %v2035 = vadd.f32 0.0, %v2034
        %v2036 = vpop.f32.mrb[0].mxu0
        %v2037 = vadd.f32 0.0, %v2036
        %2038 = vmatprep.mubr.f32.mxu0 %v926
        %2039 = vmatmul.mubr.f32.gmra.mrb[0].mxu0 %v924
        %v2040 = vpop.f32.mrb[0].mxu0
        %v2041 = vadd.f32 0.0, %v2040
        %v2042 = vpop.f32.mrb[0].mxu0
        %v2043 = vadd.f32 0.0, %v2042
        %2044 = vmatprep.mubr.f32.mxu0 %v932
        %2045 = vmatmul.mubr.f32.gmra.mrb[0].mxu0 %v930
        %v2046 = vpop.f32.mrb[0].mxu0
        %v2047 = vadd.f32 0.0, %v2046
        %v2048 = vpop.f32.mrb[0].mxu0
        %v2049 = vadd.f32 0.0, %v2048
        %2050 = vmatprep.mubr.f32.mxu0 %v938
        %2051 = vmatmul.mubr.f32.gmra.mrb[0].mxu0 %v936
        %v2052 = vpop.f32.mrb[0].mxu0
        %v2053 = vadd.f32 0.0, %v2052
        %v2054 = vpop.f32.mrb[0].mxu0
        %v2055 = vadd.f32 0.0, %v2054
        %2056 = vmatprep.mubr.f32.mxu0 %v944
        %2057 = vmatmul.mubr.f32.gmra.mrb[0].mxu0 %v942
        %v2058 = vpop.f32.mrb[0].mxu0
        %v2059 = vadd.f32 0.0, %v2058
        %v2060 = vpop.f32.mrb[0].mxu0
        %v2061 = vadd.f32 0.0, %v2060
        %2062 = vmatprep.mubr.f32.mxu0 %v950
        %2063 = vmatmul.mubr.f32.gmra.mrb[0].mxu0 %v948
        %v2064 = vpop.f32.mrb[0].mxu0
        %v2065 = vadd.f32 0.0, %v2064
        %v2066 = vpop.f32.mrb[0].mxu0
        %v2067 = vadd.f32 0.0, %v2066
        %2068 = vmatprep.mubr.f32.mxu0 %v956
        %2069 = vmatmul.mubr.f32.gmra.mrb[0].mxu0 %v954
        %v2070 = vpop.f32.mrb[0].mxu0
        %v2071 = vadd.f32 0.0, %v2070
        %v2072 = vpop.f32.mrb[0].mxu0
        %v2073 = vadd.f32 0.0, %v2072
        %2074 = vmatprep.mubr.f32.mxu0 %v962
        %2075 = vmatmul.mubr.f32.gmra.mrb[0].mxu0 %v960
        %v2076 = vpop.f32.mrb[0].mxu0
        %v2077 = vadd.f32 0.0, %v2076
        %v2078 = vpop.f32.mrb[0].mxu0
        %v2079 = vadd.f32 0.0, %v2078
        %2080 = vmatprep.mubr.f32.mxu0 %v968
        %2081 = vmatmul.mubr.f32.gmra.mrb[0].mxu0 %v966
        %v2082 = vpop.f32.mrb[0].mxu0
        %v2083 = vadd.f32 0.0, %v2082
        %v2084 = vpop.f32.mrb[0].mxu0
        %v2085 = vadd.f32 0.0, %v2084
        %2086 = vmatprep.mubr.f32.mxu0 %v974
        %2087 = vmatmul.mubr.f32.gmra.mrb[0].mxu0 %v972
        %v2088 = vpop.f32.mrb[0].mxu0
        %v2089 = vadd.f32 0.0, %v2088
        %v2090 = vpop.f32.mrb[0].mxu0
        %v2091 = vadd.f32 0.0, %v2090
        %2092 = vmatprep.mubr.f32.mxu0 %v980
        %2093 = vmatmul.mubr.f32.gmra.mrb[0].mxu0 %v978
        %v2094 = vpop.f32.mrb[0].mxu0
        %v2095 = vadd.f32 0.0, %v2094
        %v2096 = vpop.f32.mrb[0].mxu0
        %v2097 = vadd.f32 0.0, %v2096
        %2098 = vmatprep.mubr.f32.mxu0 %v986
        %2099 = vmatmul.mubr.f32.gmra.mrb[0].mxu0 %v984
        %v2100 = vpop.f32.mrb[0].mxu0
        %v2101 = vadd.f32 0.0, %v2100
        %v2102 = vpop.f32.mrb[0].mxu0
        %v2103 = vadd.f32 0.0, %v2102
        %2104 = vmatprep.mubr.f32.mxu0 %v992
        %2105 = vmatmul.mubr.f32.gmra.mrb[0].mxu0 %v990
        %v2106 = vpop.f32.mrb[0].mxu0
        %v2107 = vadd.f32 0.0, %v2106
        %v2108 = vpop.f32.mrb[0].mxu0
        %v2109 = vadd.f32 0.0, %v2108
        %2110 = vmatprep.mubr.f32.mxu0 %v998
        %2111 = vmatmul.mubr.f32.gmra.mrb[0].mxu0 %v996
        %v2112 = vpop.f32.mrb[0].mxu0
        %v2113 = vadd.f32 0.0, %v2112
        %v2114 = vpop.f32.mrb[0].mxu0
        %v2115 = vadd.f32 0.0, %v2114
        %2116 = vmatprep.mubr.f32.mxu0 %v1004
        %2117 = vmatmul.mubr.f32.gmra.mrb[0].mxu0 %v1002
        %v2118 = vpop.f32.mrb[0].mxu0
        %v2119 = vadd.f32 0.0, %v2118
        %v2120 = vpop.f32.mrb[0].mxu0
        %v2121 = vadd.f32 0.0, %v2120
        %2122 = vmatprep.mubr.f32.mxu0 %v1010
        %2123 = vmatmul.mubr.f32.gmra.mrb[0].mxu0 %v1008
        %v2124 = vpop.f32.mrb[0].mxu0
        %v2125 = vadd.f32 0.0, %v2124
        %v2126 = vpop.f32.mrb[0].mxu0
        %v2127 = vadd.f32 0.0, %v2126
        %2128 = vmatprep.mubr.f32.mxu0 %v1016
        %2129 = vmatmul.mubr.f32.gmra.mrb[0].mxu0 %v1014
        %v2130 = vpop.f32.mrb[0].mxu0
        %v2131 = vadd.f32 0.0, %v2130
        %v2132 = vpop.f32.mrb[0].mxu0
        %v2133 = vadd.f32 0.0, %v2132
        %2134 = vmatprep.mubr.f32.mxu0 %v1022
        %2135 = vmatmul.mubr.f32.gmra.mrb[0].mxu0 %v1020
        %v2136 = vpop.f32.mrb[0].mxu0
        %v2137 = vadd.f32 0.0, %v2136
        %v2138 = vpop.f32.mrb[0].mxu0
        %v2139 = vadd.f32 0.0, %v2138
        %2140 = vmatprep.mubr.f32.mxu0 %v1028
        %2141 = vmatmul.mubr.f32.gmra.mrb[0].mxu0 %v1026
        %v2142 = vpop.f32.mrb[0].mxu0
        %v2143 = vadd.f32 0.0, %v2142
        %v2144 = vpop.f32.mrb[0].mxu0
        %v2145 = vadd.f32 0.0, %v2144
        %2146 = vmatprep.mubr.f32.mxu0 %v1034
        %2147 = vmatmul.mubr.f32.gmra.mrb[0].mxu0 %v1032
        %v2148 = vpop.f32.mrb[0].mxu0
        %v2149 = vadd.f32 0.0, %v2148
        %v2150 = vpop.f32.mrb[0].mxu0
        %v2151 = vadd.f32 0.0, %v2150
        %2152 = vmatprep.mubr.f32.mxu0 %v1040
        %2153 = vmatmul.mubr.f32.gmra.mrb[0].mxu0 %v1038
        %v2154 = vpop.f32.mrb[0].mxu0
        %v2155 = vadd.f32 0.0, %v2154
        %v2156 = vpop.f32.mrb[0].mxu0
        %v2157 = vadd.f32 0.0, %v2156
        %2158 = vmatprep.mubr.f32.mxu0 %v1046
        %2159 = vmatmul.mubr.f32.gmra.mrb[0].mxu0 %v1044
        %v2160 = vpop.f32.mrb[0].mxu0
        %v2161 = vadd.f32 0.0, %v2160
        %v2162 = vpop.f32.mrb[0].mxu0
        %v2163 = vadd.f32 0.0, %v2162
        %2164 = vmatprep.mubr.f32.mxu0 %v1052
        %2165 = vmatmul.mubr.f32.gmra.mrb[0].mxu0 %v1050
        %v2166 = vpop.f32.mrb[0].mxu0
        %v2167 = vadd.f32 0.0, %v2166
        %v2168 = vpop.f32.mrb[0].mxu0
        %v2169 = vadd.f32 0.0, %v2168
        %2170 = vmatprep.mubr.f32.mxu0 %v1058
        %2171 = vmatmul.mubr.f32.gmra.mrb[0].mxu0 %v1056
        %v2172 = vpop.f32.mrb[0].mxu0
        %v2173 = vadd.f32 0.0, %v2172
        %v2174 = vpop.f32.mrb[0].mxu0
        %v2175 = vadd.f32 0.0, %v2174
        %2176 = vmatprep.mubr.f32.mxu0 %v1064
        %2177 = vmatmul.mubr.f32.gmra.mrb[0].mxu0 %v1062
        %v2178 = vpop.f32.mrb[0].mxu0
        %v2179 = vadd.f32 0.0, %v2178
        %v2180 = vpop.f32.mrb[0].mxu0
        %v2181 = vadd.f32 0.0, %v2180
        %2182 = vmatprep.mubr.f32.mxu0 %v1070
        %2183 = vmatmul.mubr.f32.gmra.mrb[0].mxu0 %v1068
        %v2184 = vpop.f32.mrb[0].mxu0
        %v2185 = vadd.f32 0.0, %v2184
        %v2186 = vpop.f32.mrb[0].mxu0
        %v2187 = vadd.f32 0.0, %v2186
        %2188 = vmatprep.mubr.f32.mxu0 %v1076
        %2189 = vmatmul.mubr.f32.gmra.mrb[0].mxu0 %v1074
        %v2190 = vpop.f32.mrb[0].mxu0
        %v2191 = vadd.f32 0.0, %v2190
        %v2192 = vpop.f32.mrb[0].mxu0
        %v2193 = vadd.f32 0.0, %v2192
        %2194 = vmatprep.mubr.f32.mxu0 %v1082
        %2195 = vmatmul.mubr.f32.gmra.mrb[0].mxu0 %v1080
        %v2196 = vpop.f32.mrb[0].mxu0
        %v2197 = vadd.f32 0.0, %v2196
        %v2198 = vpop.f32.mrb[0].mxu0
        %v2199 = vadd.f32 0.0, %v2198
        %2200 = vmatprep.mubr.f32.mxu0 %v1088
        %2201 = vmatmul.mubr.f32.gmra.mrb[0].mxu0 %v1086
        %v2202 = vpop.f32.mrb[0].mxu0
        %v2203 = vadd.f32 0.0, %v2202
        %v2204 = vpop.f32.mrb[0].mxu0
        %v2205 = vadd.f32 0.0, %v2204
        %2206 = vmatprep.mubr.f32.mxu0 %v1094
        %2207 = vmatmul.mubr.f32.gmra.mrb[0].mxu0 %v1092
        %v2208 = vpop.f32.mrb[0].mxu0
        %v2209 = vadd.f32 0.0, %v2208
        %v2210 = vpop.f32.mrb[0].mxu0
        %v2211 = vadd.f32 0.0, %v2210
        %2212 = vmatprep.mubr.f32.mxu0 %v1100
        %2213 = vmatmul.mubr.f32.gmra.mrb[0].mxu0 %v1098
        %v2214 = vpop.f32.mrb[0].mxu0
        %v2215 = vadd.f32 0.0, %v2214
        %v2216 = vpop.f32.mrb[0].mxu0
        %v2217 = vadd.f32 0.0, %v2216
        %2218 = vdwg.mxu0
        %v2223 = vcombine.low %v1502, %v1504
        %v2224 = vcombine.high %v1502, %v1504
        %v2225 = vcombine.low %v1573, %v1575
        %v2226 = vcombine.high %v1573, %v1575
        %v2228 = vunpack.c.l.s4 1966171168
        %v2229 = vunpack.c.0.s8 %v2228
        %v2230 = vlaneseq
        %v2231 = vshrl.u32 %v2230, 7
        %v2232 = vsub.s32 %v2229, %v2231
        %v2233 = vrot.slane %v2223, %v2232
        %v2235 = vunpack.c.l.s4 1966171168
        %v2236 = vunpack.c.0.s8 %v2235
        %v2237 = vlaneseq
        %v2238 = vshrl.u32 %v2237, 7
        %v2239 = vsub.s32 %v2236, %v2238
        %v2240 = vrot.slane %v2224, %v2239
        %v2242 = vunpack.c.l.s4 1966171168
        %v2243 = vunpack.c.0.s8 %v2242
        %v2244 = vlaneseq
        %v2245 = vshrl.u32 %v2244, 7
        %v2246 = vsub.s32 %v2243, %v2245
        %v2247 = vrot.slane %v2225, %v2246
        %v2249 = vunpack.c.l.s4 1966171168
        %v2250 = vunpack.c.0.s8 %v2249
        %v2251 = vlaneseq
        %v2252 = vshrl.u32 %v2251, 7
        %v2253 = vsub.s32 %v2250, %v2252
        %v2254 = vrot.slane %v2226, %v2253
        %v2255 = vcombine.low %v2233, %v2247
        %v2256 = vcombine.high %v2233, %v2247
        %v2257 = vcombine.low %v2240, %v2254
        %v2258 = vcombine.high %v2240, %v2254
        %v2260 = vunpack.c.l.s4 1966171168
        %v2261 = vunpack.c.0.s8 %v2260
        %v2262 = vlaneseq
        %v2263 = vshrl.u32 %v2262, 7
        %v2264 = vsub.s32 %v2261, %v2263
        %v2265 = vrot.slane %v2255, %v2264
        %v2267 = vunpack.c.l.s4 1966171168
        %v2268 = vunpack.c.0.s8 %v2267
        %v2269 = vlaneseq
        %v2270 = vshrl.u32 %v2269, 7
        %v2271 = vsub.s32 %v2268, %v2270
        %v2272 = vrot.slane %v2257, %v2271
        %v2274 = vunpack.c.l.s4 1966171168
        %v2275 = vunpack.c.0.s8 %v2274
        %v2276 = vlaneseq
        %v2277 = vshrl.u32 %v2276, 7
        %v2278 = vsub.s32 %v2275, %v2277
        %v2279 = vrot.slane %v2256, %v2278
        %v2281 = vunpack.c.l.s4 1966171168
        %v2282 = vunpack.c.0.s8 %v2281
        %v2283 = vlaneseq
        %v2284 = vshrl.u32 %v2283, 7
        %v2285 = vsub.s32 %v2282, %v2284
        %v2286 = vrot.slane %v2258, %v2285
        %v2287 = vcombine.high %v2265, %v2265
        %v2288 = vcombine.high %v2272, %v2272
        %v2289 = vcombine.high %v2279, %v2279
        %v2290 = vcombine.high %v2286, %v2286
        %v2291 = vlaneseq
        %v2292 = vshrl.u32 %v2291, 7
        %v2293 = vsub.s32 0, %v2292
        %v2294 = vrot.slane %v2265, %v2293
        %v2295 = vlaneseq
        %v2296 = vshrl.u32 %v2295, 7
        %v2297 = vsub.s32 1, %v2296
        %v2298 = vrot.slane %v2265, %v2297
        %v2299 = vlaneseq
        %v2300 = vshrl.u32 %v2299, 7
        %v2301 = vsub.s32 2, %v2300
        %v2302 = vrot.slane %v2265, %v2301
        %v2303 = vlaneseq
        %v2304 = vshrl.u32 %v2303, 7
        %v2305 = vsub.s32 3, %v2304
        %v2306 = vrot.slane %v2265, %v2305
        %v2307 = vlaneseq
        %v2308 = vshrl.u32 %v2307, 7
        %v2309 = vsub.s32 0, %v2308
        %v2310 = vrot.slane %v2279, %v2309
        %v2311 = vlaneseq
        %v2312 = vshrl.u32 %v2311, 7
        %v2313 = vsub.s32 1, %v2312
        %v2314 = vrot.slane %v2279, %v2313
        %v2315 = vlaneseq
        %v2316 = vshrl.u32 %v2315, 7
        %v2317 = vsub.s32 2, %v2316
        %v2318 = vrot.slane %v2279, %v2317
        %v2319 = vlaneseq
        %v2320 = vshrl.u32 %v2319, 7
        %v2321 = vsub.s32 3, %v2320
        %v2322 = vrot.slane %v2279, %v2321
        %v2323 = vlaneseq
        %v2324 = vshrl.u32 %v2323, 7
        %v2325 = vsub.s32 0, %v2324
        %v2326 = vrot.slane %v2287, %v2325
        %v2327 = vlaneseq
        %v2328 = vshrl.u32 %v2327, 7
        %v2329 = vsub.s32 1, %v2328
        %v2330 = vrot.slane %v2287, %v2329
        %v2331 = vlaneseq
        %v2332 = vshrl.u32 %v2331, 7
        %v2333 = vsub.s32 2, %v2332
        %v2334 = vrot.slane %v2287, %v2333
        %v2335 = vlaneseq
        %v2336 = vshrl.u32 %v2335, 7
        %v2337 = vsub.s32 3, %v2336
        %v2338 = vrot.slane %v2287, %v2337
        %v2339 = vlaneseq
        %v2340 = vshrl.u32 %v2339, 7
        %v2341 = vsub.s32 0, %v2340
        %v2342 = vrot.slane %v2289, %v2341
        %v2343 = vlaneseq
        %v2344 = vshrl.u32 %v2343, 7
        %v2345 = vsub.s32 1, %v2344
        %v2346 = vrot.slane %v2289, %v2345
        %v2347 = vlaneseq
        %v2348 = vshrl.u32 %v2347, 7
        %v2349 = vsub.s32 2, %v2348
        %v2350 = vrot.slane %v2289, %v2349
        %v2351 = vlaneseq
        %v2352 = vshrl.u32 %v2351, 7
        %v2353 = vsub.s32 3, %v2352
        %v2354 = vrot.slane %v2289, %v2353
        %v2355 = vlaneseq
        %v2356 = vshrl.u32 %v2355, 7
        %v2357 = vsub.s32 0, %v2356
        %v2358 = vrot.slane %v2272, %v2357
        %v2359 = vlaneseq
        %v2360 = vshrl.u32 %v2359, 7
        %v2361 = vsub.s32 1, %v2360
        %v2362 = vrot.slane %v2272, %v2361
        %v2363 = vlaneseq
        %v2364 = vshrl.u32 %v2363, 7
        %v2365 = vsub.s32 2, %v2364
        %v2366 = vrot.slane %v2272, %v2365
        %v2367 = vlaneseq
        %v2368 = vshrl.u32 %v2367, 7
        %v2369 = vsub.s32 3, %v2368
        %v2370 = vrot.slane %v2272, %v2369
        %v2371 = vlaneseq
        %v2372 = vshrl.u32 %v2371, 7
        %v2373 = vsub.s32 0, %v2372
        %v2374 = vrot.slane %v2286, %v2373
        %v2375 = vlaneseq
        %v2376 = vshrl.u32 %v2375, 7
        %v2377 = vsub.s32 1, %v2376
        %v2378 = vrot.slane %v2286, %v2377
        %v2379 = vlaneseq
        %v2380 = vshrl.u32 %v2379, 7
        %v2381 = vsub.s32 2, %v2380
        %v2382 = vrot.slane %v2286, %v2381
        %v2383 = vlaneseq
        %v2384 = vshrl.u32 %v2383, 7
        %v2385 = vsub.s32 3, %v2384
        %v2386 = vrot.slane %v2286, %v2385
        %v2387 = vlaneseq
        %v2388 = vshrl.u32 %v2387, 7
        %v2389 = vsub.s32 0, %v2388
        %v2390 = vrot.slane %v2288, %v2389
        %v2391 = vlaneseq
        %v2392 = vshrl.u32 %v2391, 7
        %v2393 = vsub.s32 1, %v2392
        %v2394 = vrot.slane %v2288, %v2393
        %v2395 = vlaneseq
        %v2396 = vshrl.u32 %v2395, 7
        %v2397 = vsub.s32 2, %v2396
        %v2398 = vrot.slane %v2288, %v2397
        %v2399 = vlaneseq
        %v2400 = vshrl.u32 %v2399, 7
        %v2401 = vsub.s32 3, %v2400
        %v2402 = vrot.slane %v2288, %v2401
        %v2403 = vlaneseq
        %v2404 = vshrl.u32 %v2403, 7
        %v2405 = vsub.s32 0, %v2404
        %v2406 = vrot.slane %v2290, %v2405
        %v2407 = vlaneseq
        %v2408 = vshrl.u32 %v2407, 7
        %v2409 = vsub.s32 1, %v2408
        %v2410 = vrot.slane %v2290, %v2409
        %v2411 = vlaneseq
        %v2412 = vshrl.u32 %v2411, 7
        %v2413 = vsub.s32 2, %v2412
        %v2414 = vrot.slane %v2290, %v2413
        %v2415 = vlaneseq
        %v2416 = vshrl.u32 %v2415, 7
        %v2417 = vsub.s32 3, %v2416
        %v2418 = vrot.slane %v2290, %v2417
        %v2451 = vadd.f32 %v1772, %v2294
        %v2452 = vadd.f32 %v1774, %v2298
        %v2453 = vadd.f32 %v2029, %v2302
        %v2454 = vadd.f32 %v2031, %v2306
        %v2455 = vadd.f32 %v1778, %v2294
        %v2456 = vadd.f32 %v1780, %v2298
        %v2457 = vadd.f32 %v2035, %v2302
        %v2458 = vadd.f32 %v2037, %v2306
        %v2459 = vadd.f32 %v1784, %v2294
        %v2460 = vadd.f32 %v1786, %v2298
        %v2461 = vadd.f32 %v2041, %v2302
        %v2462 = vadd.f32 %v2043, %v2306
        %v2463 = vadd.f32 %v1790, %v2294
        %v2464 = vadd.f32 %v1792, %v2298
        %v2465 = vadd.f32 %v2047, %v2302
        %v2466 = vadd.f32 %v2049, %v2306
        %v2467 = vadd.f32 %v1796, %v2310
        %v2468 = vadd.f32 %v1798, %v2314
        %v2469 = vadd.f32 %v2053, %v2318
        %v2470 = vadd.f32 %v2055, %v2322
        %v2471 = vadd.f32 %v1802, %v2310
        %v2472 = vadd.f32 %v1804, %v2314
        %v2473 = vadd.f32 %v2059, %v2318
        %v2474 = vadd.f32 %v2061, %v2322
        %v2475 = vadd.f32 %v1808, %v2310
        %v2476 = vadd.f32 %v1810, %v2314
        %v2477 = vadd.f32 %v2065, %v2318
        %v2478 = vadd.f32 %v2067, %v2322
        %v2479 = vadd.f32 %v1814, %v2310
        %v2480 = vadd.f32 %v1816, %v2314
        %v2481 = vadd.f32 %v2071, %v2318
        %v2482 = vadd.f32 %v2073, %v2322
        %v2483 = vadd.f32 %v1820, %v2326
        %v2484 = vadd.f32 %v1822, %v2330
        %v2485 = vadd.f32 %v2077, %v2334
        %v2486 = vadd.f32 %v2079, %v2338
        %v2487 = vadd.f32 %v1826, %v2326
        %v2488 = vadd.f32 %v1828, %v2330
        %v2489 = vadd.f32 %v2083, %v2334
        %v2490 = vadd.f32 %v2085, %v2338
        %v2491 = vadd.f32 %v1832, %v2326
        %v2492 = vadd.f32 %v1834, %v2330
        %v2493 = vadd.f32 %v2089, %v2334
        %v2494 = vadd.f32 %v2091, %v2338
        %v2495 = vadd.f32 %v1838, %v2326
        %v2496 = vadd.f32 %v1840, %v2330
        %v2497 = vadd.f32 %v2095, %v2334
        %v2498 = vadd.f32 %v2097, %v2338
        %v2499 = vadd.f32 %v1844, %v2342
        %v2500 = vadd.f32 %v1846, %v2346
        %v2501 = vadd.f32 %v2101, %v2350
        %v2502 = vadd.f32 %v2103, %v2354
        %v2503 = vadd.f32 %v1850, %v2342
        %v2504 = vadd.f32 %v1852, %v2346
        %v2505 = vadd.f32 %v2107, %v2350
        %v2506 = vadd.f32 %v2109, %v2354
        %v2507 = vadd.f32 %v1856, %v2342
        %v2508 = vadd.f32 %v1858, %v2346
        %v2509 = vadd.f32 %v2113, %v2350
        %v2510 = vadd.f32 %v2115, %v2354
        %v2511 = vadd.f32 %v1862, %v2342
        %v2512 = vadd.f32 %v1864, %v2346
        %v2513 = vadd.f32 %v2119, %v2350
        %v2514 = vadd.f32 %v2121, %v2354
        %v2515 = vadd.f32 %v1868, %v2358
        %v2516 = vadd.f32 %v1870, %v2362
        %v2517 = vadd.f32 %v2125, %v2366
        %v2518 = vadd.f32 %v2127, %v2370
        %v2519 = vadd.f32 %v1874, %v2358
        %v2520 = vadd.f32 %v1876, %v2362
        %v2521 = vadd.f32 %v2131, %v2366
        %v2522 = vadd.f32 %v2133, %v2370
        %v2523 = vadd.f32 %v1880, %v2358
        %v2524 = vadd.f32 %v1882, %v2362
        %v2525 = vadd.f32 %v2137, %v2366
        %v2526 = vadd.f32 %v2139, %v2370
        %v2527 = vadd.f32 %v1886, %v2358
        %v2528 = vadd.f32 %v1888, %v2362
        %v2529 = vadd.f32 %v2143, %v2366
        %v2530 = vadd.f32 %v2145, %v2370
        %v2531 = vadd.f32 %v1892, %v2374
        %v2532 = vadd.f32 %v1894, %v2378
        %v2533 = vadd.f32 %v2149, %v2382
        %v2534 = vadd.f32 %v2151, %v2386
        %v2535 = vadd.f32 %v1898, %v2374
        %v2536 = vadd.f32 %v1900, %v2378
        %v2537 = vadd.f32 %v2155, %v2382
        %v2538 = vadd.f32 %v2157, %v2386
        %v2539 = vadd.f32 %v1904, %v2374
        %v2540 = vadd.f32 %v1906, %v2378
        %v2541 = vadd.f32 %v2161, %v2382
        %v2542 = vadd.f32 %v2163, %v2386
        %v2543 = vadd.f32 %v1910, %v2374
        %v2544 = vadd.f32 %v1912, %v2378
        %v2545 = vadd.f32 %v2167, %v2382
        %v2546 = vadd.f32 %v2169, %v2386
        %v2547 = vadd.f32 %v1916, %v2390
        %v2548 = vadd.f32 %v1918, %v2394
        %v2549 = vadd.f32 %v2173, %v2398
        %v2550 = vadd.f32 %v2175, %v2402
        %v2551 = vadd.f32 %v1922, %v2390
        %v2552 = vadd.f32 %v1924, %v2394
        %v2553 = vadd.f32 %v2179, %v2398
        %v2554 = vadd.f32 %v2181, %v2402
        %v2555 = vadd.f32 %v1928, %v2390
        %v2556 = vadd.f32 %v1930, %v2394
        %v2557 = vadd.f32 %v2185, %v2398
        %v2558 = vadd.f32 %v2187, %v2402
        %v2559 = vadd.f32 %v1934, %v2390
        %v2560 = vadd.f32 %v1936, %v2394
        %v2561 = vadd.f32 %v2191, %v2398
        %v2562 = vadd.f32 %v2193, %v2402
        %v2563 = vadd.f32 %v1940, %v2406
        %v2564 = vadd.f32 %v1942, %v2410
        %v2565 = vadd.f32 %v2197, %v2414
        %v2566 = vadd.f32 %v2199, %v2418
        %v2567 = vadd.f32 %v1946, %v2406
        %v2568 = vadd.f32 %v1948, %v2410
        %v2569 = vadd.f32 %v2203, %v2414
        %v2570 = vadd.f32 %v2205, %v2418
        %v2571 = vadd.f32 %v1952, %v2406
        %v2572 = vadd.f32 %v1954, %v2410
        %v2573 = vadd.f32 %v2209, %v2414
        %v2574 = vadd.f32 %v2211, %v2418
        %v2575 = vadd.f32 %v1958, %v2406
        %v2576 = vadd.f32 %v1960, %v2410
        %v2577 = vadd.f32 %v2215, %v2414
        %v2578 = vadd.f32 %v2217, %v2418
        %v2579 = vmax.f32 %v2451, 0.0
        %v2580 = vmax.f32 %v2452, 0.0
        %v2581 = vmax.f32 %v2453, 0.0
        %v2582 = vmax.f32 %v2454, 0.0
        %v2583 = vmax.f32 %v2455, 0.0
        %v2584 = vmax.f32 %v2456, 0.0
        %v2585 = vmax.f32 %v2457, 0.0
        %v2586 = vmax.f32 %v2458, 0.0
        %v2587 = vmax.f32 %v2459, 0.0
        %v2588 = vmax.f32 %v2460, 0.0
        %v2589 = vmax.f32 %v2461, 0.0
        %v2590 = vmax.f32 %v2462, 0.0
        %v2591 = vmax.f32 %v2463, 0.0
        %v2592 = vmax.f32 %v2464, 0.0
        %v2593 = vmax.f32 %v2465, 0.0
        %v2594 = vmax.f32 %v2466, 0.0
        %v2595 = vmax.f32 %v2467, 0.0
        %v2596 = vmax.f32 %v2468, 0.0
        %v2597 = vmax.f32 %v2469, 0.0
        %v2598 = vmax.f32 %v2470, 0.0
        %v2599 = vmax.f32 %v2471, 0.0
        %v2600 = vmax.f32 %v2472, 0.0
        %v2601 = vmax.f32 %v2473, 0.0
        %v2602 = vmax.f32 %v2474, 0.0
        %v2603 = vmax.f32 %v2475, 0.0
        %v2604 = vmax.f32 %v2476, 0.0
        %v2605 = vmax.f32 %v2477, 0.0
        %v2606 = vmax.f32 %v2478, 0.0
        %v2607 = vmax.f32 %v2479, 0.0
        %v2608 = vmax.f32 %v2480, 0.0
        %v2609 = vmax.f32 %v2481, 0.0
        %v2610 = vmax.f32 %v2482, 0.0
        %v2611 = vmax.f32 %v2483, 0.0
        %v2612 = vmax.f32 %v2484, 0.0
        %v2613 = vmax.f32 %v2485, 0.0
        %v2614 = vmax.f32 %v2486, 0.0
        %v2615 = vmax.f32 %v2487, 0.0
        %v2616 = vmax.f32 %v2488, 0.0
        %v2617 = vmax.f32 %v2489, 0.0
        %v2618 = vmax.f32 %v2490, 0.0
        %v2619 = vmax.f32 %v2491, 0.0
        %v2620 = vmax.f32 %v2492, 0.0
        %v2621 = vmax.f32 %v2493, 0.0
        %v2622 = vmax.f32 %v2494, 0.0
        %v2623 = vmax.f32 %v2495, 0.0
        %v2624 = vmax.f32 %v2496, 0.0
        %v2625 = vmax.f32 %v2497, 0.0
        %v2626 = vmax.f32 %v2498, 0.0
        %v2627 = vmax.f32 %v2499, 0.0
        %v2628 = vmax.f32 %v2500, 0.0
        %v2629 = vmax.f32 %v2501, 0.0
        %v2630 = vmax.f32 %v2502, 0.0
        %v2631 = vmax.f32 %v2503, 0.0
        %v2632 = vmax.f32 %v2504, 0.0
        %v2633 = vmax.f32 %v2505, 0.0
        %v2634 = vmax.f32 %v2506, 0.0
        %v2635 = vmax.f32 %v2507, 0.0
        %v2636 = vmax.f32 %v2508, 0.0
        %v2637 = vmax.f32 %v2509, 0.0
        %v2638 = vmax.f32 %v2510, 0.0
        %v2639 = vmax.f32 %v2511, 0.0
        %v2640 = vmax.f32 %v2512, 0.0
        %v2641 = vmax.f32 %v2513, 0.0
        %v2642 = vmax.f32 %v2514, 0.0
        %v2643 = vmax.f32 %v2515, 0.0
        %v2644 = vmax.f32 %v2516, 0.0
        %v2645 = vmax.f32 %v2517, 0.0
        %v2646 = vmax.f32 %v2518, 0.0
        %v2647 = vmax.f32 %v2519, 0.0
        %v2648 = vmax.f32 %v2520, 0.0
        %v2649 = vmax.f32 %v2521, 0.0
        %v2650 = vmax.f32 %v2522, 0.0
        %v2651 = vmax.f32 %v2523, 0.0
        %v2652 = vmax.f32 %v2524, 0.0
        %v2653 = vmax.f32 %v2525, 0.0
        %v2654 = vmax.f32 %v2526, 0.0
        %v2655 = vmax.f32 %v2527, 0.0
        %v2656 = vmax.f32 %v2528, 0.0
        %v2657 = vmax.f32 %v2529, 0.0
        %v2658 = vmax.f32 %v2530, 0.0
        %v2659 = vmax.f32 %v2531, 0.0
        %v2660 = vmax.f32 %v2532, 0.0
        %v2661 = vmax.f32 %v2533, 0.0
        %v2662 = vmax.f32 %v2534, 0.0
        %v2663 = vmax.f32 %v2535, 0.0
        %v2664 = vmax.f32 %v2536, 0.0
        %v2665 = vmax.f32 %v2537, 0.0
        %v2666 = vmax.f32 %v2538, 0.0
        %v2667 = vmax.f32 %v2539, 0.0
        %v2668 = vmax.f32 %v2540, 0.0
        %v2669 = vmax.f32 %v2541, 0.0
        %v2670 = vmax.f32 %v2542, 0.0
        %v2671 = vmax.f32 %v2543, 0.0
        %v2672 = vmax.f32 %v2544, 0.0
        %v2673 = vmax.f32 %v2545, 0.0
        %v2674 = vmax.f32 %v2546, 0.0
        %v2675 = vmax.f32 %v2547, 0.0
        %v2676 = vmax.f32 %v2548, 0.0
        %v2677 = vmax.f32 %v2549, 0.0
        %v2678 = vmax.f32 %v2550, 0.0
        %v2679 = vmax.f32 %v2551, 0.0
        %v2680 = vmax.f32 %v2552, 0.0
        %v2681 = vmax.f32 %v2553, 0.0
        %v2682 = vmax.f32 %v2554, 0.0
        %v2683 = vmax.f32 %v2555, 0.0
        %v2684 = vmax.f32 %v2556, 0.0
        %v2685 = vmax.f32 %v2557, 0.0
        %v2686 = vmax.f32 %v2558, 0.0
        %v2687 = vmax.f32 %v2559, 0.0
        %v2688 = vmax.f32 %v2560, 0.0
        %v2689 = vmax.f32 %v2561, 0.0
        %v2690 = vmax.f32 %v2562, 0.0
        %v2691 = vmax.f32 %v2563, 0.0
        %v2692 = vmax.f32 %v2564, 0.0
        %v2693 = vmax.f32 %v2565, 0.0
        %v2694 = vmax.f32 %v2566, 0.0
        %v2695 = vmax.f32 %v2567, 0.0
        %v2696 = vmax.f32 %v2568, 0.0
        %v2697 = vmax.f32 %v2569, 0.0
        %v2698 = vmax.f32 %v2570, 0.0
        %v2699 = vmax.f32 %v2571, 0.0
        %v2700 = vmax.f32 %v2572, 0.0
        %v2701 = vmax.f32 %v2573, 0.0
        %v2702 = vmax.f32 %v2574, 0.0
        %v2703 = vmax.f32 %v2575, 0.0
        %v2704 = vmax.f32 %v2576, 0.0
        %v2705 = vmax.f32 %v2577, 0.0
        %v2706 = vmax.f32 %v2578, 0.0
        %v2707 = vld [vmem:[#allocation7] sm:$0xff]
        %v2708 = vld [vmem:[#allocation7 + $0x8] sm:$0xff]
        %v2709 = vld [vmem:[#allocation7 + $0x10] sm:$0xff]
        %v2710 = vld [vmem:[#allocation7 + $0x18] sm:$0xff]
        %v2711 = vld [vmem:[#allocation7 + $0x20] sm:$0xff]
        %v2712 = vld [vmem:[#allocation7 + $0x28] sm:$0xff]
        %v2713 = vld [vmem:[#allocation7 + $0x30] sm:$0xff]
        %v2714 = vld [vmem:[#allocation7 + $0x38] sm:$0xff]
        %v2715 = vld [vmem:[#allocation7 + $0x40] sm:$0xff]
        %v2716 = vld [vmem:[#allocation7 + $0x48] sm:$0xff]
        %v2717 = vld [vmem:[#allocation7 + $0x50] sm:$0xff]
        %v2718 = vld [vmem:[#allocation7 + $0x58] sm:$0xff]
        %v2719 = vld [vmem:[#allocation7 + $0x60] sm:$0xff]
        %v2720 = vld [vmem:[#allocation7 + $0x68] sm:$0xff]
        %v2721 = vld [vmem:[#allocation7 + $0x70] sm:$0xff]
        %v2722 = vld [vmem:[#allocation7 + $0x78] sm:$0xff]
        %v2723 = vld [vmem:[#allocation7 + $0x80] sm:$0xff]
        %v2724 = vld [vmem:[#allocation7 + $0x88] sm:$0xff]
        %v2725 = vld [vmem:[#allocation7 + $0x90] sm:$0xff]
        %v2726 = vld [vmem:[#allocation7 + $0x98] sm:$0xff]
        %v2727 = vld [vmem:[#allocation7 + $0xa0] sm:$0xff]
        %v2728 = vld [vmem:[#allocation7 + $0xa8] sm:$0xff]
        %v2729 = vld [vmem:[#allocation7 + $0xb0] sm:$0xff]
        %v2730 = vld [vmem:[#allocation7 + $0xb8] sm:$0xff]
        %v2731 = vld [vmem:[#allocation7 + $0xc0] sm:$0xff]
        %v2732 = vld [vmem:[#allocation7 + $0xc8] sm:$0xff]
        %v2733 = vld [vmem:[#allocation7 + $0xd0] sm:$0xff]
        %v2734 = vld [vmem:[#allocation7 + $0xd8] sm:$0xff]
        %v2735 = vld [vmem:[#allocation7 + $0xe0] sm:$0xff]
        %v2736 = vld [vmem:[#allocation7 + $0xe8] sm:$0xff]
        %v2737 = vld [vmem:[#allocation7 + $0xf0] sm:$0xff]
        %v2738 = vld [vmem:[#allocation7 + $0xf8] sm:$0xff]
        %v2739 = vld [vmem:[#allocation7 + $0x100] sm:$0xff]
        %v2740 = vld [vmem:[#allocation7 + $0x108] sm:$0xff]
        %v2741 = vld [vmem:[#allocation7 + $0x110] sm:$0xff]
        %v2742 = vld [vmem:[#allocation7 + $0x118] sm:$0xff]
        %v2743 = vld [vmem:[#allocation7 + $0x120] sm:$0xff]
        %v2744 = vld [vmem:[#allocation7 + $0x128] sm:$0xff]
        %v2745 = vld [vmem:[#allocation7 + $0x130] sm:$0xff]
        %v2746 = vld [vmem:[#allocation7 + $0x138] sm:$0xff]
        %v2747 = vld [vmem:[#allocation7 + $0x140] sm:$0xff]
        %v2748 = vld [vmem:[#allocation7 + $0x148] sm:$0xff]
        %v2749 = vld [vmem:[#allocation7 + $0x150] sm:$0xff]
        %v2750 = vld [vmem:[#allocation7 + $0x158] sm:$0xff]
        %v2751 = vld [vmem:[#allocation7 + $0x160] sm:$0xff]
        %v2752 = vld [vmem:[#allocation7 + $0x168] sm:$0xff]
        %v2753 = vld [vmem:[#allocation7 + $0x170] sm:$0xff]
        %v2754 = vld [vmem:[#allocation7 + $0x178] sm:$0xff]
        %v2755 = vld [vmem:[#allocation7 + $0x180] sm:$0xff]
        %v2756 = vld [vmem:[#allocation7 + $0x188] sm:$0xff]
        %v2757 = vld [vmem:[#allocation7 + $0x190] sm:$0xff]
        %v2758 = vld [vmem:[#allocation7 + $0x198] sm:$0xff]
        %v2759 = vld [vmem:[#allocation7 + $0x1a0] sm:$0xff]
        %v2760 = vld [vmem:[#allocation7 + $0x1a8] sm:$0xff]
        %v2761 = vld [vmem:[#allocation7 + $0x1b0] sm:$0xff]
        %v2762 = vld [vmem:[#allocation7 + $0x1b8] sm:$0xff]
        %v2763 = vld [vmem:[#allocation7 + $0x1c0] sm:$0xff]
        %v2764 = vld [vmem:[#allocation7 + $0x1c8] sm:$0xff]
        %v2765 = vld [vmem:[#allocation7 + $0x1d0] sm:$0xff]
        %v2766 = vld [vmem:[#allocation7 + $0x1d8] sm:$0xff]
        %v2767 = vld [vmem:[#allocation7 + $0x1e0] sm:$0xff]
        %v2768 = vld [vmem:[#allocation7 + $0x1e8] sm:$0xff]
        %v2769 = vld [vmem:[#allocation7 + $0x1f0] sm:$0xff]
        %v2770 = vld [vmem:[#allocation7 + $0x1f8] sm:$0xff]
        %v2771 = vld [vmem:[#allocation7 + $0x200] sm:$0xff]
        %v2772 = vld [vmem:[#allocation7 + $0x208] sm:$0xff]
        %v2773 = vld [vmem:[#allocation7 + $0x210] sm:$0xff]
        %v2774 = vld [vmem:[#allocation7 + $0x218] sm:$0xff]
        %v2775 = vld [vmem:[#allocation7 + $0x220] sm:$0xff]
        %v2776 = vld [vmem:[#allocation7 + $0x228] sm:$0xff]
        %v2777 = vld [vmem:[#allocation7 + $0x230] sm:$0xff]
        %v2778 = vld [vmem:[#allocation7 + $0x238] sm:$0xff]
        %v2779 = vld [vmem:[#allocation7 + $0x240] sm:$0xff]
        %v2780 = vld [vmem:[#allocation7 + $0x248] sm:$0xff]
        %v2781 = vld [vmem:[#allocation7 + $0x250] sm:$0xff]
        %v2782 = vld [vmem:[#allocation7 + $0x258] sm:$0xff]
        %v2783 = vld [vmem:[#allocation7 + $0x260] sm:$0xff]
        %v2784 = vld [vmem:[#allocation7 + $0x268] sm:$0xff]
        %v2785 = vld [vmem:[#allocation7 + $0x270] sm:$0xff]
        %v2786 = vld [vmem:[#allocation7 + $0x278] sm:$0xff]
        %v2787 = vld [vmem:[#allocation7 + $0x280] sm:$0xff]
        %v2788 = vld [vmem:[#allocation7 + $0x288] sm:$0xff]
        %v2789 = vld [vmem:[#allocation7 + $0x290] sm:$0xff]
        %v2790 = vld [vmem:[#allocation7 + $0x298] sm:$0xff]
        %v2791 = vld [vmem:[#allocation7 + $0x2a0] sm:$0xff]
        %v2792 = vld [vmem:[#allocation7 + $0x2a8] sm:$0xff]
        %v2793 = vld [vmem:[#allocation7 + $0x2b0] sm:$0xff]
        %v2794 = vld [vmem:[#allocation7 + $0x2b8] sm:$0xff]
        %v2795 = vld [vmem:[#allocation7 + $0x2c0] sm:$0xff]
        %v2796 = vld [vmem:[#allocation7 + $0x2c8] sm:$0xff]
        %v2797 = vld [vmem:[#allocation7 + $0x2d0] sm:$0xff]
        %v2798 = vld [vmem:[#allocation7 + $0x2d8] sm:$0xff]
        %v2799 = vld [vmem:[#allocation7 + $0x2e0] sm:$0xff]
        %v2800 = vld [vmem:[#allocation7 + $0x2e8] sm:$0xff]
        %v2801 = vld [vmem:[#allocation7 + $0x2f0] sm:$0xff]
        %v2802 = vld [vmem:[#allocation7 + $0x2f8] sm:$0xff]
        %v2803 = vld [vmem:[#allocation7 + $0x300] sm:$0xff]
        %v2804 = vld [vmem:[#allocation7 + $0x308] sm:$0xff]
        %v2805 = vld [vmem:[#allocation7 + $0x310] sm:$0xff]
        %v2806 = vld [vmem:[#allocation7 + $0x318] sm:$0xff]
        %v2807 = vld [vmem:[#allocation7 + $0x320] sm:$0xff]
        %v2808 = vld [vmem:[#allocation7 + $0x328] sm:$0xff]
        %v2809 = vld [vmem:[#allocation7 + $0x330] sm:$0xff]
        %v2810 = vld [vmem:[#allocation7 + $0x338] sm:$0xff]
        %v2811 = vld [vmem:[#allocation7 + $0x340] sm:$0xff]
        %v2812 = vld [vmem:[#allocation7 + $0x348] sm:$0xff]
        %v2813 = vld [vmem:[#allocation7 + $0x350] sm:$0xff]
        %v2814 = vld [vmem:[#allocation7 + $0x358] sm:$0xff]
        %v2815 = vld [vmem:[#allocation7 + $0x360] sm:$0xff]
        %v2816 = vld [vmem:[#allocation7 + $0x368] sm:$0xff]
        %v2817 = vld [vmem:[#allocation7 + $0x370] sm:$0xff]
        %v2818 = vld [vmem:[#allocation7 + $0x378] sm:$0xff]
        %v2819 = vld [vmem:[#allocation7 + $0x380] sm:$0xff]
        %v2820 = vld [vmem:[#allocation7 + $0x388] sm:$0xff]
        %v2821 = vld [vmem:[#allocation7 + $0x390] sm:$0xff]
        %v2822 = vld [vmem:[#allocation7 + $0x398] sm:$0xff]
        %v2823 = vld [vmem:[#allocation7 + $0x3a0] sm:$0xff]
        %v2824 = vld [vmem:[#allocation7 + $0x3a8] sm:$0xff]
        %v2825 = vld [vmem:[#allocation7 + $0x3b0] sm:$0xff]
        %v2826 = vld [vmem:[#allocation7 + $0x3b8] sm:$0xff]
        %v2827 = vld [vmem:[#allocation7 + $0x3c0] sm:$0xff]
        %v2828 = vld [vmem:[#allocation7 + $0x3c8] sm:$0xff]
        %v2829 = vld [vmem:[#allocation7 + $0x3d0] sm:$0xff]
        %v2830 = vld [vmem:[#allocation7 + $0x3d8] sm:$0xff]
        %v2831 = vld [vmem:[#allocation7 + $0x3e0] sm:$0xff]
        %v2832 = vld [vmem:[#allocation7 + $0x3e8] sm:$0xff]
        %v2833 = vld [vmem:[#allocation7 + $0x3f0] sm:$0xff]
        %v2834 = vld [vmem:[#allocation7 + $0x3f8] sm:$0xff]
        %v2835 = vld [vmem:[%s9] sm:$0x3]
        %v2837 = vlaneseq
        %v2838 = vshrl.u32 %v2837, 7
        %v2839 = vsub.s32 0, %v2838
        %v2840 = vrot.slane %v2835, %v2839
        %v2841 = vlaneseq
        %v2842 = vshrl.u32 %v2841, 7
        %v2843 = vsub.s32 1, %v2842
        %v2844 = vrot.slane %v2835, %v2843
        %2847 = vmatprep.subr.mxu0 %v2708
        %2848 = vmatpush1.msra.mxu0 %v2707
        %2849 = vmatprep.subr.mxu0 %v2710
        %2850 = vmatpush1.msra.mxu0 %v2709
        %2851 = vmatprep.subr.mxu0 %v2712
        %2852 = vmatpush1.msra.mxu0 %v2711
        %2853 = vmatprep.subr.mxu0 %v2714
        %2854 = vmatpush1.msra.mxu0 %v2713
        %2855 = vmatprep.subr.mxu0 %v2716
        %2856 = vmatpush1.msra.mxu0 %v2715
        %2857 = vmatprep.subr.mxu0 %v2718
        %2858 = vmatpush1.msra.mxu0 %v2717
        %2859 = vmatprep.subr.mxu0 %v2720
        %2860 = vmatpush1.msra.mxu0 %v2719
        %2861 = vmatprep.subr.mxu0 %v2722
        %2862 = vmatpush1.msra.mxu0 %v2721
        %2863 = vmatprep.subr.mxu0 %v2724
        %2864 = vmatpush1.msra.mxu0 %v2723
        %2865 = vmatprep.subr.mxu0 %v2726
        %2866 = vmatpush1.msra.mxu0 %v2725
        %2867 = vmatprep.subr.mxu0 %v2728
        %2868 = vmatpush1.msra.mxu0 %v2727
        %2869 = vmatprep.subr.mxu0 %v2730
        %2870 = vmatpush1.msra.mxu0 %v2729
        %2871 = vmatprep.subr.mxu0 %v2732
        %2872 = vmatpush1.msra.mxu0 %v2731
        %2873 = vmatprep.subr.mxu0 %v2734
        %2874 = vmatpush1.msra.mxu0 %v2733
        %2875 = vmatprep.subr.mxu0 %v2736
        %2876 = vmatpush1.msra.mxu0 %v2735
        %2877 = vmatprep.subr.mxu0 %v2738
        %2878 = vmatpush1.msra.mxu0 %v2737
        %2879 = vmatprep.subr.mxu0 %v2740
        %2880 = vmatpush1.msra.mxu0 %v2739
        %2881 = vmatprep.subr.mxu0 %v2742
        %2882 = vmatpush1.msra.mxu0 %v2741
        %2883 = vmatprep.subr.mxu0 %v2744
        %2884 = vmatpush1.msra.mxu0 %v2743
        %2885 = vmatprep.subr.mxu0 %v2746
        %2886 = vmatpush1.msra.mxu0 %v2745
        %2887 = vmatprep.subr.mxu0 %v2748
        %2888 = vmatpush1.msra.mxu0 %v2747
        %2889 = vmatprep.subr.mxu0 %v2750
        %2890 = vmatpush1.msra.mxu0 %v2749
        %2891 = vmatprep.subr.mxu0 %v2752
        %2892 = vmatpush1.msra.mxu0 %v2751
        %2893 = vmatprep.subr.mxu0 %v2754
        %2894 = vmatpush1.msra.mxu0 %v2753
        %2895 = vmatprep.subr.mxu0 %v2756
        %2896 = vmatpush1.msra.mxu0 %v2755
        %2897 = vmatprep.subr.mxu0 %v2758
        %2898 = vmatpush1.msra.mxu0 %v2757
        %2899 = vmatprep.subr.mxu0 %v2760
        %2900 = vmatpush1.msra.mxu0 %v2759
        %2901 = vmatprep.subr.mxu0 %v2762
        %2902 = vmatpush1.msra.mxu0 %v2761
        %2903 = vmatprep.subr.mxu0 %v2764
        %2904 = vmatpush1.msra.mxu0 %v2763
        %2905 = vmatprep.subr.mxu0 %v2766
        %2906 = vmatpush1.msra.mxu0 %v2765
        %2907 = vmatprep.subr.mxu0 %v2768
        %2908 = vmatpush1.msra.mxu0 %v2767
        %2909 = vmatprep.subr.mxu0 %v2770
        %2910 = vmatpush1.msra.mxu0 %v2769
        %2911 = vmatprep.mubr.f32.mxu0 %v2580
        %2912 = vmatmul.mubr.f32.gmra.mrb[0].mxu0 %v2579
        %v2913 = vpop.f32.mrb[0].mxu0
        %v2914 = vadd.f32 %v2840, %v2913
        %v2915 = vpop.f32.mrb[0].mxu0
        %v2916 = vadd.f32 %v2844, %v2915
        %2917 = vmatprep.mubr.f32.mxu0 %v2584
        %2918 = vmatmul.mubr.f32.gmra.mrb[0].mxu0 %v2583
        %v2919 = vpop.f32.mrb[0].mxu0
        %v2920 = vadd.f32 %v2840, %v2919
        %v2921 = vpop.f32.mrb[0].mxu0
        %v2922 = vadd.f32 %v2844, %v2921
        %2923 = vmatprep.mubr.f32.mxu0 %v2588
        %2924 = vmatmul.mubr.f32.gmra.mrb[0].mxu0 %v2587
        %v2925 = vpop.f32.mrb[0].mxu0
        %v2926 = vadd.f32 %v2840, %v2925
        %v2927 = vpop.f32.mrb[0].mxu0
        %v2928 = vadd.f32 %v2844, %v2927
        %2929 = vmatprep.mubr.f32.mxu0 %v2592
        %2930 = vmatmul.mubr.f32.gmra.mrb[0].mxu0 %v2591
        %v2931 = vpop.f32.mrb[0].mxu0
        %v2932 = vadd.f32 %v2840, %v2931
        %v2933 = vpop.f32.mrb[0].mxu0
        %v2934 = vadd.f32 %v2844, %v2933
        %2935 = vmatprep.mubr.f32.mxu0 %v2596
        %2936 = vmatmul.mubr.f32.gmra.mrb[0].mxu0 %v2595
        %v2937 = vpop.f32.mrb[0].mxu0
        %v2938 = vadd.f32 %v2840, %v2937
        %v2939 = vpop.f32.mrb[0].mxu0
        %v2940 = vadd.f32 %v2844, %v2939
        %2941 = vmatprep.mubr.f32.mxu0 %v2600
        %2942 = vmatmul.mubr.f32.gmra.mrb[0].mxu0 %v2599
        %v2943 = vpop.f32.mrb[0].mxu0
        %v2944 = vadd.f32 %v2840, %v2943
        %v2945 = vpop.f32.mrb[0].mxu0
        %v2946 = vadd.f32 %v2844, %v2945
        %2947 = vmatprep.mubr.f32.mxu0 %v2604
        %2948 = vmatmul.mubr.f32.gmra.mrb[0].mxu0 %v2603
        %v2949 = vpop.f32.mrb[0].mxu0
        %v2950 = vadd.f32 %v2840, %v2949
        %v2951 = vpop.f32.mrb[0].mxu0
        %v2952 = vadd.f32 %v2844, %v2951
        %2953 = vmatprep.mubr.f32.mxu0 %v2608
        %2954 = vmatmul.mubr.f32.gmra.mrb[0].mxu0 %v2607
        %v2955 = vpop.f32.mrb[0].mxu0
        %v2956 = vadd.f32 %v2840, %v2955
        %v2957 = vpop.f32.mrb[0].mxu0
        %v2958 = vadd.f32 %v2844, %v2957
        %2959 = vmatprep.mubr.f32.mxu0 %v2612
        %2960 = vmatmul.mubr.f32.gmra.mrb[0].mxu0 %v2611
        %v2961 = vpop.f32.mrb[0].mxu0
        %v2962 = vadd.f32 %v2840, %v2961
        %v2963 = vpop.f32.mrb[0].mxu0
        %v2964 = vadd.f32 %v2844, %v2963
        %2965 = vmatprep.mubr.f32.mxu0 %v2616
        %2966 = vmatmul.mubr.f32.gmra.mrb[0].mxu0 %v2615
        %v2967 = vpop.f32.mrb[0].mxu0
        %v2968 = vadd.f32 %v2840, %v2967
        %v2969 = vpop.f32.mrb[0].mxu0
        %v2970 = vadd.f32 %v2844, %v2969
        %2971 = vmatprep.mubr.f32.mxu0 %v2620
        %2972 = vmatmul.mubr.f32.gmra.mrb[0].mxu0 %v2619
        %v2973 = vpop.f32.mrb[0].mxu0
        %v2974 = vadd.f32 %v2840, %v2973
        %v2975 = vpop.f32.mrb[0].mxu0
        %v2976 = vadd.f32 %v2844, %v2975
        %2977 = vmatprep.mubr.f32.mxu0 %v2624
        %2978 = vmatmul.mubr.f32.gmra.mrb[0].mxu0 %v2623
        %v2979 = vpop.f32.mrb[0].mxu0
        %v2980 = vadd.f32 %v2840, %v2979
        %v2981 = vpop.f32.mrb[0].mxu0
        %v2982 = vadd.f32 %v2844, %v2981
        %2983 = vmatprep.mubr.f32.mxu0 %v2628
        %2984 = vmatmul.mubr.f32.gmra.mrb[0].mxu0 %v2627
        %v2985 = vpop.f32.mrb[0].mxu0
        %v2986 = vadd.f32 %v2840, %v2985
        %v2987 = vpop.f32.mrb[0].mxu0
        %v2988 = vadd.f32 %v2844, %v2987
        %2989 = vmatprep.mubr.f32.mxu0 %v2632
        %2990 = vmatmul.mubr.f32.gmra.mrb[0].mxu0 %v2631
        %v2991 = vpop.f32.mrb[0].mxu0
        %v2992 = vadd.f32 %v2840, %v2991
        %v2993 = vpop.f32.mrb[0].mxu0
        %v2994 = vadd.f32 %v2844, %v2993
        %2995 = vmatprep.mubr.f32.mxu0 %v2636
        %2996 = vmatmul.mubr.f32.gmra.mrb[0].mxu0 %v2635
        %v2997 = vpop.f32.mrb[0].mxu0
        %v2998 = vadd.f32 %v2840, %v2997
        %v2999 = vpop.f32.mrb[0].mxu0
        %v3000 = vadd.f32 %v2844, %v2999
        %3001 = vmatprep.mubr.f32.mxu0 %v2640
        %3002 = vmatmul.mubr.f32.gmra.mrb[0].mxu0 %v2639
        %v3003 = vpop.f32.mrb[0].mxu0
        %v3004 = vadd.f32 %v2840, %v3003
        %v3005 = vpop.f32.mrb[0].mxu0
        %v3006 = vadd.f32 %v2844, %v3005
        %3007 = vmatprep.mubr.f32.mxu0 %v2644
        %3008 = vmatmul.mubr.f32.gmra.mrb[0].mxu0 %v2643
        %v3009 = vpop.f32.mrb[0].mxu0
        %v3010 = vadd.f32 %v2840, %v3009
        %v3011 = vpop.f32.mrb[0].mxu0
        %v3012 = vadd.f32 %v2844, %v3011
        %3013 = vmatprep.mubr.f32.mxu0 %v2648
        %3014 = vmatmul.mubr.f32.gmra.mrb[0].mxu0 %v2647
        %v3015 = vpop.f32.mrb[0].mxu0
        %v3016 = vadd.f32 %v2840, %v3015
        %v3017 = vpop.f32.mrb[0].mxu0
        %v3018 = vadd.f32 %v2844, %v3017
        %3019 = vmatprep.mubr.f32.mxu0 %v2652
        %3020 = vmatmul.mubr.f32.gmra.mrb[0].mxu0 %v2651
        %v3021 = vpop.f32.mrb[0].mxu0
        %v3022 = vadd.f32 %v2840, %v3021
        %v3023 = vpop.f32.mrb[0].mxu0
        %v3024 = vadd.f32 %v2844, %v3023
        %3025 = vmatprep.mubr.f32.mxu0 %v2656
        %3026 = vmatmul.mubr.f32.gmra.mrb[0].mxu0 %v2655
        %v3027 = vpop.f32.mrb[0].mxu0
        %v3028 = vadd.f32 %v2840, %v3027
        %v3029 = vpop.f32.mrb[0].mxu0
        %v3030 = vadd.f32 %v2844, %v3029
        %3031 = vmatprep.mubr.f32.mxu0 %v2660
        %3032 = vmatmul.mubr.f32.gmra.mrb[0].mxu0 %v2659
        %v3033 = vpop.f32.mrb[0].mxu0
        %v3034 = vadd.f32 %v2840, %v3033
        %v3035 = vpop.f32.mrb[0].mxu0
        %v3036 = vadd.f32 %v2844, %v3035
        %3037 = vmatprep.mubr.f32.mxu0 %v2664
        %3038 = vmatmul.mubr.f32.gmra.mrb[0].mxu0 %v2663
        %v3039 = vpop.f32.mrb[0].mxu0
        %v3040 = vadd.f32 %v2840, %v3039
        %v3041 = vpop.f32.mrb[0].mxu0
        %v3042 = vadd.f32 %v2844, %v3041
        %3043 = vmatprep.mubr.f32.mxu0 %v2668
        %3044 = vmatmul.mubr.f32.gmra.mrb[0].mxu0 %v2667
        %v3045 = vpop.f32.mrb[0].mxu0
        %v3046 = vadd.f32 %v2840, %v3045
        %v3047 = vpop.f32.mrb[0].mxu0
        %v3048 = vadd.f32 %v2844, %v3047
        %3049 = vmatprep.mubr.f32.mxu0 %v2672
        %3050 = vmatmul.mubr.f32.gmra.mrb[0].mxu0 %v2671
        %v3051 = vpop.f32.mrb[0].mxu0
        %v3052 = vadd.f32 %v2840, %v3051
        %v3053 = vpop.f32.mrb[0].mxu0
        %v3054 = vadd.f32 %v2844, %v3053
        %3055 = vmatprep.mubr.f32.mxu0 %v2676
        %3056 = vmatmul.mubr.f32.gmra.mrb[0].mxu0 %v2675
        %v3057 = vpop.f32.mrb[0].mxu0
        %v3058 = vadd.f32 %v2840, %v3057
        %v3059 = vpop.f32.mrb[0].mxu0
        %v3060 = vadd.f32 %v2844, %v3059
        %3061 = vmatprep.mubr.f32.mxu0 %v2680
        %3062 = vmatmul.mubr.f32.gmra.mrb[0].mxu0 %v2679
        %v3063 = vpop.f32.mrb[0].mxu0
        %v3064 = vadd.f32 %v2840, %v3063
        %v3065 = vpop.f32.mrb[0].mxu0
        %v3066 = vadd.f32 %v2844, %v3065
        %3067 = vmatprep.mubr.f32.mxu0 %v2684
        %3068 = vmatmul.mubr.f32.gmra.mrb[0].mxu0 %v2683
        %v3069 = vpop.f32.mrb[0].mxu0
        %v3070 = vadd.f32 %v2840, %v3069
        %v3071 = vpop.f32.mrb[0].mxu0
        %v3072 = vadd.f32 %v2844, %v3071
        %3073 = vmatprep.mubr.f32.mxu0 %v2688
        %3074 = vmatmul.mubr.f32.gmra.mrb[0].mxu0 %v2687
        %v3075 = vpop.f32.mrb[0].mxu0
        %v3076 = vadd.f32 %v2840, %v3075
        %v3077 = vpop.f32.mrb[0].mxu0
        %v3078 = vadd.f32 %v2844, %v3077
        %3079 = vmatprep.mubr.f32.mxu0 %v2692
        %3080 = vmatmul.mubr.f32.gmra.mrb[0].mxu0 %v2691
        %v3081 = vpop.f32.mrb[0].mxu0
        %v3082 = vadd.f32 %v2840, %v3081
        %v3083 = vpop.f32.mrb[0].mxu0
        %v3084 = vadd.f32 %v2844, %v3083
        %3085 = vmatprep.mubr.f32.mxu0 %v2696
        %3086 = vmatmul.mubr.f32.gmra.mrb[0].mxu0 %v2695
        %v3087 = vpop.f32.mrb[0].mxu0
        %v3088 = vadd.f32 %v2840, %v3087
        %v3089 = vpop.f32.mrb[0].mxu0
        %v3090 = vadd.f32 %v2844, %v3089
        %3091 = vmatprep.mubr.f32.mxu0 %v2700
        %3092 = vmatmul.mubr.f32.gmra.mrb[0].mxu0 %v2699
        %v3093 = vpop.f32.mrb[0].mxu0
        %v3094 = vadd.f32 %v2840, %v3093
        %v3095 = vpop.f32.mrb[0].mxu0
        %v3096 = vadd.f32 %v2844, %v3095
        %3097 = vmatprep.mubr.f32.mxu0 %v2704
        %3098 = vmatmul.mubr.f32.gmra.mrb[0].mxu0 %v2703
        %v3099 = vpop.f32.mrb[0].mxu0
        %v3100 = vadd.f32 %v2840, %v3099
        %v3101 = vpop.f32.mrb[0].mxu0
        %v3102 = vadd.f32 %v2844, %v3101
        %3103 = vdwg.mxu0
        %3104 = vmatprep.subr.mxu0 %v2772
        %3105 = vmatpush1.msra.mxu0 %v2771
        %3106 = vmatprep.subr.mxu0 %v2774
        %3107 = vmatpush1.msra.mxu0 %v2773
        %3108 = vmatprep.subr.mxu0 %v2776
        %3109 = vmatpush1.msra.mxu0 %v2775
        %3110 = vmatprep.subr.mxu0 %v2778
        %3111 = vmatpush1.msra.mxu0 %v2777
        %3112 = vmatprep.subr.mxu0 %v2780
        %3113 = vmatpush1.msra.mxu0 %v2779
        %3114 = vmatprep.subr.mxu0 %v2782
        %3115 = vmatpush1.msra.mxu0 %v2781
        %3116 = vmatprep.subr.mxu0 %v2784
        %3117 = vmatpush1.msra.mxu0 %v2783
        %3118 = vmatprep.subr.mxu0 %v2786
        %3119 = vmatpush1.msra.mxu0 %v2785
        %3120 = vmatprep.subr.mxu0 %v2788
        %3121 = vmatpush1.msra.mxu0 %v2787
        %3122 = vmatprep.subr.mxu0 %v2790
        %3123 = vmatpush1.msra.mxu0 %v2789
        %3124 = vmatprep.subr.mxu0 %v2792
        %3125 = vmatpush1.msra.mxu0 %v2791
        %3126 = vmatprep.subr.mxu0 %v2794
        %3127 = vmatpush1.msra.mxu0 %v2793
        %3128 = vmatprep.subr.mxu0 %v2796
        %3129 = vmatpush1.msra.mxu0 %v2795
        %3130 = vmatprep.subr.mxu0 %v2798
        %3131 = vmatpush1.msra.mxu0 %v2797
        %3132 = vmatprep.subr.mxu0 %v2800
        %3133 = vmatpush1.msra.mxu0 %v2799
        %3134 = vmatprep.subr.mxu0 %v2802
        %3135 = vmatpush1.msra.mxu0 %v2801
        %3136 = vmatprep.subr.mxu0 %v2804
        %3137 = vmatpush1.msra.mxu0 %v2803
        %3138 = vmatprep.subr.mxu0 %v2806
        %3139 = vmatpush1.msra.mxu0 %v2805
        %3140 = vmatprep.subr.mxu0 %v2808
        %3141 = vmatpush1.msra.mxu0 %v2807
        %3142 = vmatprep.subr.mxu0 %v2810
        %3143 = vmatpush1.msra.mxu0 %v2809
        %3144 = vmatprep.subr.mxu0 %v2812
        %3145 = vmatpush1.msra.mxu0 %v2811
        %3146 = vmatprep.subr.mxu0 %v2814
        %3147 = vmatpush1.msra.mxu0 %v2813
        %3148 = vmatprep.subr.mxu0 %v2816
        %3149 = vmatpush1.msra.mxu0 %v2815
        %3150 = vmatprep.subr.mxu0 %v2818
        %3151 = vmatpush1.msra.mxu0 %v2817
        %3152 = vmatprep.subr.mxu0 %v2820
        %3153 = vmatpush1.msra.mxu0 %v2819
        %3154 = vmatprep.subr.mxu0 %v2822
        %3155 = vmatpush1.msra.mxu0 %v2821
        %3156 = vmatprep.subr.mxu0 %v2824
        %3157 = vmatpush1.msra.mxu0 %v2823
        %3158 = vmatprep.subr.mxu0 %v2826
        %3159 = vmatpush1.msra.mxu0 %v2825
        %3160 = vmatprep.subr.mxu0 %v2828
        %3161 = vmatpush1.msra.mxu0 %v2827
        %3162 = vmatprep.subr.mxu0 %v2830
        %3163 = vmatpush1.msra.mxu0 %v2829
        %3164 = vmatprep.subr.mxu0 %v2832
        %3165 = vmatpush1.msra.mxu0 %v2831
        %3166 = vmatprep.subr.mxu0 %v2834
        %3167 = vmatpush1.msra.mxu0 %v2833
        %3168 = vmatprep.mubr.f32.mxu0 %v2582
        %3169 = vmatmul.mubr.f32.gmra.mrb[0].mxu0 %v2581
        %v3170 = vpop.f32.mrb[0].mxu0
        %v3171 = vadd.f32 %v2914, %v3170
        %v3172 = vpop.f32.mrb[0].mxu0
        %v3173 = vadd.f32 %v2916, %v3172
        %3174 = vmatprep.mubr.f32.mxu0 %v2586
        %3175 = vmatmul.mubr.f32.gmra.mrb[0].mxu0 %v2585
        %v3176 = vpop.f32.mrb[0].mxu0
        %v3177 = vadd.f32 %v2920, %v3176
        %v3178 = vpop.f32.mrb[0].mxu0
        %v3179 = vadd.f32 %v2922, %v3178
        %3180 = vmatprep.mubr.f32.mxu0 %v2590
        %3181 = vmatmul.mubr.f32.gmra.mrb[0].mxu0 %v2589
        %v3182 = vpop.f32.mrb[0].mxu0
        %v3183 = vadd.f32 %v2926, %v3182
        %v3184 = vpop.f32.mrb[0].mxu0
        %v3185 = vadd.f32 %v2928, %v3184
        %3186 = vmatprep.mubr.f32.mxu0 %v2594
        %3187 = vmatmul.mubr.f32.gmra.mrb[0].mxu0 %v2593
        %v3188 = vpop.f32.mrb[0].mxu0
        %v3189 = vadd.f32 %v2932, %v3188
        %v3190 = vpop.f32.mrb[0].mxu0
        %v3191 = vadd.f32 %v2934, %v3190
        %3192 = vmatprep.mubr.f32.mxu0 %v2598
        %3193 = vmatmul.mubr.f32.gmra.mrb[0].mxu0 %v2597
        %v3194 = vpop.f32.mrb[0].mxu0
        %v3195 = vadd.f32 %v2938, %v3194
        %v3196 = vpop.f32.mrb[0].mxu0
        %v3197 = vadd.f32 %v2940, %v3196
        %3198 = vmatprep.mubr.f32.mxu0 %v2602
        %3199 = vmatmul.mubr.f32.gmra.mrb[0].mxu0 %v2601
        %v3200 = vpop.f32.mrb[0].mxu0
        %v3201 = vadd.f32 %v2944, %v3200
        %v3202 = vpop.f32.mrb[0].mxu0
        %v3203 = vadd.f32 %v2946, %v3202
        %3204 = vmatprep.mubr.f32.mxu0 %v2606
        %3205 = vmatmul.mubr.f32.gmra.mrb[0].mxu0 %v2605
        %v3206 = vpop.f32.mrb[0].mxu0
        %v3207 = vadd.f32 %v2950, %v3206
        %v3208 = vpop.f32.mrb[0].mxu0
        %v3209 = vadd.f32 %v2952, %v3208
        %3210 = vmatprep.mubr.f32.mxu0 %v2610
        %3211 = vmatmul.mubr.f32.gmra.mrb[0].mxu0 %v2609
        %v3212 = vpop.f32.mrb[0].mxu0
        %v3213 = vadd.f32 %v2956, %v3212
        %v3214 = vpop.f32.mrb[0].mxu0
        %v3215 = vadd.f32 %v2958, %v3214
        %3216 = vmatprep.mubr.f32.mxu0 %v2614
        %3217 = vmatmul.mubr.f32.gmra.mrb[0].mxu0 %v2613
        %v3218 = vpop.f32.mrb[0].mxu0
        %v3219 = vadd.f32 %v2962, %v3218
        %v3220 = vpop.f32.mrb[0].mxu0
        %v3221 = vadd.f32 %v2964, %v3220
        %3222 = vmatprep.mubr.f32.mxu0 %v2618
        %3223 = vmatmul.mubr.f32.gmra.mrb[0].mxu0 %v2617
        %v3224 = vpop.f32.mrb[0].mxu0
        %v3225 = vadd.f32 %v2968, %v3224
        %v3226 = vpop.f32.mrb[0].mxu0
        %v3227 = vadd.f32 %v2970, %v3226
        %3228 = vmatprep.mubr.f32.mxu0 %v2622
        %3229 = vmatmul.mubr.f32.gmra.mrb[0].mxu0 %v2621
        %v3230 = vpop.f32.mrb[0].mxu0
        %v3231 = vadd.f32 %v2974, %v3230
        %v3232 = vpop.f32.mrb[0].mxu0
        %v3233 = vadd.f32 %v2976, %v3232
        %3234 = vmatprep.mubr.f32.mxu0 %v2626
        %3235 = vmatmul.mubr.f32.gmra.mrb[0].mxu0 %v2625
        %v3236 = vpop.f32.mrb[0].mxu0
        %v3237 = vadd.f32 %v2980, %v3236
        %v3238 = vpop.f32.mrb[0].mxu0
        %v3239 = vadd.f32 %v2982, %v3238
        %3240 = vmatprep.mubr.f32.mxu0 %v2630
        %3241 = vmatmul.mubr.f32.gmra.mrb[0].mxu0 %v2629
        %v3242 = vpop.f32.mrb[0].mxu0
        %v3243 = vadd.f32 %v2986, %v3242
        %v3244 = vpop.f32.mrb[0].mxu0
        %v3245 = vadd.f32 %v2988, %v3244
        %3246 = vmatprep.mubr.f32.mxu0 %v2634
        %3247 = vmatmul.mubr.f32.gmra.mrb[0].mxu0 %v2633
        %v3248 = vpop.f32.mrb[0].mxu0
        %v3249 = vadd.f32 %v2992, %v3248
        %v3250 = vpop.f32.mrb[0].mxu0
        %v3251 = vadd.f32 %v2994, %v3250
        %3252 = vmatprep.mubr.f32.mxu0 %v2638
        %3253 = vmatmul.mubr.f32.gmra.mrb[0].mxu0 %v2637
        %v3254 = vpop.f32.mrb[0].mxu0
        %v3255 = vadd.f32 %v2998, %v3254
        %v3256 = vpop.f32.mrb[0].mxu0
        %v3257 = vadd.f32 %v3000, %v3256
        %3258 = vmatprep.mubr.f32.mxu0 %v2642
        %3259 = vmatmul.mubr.f32.gmra.mrb[0].mxu0 %v2641
        %v3260 = vpop.f32.mrb[0].mxu0
        %v3261 = vadd.f32 %v3004, %v3260
        %v3262 = vpop.f32.mrb[0].mxu0
        %v3263 = vadd.f32 %v3006, %v3262
        %3264 = vmatprep.mubr.f32.mxu0 %v2646
        %3265 = vmatmul.mubr.f32.gmra.mrb[0].mxu0 %v2645
        %v3266 = vpop.f32.mrb[0].mxu0
        %v3267 = vadd.f32 %v3010, %v3266
        %v3268 = vpop.f32.mrb[0].mxu0
        %v3269 = vadd.f32 %v3012, %v3268
        %3270 = vmatprep.mubr.f32.mxu0 %v2650
        %3271 = vmatmul.mubr.f32.gmra.mrb[0].mxu0 %v2649
        %v3272 = vpop.f32.mrb[0].mxu0
        %v3273 = vadd.f32 %v3016, %v3272
        %v3274 = vpop.f32.mrb[0].mxu0
        %v3275 = vadd.f32 %v3018, %v3274
        %3276 = vmatprep.mubr.f32.mxu0 %v2654
        %3277 = vmatmul.mubr.f32.gmra.mrb[0].mxu0 %v2653
        %v3278 = vpop.f32.mrb[0].mxu0
        %v3279 = vadd.f32 %v3022, %v3278
        %v3280 = vpop.f32.mrb[0].mxu0
        %v3281 = vadd.f32 %v3024, %v3280
        %3282 = vmatprep.mubr.f32.mxu0 %v2658
        %3283 = vmatmul.mubr.f32.gmra.mrb[0].mxu0 %v2657
        %v3284 = vpop.f32.mrb[0].mxu0
        %v3285 = vadd.f32 %v3028, %v3284
        %v3286 = vpop.f32.mrb[0].mxu0
        %v3287 = vadd.f32 %v3030, %v3286
        %3288 = vmatprep.mubr.f32.mxu0 %v2662
        %3289 = vmatmul.mubr.f32.gmra.mrb[0].mxu0 %v2661
        %v3290 = vpop.f32.mrb[0].mxu0
        %v3291 = vadd.f32 %v3034, %v3290
        %v3292 = vpop.f32.mrb[0].mxu0
        %v3293 = vadd.f32 %v3036, %v3292
        %3294 = vmatprep.mubr.f32.mxu0 %v2666
        %3295 = vmatmul.mubr.f32.gmra.mrb[0].mxu0 %v2665
        %v3296 = vpop.f32.mrb[0].mxu0
        %v3297 = vadd.f32 %v3040, %v3296
        %v3298 = vpop.f32.mrb[0].mxu0
        %v3299 = vadd.f32 %v3042, %v3298
        %3300 = vmatprep.mubr.f32.mxu0 %v2670
        %3301 = vmatmul.mubr.f32.gmra.mrb[0].mxu0 %v2669
        %v3302 = vpop.f32.mrb[0].mxu0
        %v3303 = vadd.f32 %v3046, %v3302
        %v3304 = vpop.f32.mrb[0].mxu0
        %v3305 = vadd.f32 %v3048, %v3304
        %3306 = vmatprep.mubr.f32.mxu0 %v2674
        %3307 = vmatmul.mubr.f32.gmra.mrb[0].mxu0 %v2673
        %v3308 = vpop.f32.mrb[0].mxu0
        %v3309 = vadd.f32 %v3052, %v3308
        %v3310 = vpop.f32.mrb[0].mxu0
        %v3311 = vadd.f32 %v3054, %v3310
        %3312 = vmatprep.mubr.f32.mxu0 %v2678
        %3313 = vmatmul.mubr.f32.gmra.mrb[0].mxu0 %v2677
        %v3314 = vpop.f32.mrb[0].mxu0
        %v3315 = vadd.f32 %v3058, %v3314
        %v3316 = vpop.f32.mrb[0].mxu0
        %v3317 = vadd.f32 %v3060, %v3316
        %3318 = vmatprep.mubr.f32.mxu0 %v2682
        %3319 = vmatmul.mubr.f32.gmra.mrb[0].mxu0 %v2681
        %v3320 = vpop.f32.mrb[0].mxu0
        %v3321 = vadd.f32 %v3064, %v3320
        %v3322 = vpop.f32.mrb[0].mxu0
        %v3323 = vadd.f32 %v3066, %v3322
        %3324 = vmatprep.mubr.f32.mxu0 %v2686
        %3325 = vmatmul.mubr.f32.gmra.mrb[0].mxu0 %v2685
        %v3326 = vpop.f32.mrb[0].mxu0
        %v3327 = vadd.f32 %v3070, %v3326
        %v3328 = vpop.f32.mrb[0].mxu0
        %v3329 = vadd.f32 %v3072, %v3328
        %3330 = vmatprep.mubr.f32.mxu0 %v2690
        %3331 = vmatmul.mubr.f32.gmra.mrb[0].mxu0 %v2689
        %v3332 = vpop.f32.mrb[0].mxu0
        %v3333 = vadd.f32 %v3076, %v3332
        %v3334 = vpop.f32.mrb[0].mxu0
        %v3335 = vadd.f32 %v3078, %v3334
        %3336 = vmatprep.mubr.f32.mxu0 %v2694
        %3337 = vmatmul.mubr.f32.gmra.mrb[0].mxu0 %v2693
        %v3338 = vpop.f32.mrb[0].mxu0
        %v3339 = vadd.f32 %v3082, %v3338
        %v3340 = vpop.f32.mrb[0].mxu0
        %v3341 = vadd.f32 %v3084, %v3340
        %3342 = vmatprep.mubr.f32.mxu0 %v2698
        %3343 = vmatmul.mubr.f32.gmra.mrb[0].mxu0 %v2697
        %v3344 = vpop.f32.mrb[0].mxu0
        %v3345 = vadd.f32 %v3088, %v3344
        %v3346 = vpop.f32.mrb[0].mxu0
        %v3347 = vadd.f32 %v3090, %v3346
        %3348 = vmatprep.mubr.f32.mxu0 %v2702
        %3349 = vmatmul.mubr.f32.gmra.mrb[0].mxu0 %v2701
        %v3350 = vpop.f32.mrb[0].mxu0
        %v3351 = vadd.f32 %v3094, %v3350
        %v3352 = vpop.f32.mrb[0].mxu0
        %v3353 = vadd.f32 %v3096, %v3352
        %3354 = vmatprep.mubr.f32.mxu0 %v2706
        %3355 = vmatmul.mubr.f32.gmra.mrb[0].mxu0 %v2705
        %v3356 = vpop.f32.mrb[0].mxu0
        %v3357 = vadd.f32 %v3100, %v3356
        %v3358 = vpop.f32.mrb[0].mxu0
        %v3359 = vadd.f32 %v3102, %v3358
        %3360 = vdwg.mxu0
        %v3361 = vmax.f32 %v3171, %v3177
        %v3362 = vmax.f32 %v3361, %v3183
        %v3363 = vmax.f32 %v3362, %v3189
        %v3364 = vrot.slane %v3363, 4
        %v3365 = vmax.f32 %v3363, %v3364
        %v3366 = vrot.slane %v3365, 2
        %v3367 = vmax.f32 %v3365, %v3366
        %v3368 = vrot.slane %v3367, 1
        %v3369 = vmax.f32 %v3367, %v3368
        %v3370 = vmax.f32 %v3173, %v3179
        %v3371 = vmax.f32 %v3370, %v3185
        %v3372 = vmax.f32 %v3371, %v3191
        %v3373 = vrot.slane %v3372, 4
        %v3374 = vmax.f32 %v3372, %v3373
        %v3375 = vrot.slane %v3374, 2
        %v3376 = vmax.f32 %v3374, %v3375
        %v3377 = vrot.slane %v3376, 1
        %v3378 = vmax.f32 %v3376, %v3377
        %v3379 = vmax.f32 %v3195, %v3201
        %v3380 = vmax.f32 %v3379, %v3207
        %v3381 = vmax.f32 %v3380, %v3213
        %v3382 = vrot.slane %v3381, 4
        %v3383 = vmax.f32 %v3381, %v3382
        %v3384 = vrot.slane %v3383, 2
        %v3385 = vmax.f32 %v3383, %v3384
        %v3386 = vrot.slane %v3385, 1
        %v3387 = vmax.f32 %v3385, %v3386
        %v3388 = vmax.f32 %v3197, %v3203
        %v3389 = vmax.f32 %v3388, %v3209
        %v3390 = vmax.f32 %v3389, %v3215
        %v3391 = vrot.slane %v3390, 4
        %v3392 = vmax.f32 %v3390, %v3391
        %v3393 = vrot.slane %v3392, 2
        %v3394 = vmax.f32 %v3392, %v3393
        %v3395 = vrot.slane %v3394, 1
        %v3396 = vmax.f32 %v3394, %v3395
        %v3397 = vmax.f32 %v3219, %v3225
        %v3398 = vmax.f32 %v3397, %v3231
        %v3399 = vmax.f32 %v3398, %v3237
        %v3400 = vrot.slane %v3399, 4
        %v3401 = vmax.f32 %v3399, %v3400
        %v3402 = vrot.slane %v3401, 2
        %v3403 = vmax.f32 %v3401, %v3402
        %v3404 = vrot.slane %v3403, 1
        %v3405 = vmax.f32 %v3403, %v3404
        %v3406 = vmax.f32 %v3221, %v3227
        %v3407 = vmax.f32 %v3406, %v3233
        %v3408 = vmax.f32 %v3407, %v3239
        %v3409 = vrot.slane %v3408, 4
        %v3410 = vmax.f32 %v3408, %v3409
        %v3411 = vrot.slane %v3410, 2
        %v3412 = vmax.f32 %v3410, %v3411
        %v3413 = vrot.slane %v3412, 1
        %v3414 = vmax.f32 %v3412, %v3413
        %v3415 = vmax.f32 %v3243, %v3249
        %v3416 = vmax.f32 %v3415, %v3255
        %v3417 = vmax.f32 %v3416, %v3261
        %v3418 = vrot.slane %v3417, 4
        %v3419 = vmax.f32 %v3417, %v3418
        %v3420 = vrot.slane %v3419, 2
        %v3421 = vmax.f32 %v3419, %v3420
        %v3422 = vrot.slane %v3421, 1
        %v3423 = vmax.f32 %v3421, %v3422
        %v3424 = vmax.f32 %v3245, %v3251
        %v3425 = vmax.f32 %v3424, %v3257
        %v3426 = vmax.f32 %v3425, %v3263
        %v3427 = vrot.slane %v3426, 4
        %v3428 = vmax.f32 %v3426, %v3427
        %v3429 = vrot.slane %v3428, 2
        %v3430 = vmax.f32 %v3428, %v3429
        %v3431 = vrot.slane %v3430, 1
        %v3432 = vmax.f32 %v3430, %v3431
        %v3433 = vmax.f32 %v3267, %v3273
        %v3434 = vmax.f32 %v3433, %v3279
        %v3435 = vmax.f32 %v3434, %v3285
        %v3436 = vrot.slane %v3435, 4
        %v3437 = vmax.f32 %v3435, %v3436
        %v3438 = vrot.slane %v3437, 2
        %v3439 = vmax.f32 %v3437, %v3438
        %v3440 = vrot.slane %v3439, 1
        %v3441 = vmax.f32 %v3439, %v3440
        %v3442 = vmax.f32 %v3269, %v3275
        %v3443 = vmax.f32 %v3442, %v3281
        %v3444 = vmax.f32 %v3443, %v3287
        %v3445 = vrot.slane %v3444, 4
        %v3446 = vmax.f32 %v3444, %v3445
        %v3447 = vrot.slane %v3446, 2
        %v3448 = vmax.f32 %v3446, %v3447
        %v3449 = vrot.slane %v3448, 1
        %v3450 = vmax.f32 %v3448, %v3449
        %v3451 = vmax.f32 %v3291, %v3297
        %v3452 = vmax.f32 %v3451, %v3303
        %v3453 = vmax.f32 %v3452, %v3309
        %v3454 = vrot.slane %v3453, 4
        %v3455 = vmax.f32 %v3453, %v3454
        %v3456 = vrot.slane %v3455, 2
        %v3457 = vmax.f32 %v3455, %v3456
        %v3458 = vrot.slane %v3457, 1
        %v3459 = vmax.f32 %v3457, %v3458
        %v3460 = vmax.f32 %v3293, %v3299
        %v3461 = vmax.f32 %v3460, %v3305
        %v3462 = vmax.f32 %v3461, %v3311
        %v3463 = vrot.slane %v3462, 4
        %v3464 = vmax.f32 %v3462, %v3463
        %v3465 = vrot.slane %v3464, 2
        %v3466 = vmax.f32 %v3464, %v3465
        %v3467 = vrot.slane %v3466, 1
        %v3468 = vmax.f32 %v3466, %v3467
        %v3469 = vmax.f32 %v3315, %v3321
        %v3470 = vmax.f32 %v3469, %v3327
        %v3471 = vmax.f32 %v3470, %v3333
        %v3472 = vrot.slane %v3471, 4
        %v3473 = vmax.f32 %v3471, %v3472
        %v3474 = vrot.slane %v3473, 2
        %v3475 = vmax.f32 %v3473, %v3474
        %v3476 = vrot.slane %v3475, 1
        %v3477 = vmax.f32 %v3475, %v3476
        %v3478 = vmax.f32 %v3317, %v3323
        %v3479 = vmax.f32 %v3478, %v3329
        %v3480 = vmax.f32 %v3479, %v3335
        %v3481 = vrot.slane %v3480, 4
        %v3482 = vmax.f32 %v3480, %v3481
        %v3483 = vrot.slane %v3482, 2
        %v3484 = vmax.f32 %v3482, %v3483
        %v3485 = vrot.slane %v3484, 1
        %v3486 = vmax.f32 %v3484, %v3485
        %v3487 = vmax.f32 %v3339, %v3345
        %v3488 = vmax.f32 %v3487, %v3351
        %v3489 = vmax.f32 %v3488, %v3357
        %v3490 = vrot.slane %v3489, 4
        %v3491 = vmax.f32 %v3489, %v3490
        %v3492 = vrot.slane %v3491, 2
        %v3493 = vmax.f32 %v3491, %v3492
        %v3494 = vrot.slane %v3493, 1
        %v3495 = vmax.f32 %v3493, %v3494
        %v3496 = vmax.f32 %v3341, %v3347
        %v3497 = vmax.f32 %v3496, %v3353
        %v3498 = vmax.f32 %v3497, %v3359
        %v3499 = vrot.slane %v3498, 4
        %v3500 = vmax.f32 %v3498, %v3499
        %v3501 = vrot.slane %v3500, 2
        %v3502 = vmax.f32 %v3500, %v3501
        %v3503 = vrot.slane %v3502, 1
        %v3504 = vmax.f32 %v3502, %v3503
        %v3521 = vsel %vm1412, %v3387, %v3369
        %v3522 = vsel %vm1414, %v3405, %v3521
        %v3523 = vsel %vm1416, %v3423, %v3522
        %v3524 = vsel %vm1418, %v3441, %v3523
        %v3525 = vsel %vm1420, %v3459, %v3524
        %v3526 = vsel %vm1422, %v3477, %v3525
        %v3527 = vsel %vm1424, %v3495, %v3526
        %v3528 = vsel %vm1412, %v3396, %v3378
        %v3529 = vsel %vm1414, %v3414, %v3528
        %v3530 = vsel %vm1416, %v3432, %v3529
        %v3531 = vsel %vm1418, %v3450, %v3530
        %v3532 = vsel %vm1420, %v3468, %v3531
        %v3533 = vsel %vm1422, %v3486, %v3532
        %v3534 = vsel %vm1424, %v3504, %v3533
        %3537 = vst [vmem:[%s399] sm:$0xff] %v3527
        %3538 = vst [vmem:[%s399 + $0x8] sm:$0xff] %v3534
        %s3539 = sand.u32 %s249, 1
        %s3540 = scalar_lea.sflag [#allocation4], %s3539
        %s3541 = sand.u32 %s249, 1
        %s3542 = smul.addr %s3541, 16
        %s3543 = scalar_lea.vmem [#allocation8], %s3542
        // Predicated region
        $region73: #{tpu_custom_call.1} parent=59 // pred_check
          %p3544 = pneg %p259
        $region74: #{tpu_custom_call.1} parent=59 // pred_check_branch
          %3546 = sbr.rel (%p3544) target = $region76
        $region75: #{tpu_custom_call.1} parent=59 // pred_region
          %s3548 = ssub.s32 256, 256
          %3549 = vsyncadd %s3540, %s3548
          %s3550 = smul.addr %s26, 2
          %s3551 = smul.addr %s3550, 128
          %s3552 = scalar_lea.hbm %s10, %s3551
          %s3554 = sshll.u32 %s3543, 4
          %s3555 = int_to_ptr.vmem [resolvable:$true] %s3554
          %3557 = dma.vmem_to_hbm [thread:$0]  %s3555, 256, %s3552, %s3540
        $region76: #{tpu_custom_call.1} parent=59 // pred_fallthru
          _
      $region60: #{tpu_custom_call.1} parent=5 // pred_fallthru
        _
      %p3558 = scmp.le.s32.totalorder 2, %s21
      // Predicated region
      $region77: #{tpu_custom_call.1} parent=5 // pred_check
        %p3559 = pneg %p3558
      $region78: #{tpu_custom_call.1} parent=5 // pred_check_branch
        %3561 = sbr.rel (%p3559) target = $region80
      $region79: #{tpu_custom_call.1} parent=5 // pred_region
        %s3562 = ssub.s32 %s21, 2
        // Predicated region
        $region81: #{tpu_custom_call.1} parent=79 // pred_check
          %p3563 = pneg %p265
        $region82: #{tpu_custom_call.1} parent=79 // pred_check_branch
          %3565 = sbr.rel (%p3563) target = $region84
        $region83: #{tpu_custom_call.1} parent=79 // pred_region
          %s3566 = sand.u32 %s250, 1
          %s3567 = scalar_lea.sflag [#allocation4], %s3566
          %s3568 = sand.u32 %s250, 1
          %s3569 = smul.addr %s3568, 16
          %s3570 = scalar_lea.vmem [#allocation8], %s3569
          %3571 = dma.done %s3567, 256
        $region84: #{tpu_custom_call.1} parent=79 // pred_fallthru
          _
      $region80: #{tpu_custom_call.1} parent=5 // pred_fallthru
        _
    $region6: #{tpu_custom_call.1} parent=1 // loop_footer
      %s25 = sadd.s32 1, %s21
    $region7: #{tpu_custom_call.1} parent=1 // loop_footer_branch
      %20 = sbr.rel target = $region3
    $region8: #{tpu_custom_call.1} parent=1 // loop_exit
      _
    %3572 = vsyncpa [#allocation3], 1
    %s3573 = scalar_lea.sflag [#allocation3], 1
    %3574 = vsyncpa %s3573, 1
    %3575 = vsyncpa [#allocation6], 1
    %3576 = vsyncpa [#allocation4], 1
    %s3577 = scalar_lea.sflag [#allocation4], 1
    %3578 = vsyncpa %s3577, 1

</llo_original>
